<compile_context>
chip_gen: v7x
topology: tpu7x:2x2x1
jax: 0.10.0
libtpu: 0.0.40
codegen_flags: <defaults>
</compile_context>

<pallas_src>
import functools

import jax
import jax.numpy as jnp
from jax.experimental import pallas as pl
from jax.experimental.pallas import tpu as pltpu


def _resblock_kernel(x_ref, mask_ref, w1_ref, b1_ref, w2_ref, b2_ref, o_ref,
                     *, W, lanes):
    """x_ref: (C, lanes) f32, lanes = imgs_per_block * H * W (images contiguous
    along the lane axis).  mask_ref: (9, 1, lanes) f32 per-image boundary masks.
    w*_ref: (9, C_out, C_in) f32, tap index t = u*3 + v (3x3 kernel row/col).
    b*_ref: (C, 1) f32.  o_ref: (C, lanes)."""
    x = x_ref[...]                                            # (C, lanes) f32

    # Static roll amounts for the 9 taps: rolled[p] = x[p + du*W + dv].
    # Tap order t = (du+1)*3 + (dv+1) matches the packed weights / masks.
    shifts = [(-(du * W + dv)) % lanes
              for du in (-1, 0, 1) for dv in (-1, 0, 1)]

    def conv3x3(inp, w_ref_, b_ref_):
        # 9 accumulate matmuls (C_out, C_in) @ (C_in, lanes), all f32.
        # Only one rolled/masked tap is live at a time (no sublane concat).
        acc = None
        for t, s in enumerate(shifts):
            shifted = inp if s == 0 else pltpu.roll(inp, shift=s, axis=1)
            tap = shifted * mask_ref[t]                       # (C, lanes) f32
            part = jnp.dot(w_ref_[t], tap,
                           preferred_element_type=jnp.float32)
            acc = part if acc is None else acc + part
        return acc + b_ref_[...]                              # (C, lanes) f32

    h1 = jnp.maximum(conv3x3(x, w1_ref, b1_ref), 0.0)         # conv1 + ReLU
    h2 = conv3x3(h1, w2_ref, b2_ref)                          # conv2
    o_ref[...] = (x + h2).astype(o_ref.dtype)                 # residual add


def resblock_forward(x_nchw, w1, b1, w2, b2, *, num_lane_blocks=1):
    """x_nchw: (N, C, H, W).  w*: (3, 3, C_in, C_out) (HWIO).  b*: (C,).

    Equivalent PyTorch weights: torch_w[co, ci, u, v] == w[u, v, ci, co].
    num_lane_blocks: number of grid steps the batch is split into along the
    lane axis (1 for v5e/v6e single TensorCore; 2 on v7x to use both TCs).
    """
    N, C, H, W = x_nchw.shape
    HW = H * W
    if N % num_lane_blocks != 0:
        num_lane_blocks = 1
    imgs_per_block = N // num_lane_blocks
    lanes = imgs_per_block * HW

    # Fold batch into the lane axis: (C, N*HW), images contiguous.  Tiny
    # wrapper-side layout plumbing; the kernel sees a lane-dense slab.
    x_folded = x_nchw.reshape(N, C, HW).transpose(1, 0, 2).reshape(C, N * HW)

    def pack_w(w):
        # (3,3,Cin,Cout) -> (9, Cout, Cin), tap index t = u*3 + v.  Stays f32.
        return w.reshape(9, C, C).transpose(0, 2, 1).astype(jnp.float32)

    w1p, w2p = pack_w(w1), pack_w(w2)
    b1r = b1.reshape(C, 1).astype(jnp.float32)
    b2r = b2.reshape(C, 1).astype(jnp.float32)

    # Precompute per-image boundary masks once (positions modulo HW so rolls
    # cannot leak across images), then repeat for every image in a block.
    pos = jnp.arange(HW)
    row, col = pos // W, pos % W
    mrows = []
    for du in (-1, 0, 1):
        for dv in (-1, 0, 1):
            mrows.append((row + du >= 0) & (row + du < H)
                         & (col + dv >= 0) & (col + dv < W))
    mask = jnp.stack(mrows).astype(jnp.float32)                # (9, HW)
    mask = jnp.tile(mask, (1, imgs_per_block)).reshape(9, 1, lanes)

    kern = functools.partial(_resblock_kernel, W=W, lanes=lanes)

    out_folded = pl.pallas_call(
        kern,
        out_shape=jax.ShapeDtypeStruct((C, N * HW), x_nchw.dtype),
        grid_spec=pltpu.PrefetchScalarGridSpec(
            num_scalar_prefetch=0,
            grid=(num_lane_blocks,),
            in_specs=[
                pl.BlockSpec((C, lanes), lambda i: (0, i)),        # x (lane-dense)
                pl.BlockSpec((9, 1, lanes), lambda i: (0, 0, 0)),  # masks (resident)
                pl.BlockSpec((9, C, C), lambda i: (0, 0, 0)),      # w1 (resident)
                pl.BlockSpec((C, 1), lambda i: (0, 0)),            # b1
                pl.BlockSpec((9, C, C), lambda i: (0, 0, 0)),      # w2 (resident)
                pl.BlockSpec((C, 1), lambda i: (0, 0)),            # b2
            ],
            out_specs=pl.BlockSpec((C, lanes), lambda i: (0, i)),
        ),
        compiler_params=pltpu.CompilerParams(
            dimension_semantics=("parallel",)),
    )(x_folded, mask, w1p, b1r, w2p, b2r)

    # Un-fold back to NCHW.
    return (out_folded.reshape(C, N, HW).transpose(1, 0, 2)
            .reshape(N, C, H, W))


def _resblock_ref(x_nchw, w1, b1, w2, b2):
    """Pure-JAX f32 reference (NCHW conv via lax.conv_general_dilated)."""
    dn = jax.lax.conv_dimension_numbers(x_nchw.shape, w1.shape,
                                        ("NCHW", "HWIO", "NCHW"))
    h = jax.lax.conv_general_dilated(x_nchw, w1, (1, 1), "SAME",
                                     dimension_numbers=dn)
    h = h + b1.reshape(1, -1, 1, 1)
    h = jnp.maximum(h, 0.0)
    h = jax.lax.conv_general_dilated(h, w2, (1, 1), "SAME",
                                     dimension_numbers=dn)
    h = h + b2.reshape(1, -1, 1, 1)
    return x_nchw + h


if __name__ == "__main__":
    N, C, H, W = 2, 4, 16, 16

    key = jax.random.PRNGKey(0)
    kx, kw1, kb1, kw2, kb2 = jax.random.split(key, 5)

    x = jax.random.normal(kx, (N, C, H, W), dtype=jnp.float32)
    # Deterministic synthetic parameters (shapes from nn.Conv2d(ch, ch, 3, 1, 1)).
    w1 = jax.random.normal(kw1, (3, 3, C, C), dtype=jnp.float32) * 0.1
    b1 = jax.random.normal(kb1, (C,), dtype=jnp.float32) * 0.1
    w2 = jax.random.normal(kw2, (3, 3, C, C), dtype=jnp.float32) * 0.1
    b2 = jax.random.normal(kb2, (C,), dtype=jnp.float32) * 0.1

    fwd = jax.jit(resblock_forward)
    out = jax.block_until_ready(fwd(x, w1, b1, w2, b2))
    ref = jax.block_until_ready(_resblock_ref(x, w1, b1, w2, b2))

    assert out.shape == (N, C, H, W)
    # All-f32 path now (no bf16 MXU operands), so the tolerance is tight.
    max_err = float(jnp.max(jnp.abs(out - ref)))
    assert jnp.allclose(out, ref, atol=1e-4, rtol=1e-4), max_err

    print("KERNEL_OK")
</pallas_src>

<mosaic_0001>
module attributes {stable_mosaic.version = 11 : i64} {
  func.func @_resblock_kernel(%arg0: i32, %arg1: memref<4x512xf32, #tpu.memory_space<vmem>>, %arg2: memref<9x1x512xf32, #tpu.memory_space<vmem>>, %arg3: memref<9x4x4xf32, #tpu.memory_space<vmem>>, %arg4: memref<4x1xf32, #tpu.memory_space<vmem>>, %arg5: memref<9x4x4xf32, #tpu.memory_space<vmem>>, %arg6: memref<4x1xf32, #tpu.memory_space<vmem>>, %arg7: memref<4x512xf32, #tpu.memory_space<vmem>>) attributes {dimension_semantics = [#tpu.dimension_semantics<parallel>], iteration_bounds = array<i64: 1>, scalar_prefetch = 0 : i64, scratch_operands = 0 : i64, tpu.core_type = #tpu.core_type<tc>, window_params = [{transform_indices = @transform_0, window_bounds = array<i64: 4, 512>}, {pipeline_mode = #tpu.pipeline_mode<synchronous>, transform_indices = @transform_1, window_bounds = array<i64: 9, 1, 512>}, {pipeline_mode = #tpu.pipeline_mode<synchronous>, transform_indices = @transform_2, window_bounds = array<i64: 9, 4, 4>}, {pipeline_mode = #tpu.pipeline_mode<synchronous>, transform_indices = @transform_3, window_bounds = array<i64: 4, 1>}, {pipeline_mode = #tpu.pipeline_mode<synchronous>, transform_indices = @transform_4, window_bounds = array<i64: 9, 4, 4>}, {pipeline_mode = #tpu.pipeline_mode<synchronous>, transform_indices = @transform_5, window_bounds = array<i64: 4, 1>}, {transform_indices = @transform_6, window_bounds = array<i64: 4, 512>}]} {
    %c0 = arith.constant 0 : index
    %c0_0 = arith.constant 0 : index
    %0 = vector.load %arg1[%c0, %c0_0] : memref<4x512xf32, #tpu.memory_space<vmem>>, vector<4x512xf32>
    %c17_i32 = arith.constant 17 : i32
    %1 = tpu.dynamic_rotate %0 by %c17_i32 dim 1 : vector<4x512xf32>, i32 -> vector<4x512xf32>
    %c0_1 = arith.constant 0 : index
    %c0_2 = arith.constant 0 : index
    %c0_3 = arith.constant 0 : index
    %2 = vector.load %arg2[%c0_1, %c0_2, %c0_3] : memref<9x1x512xf32, #tpu.memory_space<vmem>>, vector<1x1x512xf32>
    %3 = vector.shape_cast %2 : vector<1x1x512xf32> to vector<1x512xf32>
    %4 = vector.broadcast %3 : vector<1x512xf32> to vector<4x512xf32>
    %5 = arith.mulf %1, %4 : vector<4x512xf32>
    %c0_4 = arith.constant 0 : index
    %c0_5 = arith.constant 0 : index
    %c0_6 = arith.constant 0 : index
    %6 = vector.load %arg3[%c0_4, %c0_5, %c0_6] : memref<9x4x4xf32, #tpu.memory_space<vmem>>, vector<1x4x4xf32>
    %7 = vector.shape_cast %6 : vector<1x4x4xf32> to vector<4x4xf32>
    %cst = arith.constant dense<0.000000e+00> : vector<4x512xf32>
    %8 = tpu.matmul %7, %5, %cst {dimension_numbers = #tpu.dot_dimension_numbers<[1], [0], [0], [1], [0, 0, 1, 1], [], []>} : vector<4x4xf32>, vector<4x512xf32>, vector<4x512xf32> -> vector<4x512xf32>
    %c16_i32 = arith.constant 16 : i32
    %9 = tpu.dynamic_rotate %0 by %c16_i32 dim 1 : vector<4x512xf32>, i32 -> vector<4x512xf32>
    %c1 = arith.constant 1 : index
    %c0_7 = arith.constant 0 : index
    %c0_8 = arith.constant 0 : index
    %10 = vector.load %arg2[%c1, %c0_7, %c0_8] : memref<9x1x512xf32, #tpu.memory_space<vmem>>, vector<1x1x512xf32>
    %11 = vector.shape_cast %10 : vector<1x1x512xf32> to vector<1x512xf32>
    %12 = vector.broadcast %11 : vector<1x512xf32> to vector<4x512xf32>
    %13 = arith.mulf %9, %12 : vector<4x512xf32>
    %c1_9 = arith.constant 1 : index
    %c0_10 = arith.constant 0 : index
    %c0_11 = arith.constant 0 : index
    %14 = vector.load %arg3[%c1_9, %c0_10, %c0_11] : memref<9x4x4xf32, #tpu.memory_space<vmem>>, vector<1x4x4xf32>
    %15 = vector.shape_cast %14 : vector<1x4x4xf32> to vector<4x4xf32>
    %cst_12 = arith.constant dense<0.000000e+00> : vector<4x512xf32>
    %16 = tpu.matmul %15, %13, %cst_12 {dimension_numbers = #tpu.dot_dimension_numbers<[1], [0], [0], [1], [0, 0, 1, 1], [], []>} : vector<4x4xf32>, vector<4x512xf32>, vector<4x512xf32> -> vector<4x512xf32>
    %17 = arith.addf %8, %16 : vector<4x512xf32>
    %c15_i32 = arith.constant 15 : i32
    %18 = tpu.dynamic_rotate %0 by %c15_i32 dim 1 : vector<4x512xf32>, i32 -> vector<4x512xf32>
    %c2 = arith.constant 2 : index
    %c0_13 = arith.constant 0 : index
    %c0_14 = arith.constant 0 : index
    %19 = vector.load %arg2[%c2, %c0_13, %c0_14] : memref<9x1x512xf32, #tpu.memory_space<vmem>>, vector<1x1x512xf32>
    %20 = vector.shape_cast %19 : vector<1x1x512xf32> to vector<1x512xf32>
    %21 = vector.broadcast %20 : vector<1x512xf32> to vector<4x512xf32>
    %22 = arith.mulf %18, %21 : vector<4x512xf32>
    %c2_15 = arith.constant 2 : index
    %c0_16 = arith.constant 0 : index
    %c0_17 = arith.constant 0 : index
    %23 = vector.load %arg3[%c2_15, %c0_16, %c0_17] : memref<9x4x4xf32, #tpu.memory_space<vmem>>, vector<1x4x4xf32>
    %24 = vector.shape_cast %23 : vector<1x4x4xf32> to vector<4x4xf32>
    %cst_18 = arith.constant dense<0.000000e+00> : vector<4x512xf32>
    %25 = tpu.matmul %24, %22, %cst_18 {dimension_numbers = #tpu.dot_dimension_numbers<[1], [0], [0], [1], [0, 0, 1, 1], [], []>} : vector<4x4xf32>, vector<4x512xf32>, vector<4x512xf32> -> vector<4x512xf32>
    %26 = arith.addf %17, %25 : vector<4x512xf32>
    %c1_i32 = arith.constant 1 : i32
    %27 = tpu.dynamic_rotate %0 by %c1_i32 dim 1 : vector<4x512xf32>, i32 -> vector<4x512xf32>
    %c3 = arith.constant 3 : index
    %c0_19 = arith.constant 0 : index
    %c0_20 = arith.constant 0 : index
    %28 = vector.load %arg2[%c3, %c0_19, %c0_20] : memref<9x1x512xf32, #tpu.memory_space<vmem>>, vector<1x1x512xf32>
    %29 = vector.shape_cast %28 : vector<1x1x512xf32> to vector<1x512xf32>
    %30 = vector.broadcast %29 : vector<1x512xf32> to vector<4x512xf32>
    %31 = arith.mulf %27, %30 : vector<4x512xf32>
    %c3_21 = arith.constant 3 : index
    %c0_22 = arith.constant 0 : index
    %c0_23 = arith.constant 0 : index
    %32 = vector.load %arg3[%c3_21, %c0_22, %c0_23] : memref<9x4x4xf32, #tpu.memory_space<vmem>>, vector<1x4x4xf32>
    %33 = vector.shape_cast %32 : vector<1x4x4xf32> to vector<4x4xf32>
    %cst_24 = arith.constant dense<0.000000e+00> : vector<4x512xf32>
    %34 = tpu.matmul %33, %31, %cst_24 {dimension_numbers = #tpu.dot_dimension_numbers<[1], [0], [0], [1], [0, 0, 1, 1], [], []>} : vector<4x4xf32>, vector<4x512xf32>, vector<4x512xf32> -> vector<4x512xf32>
    %35 = arith.addf %26, %34 : vector<4x512xf32>
    %c4 = arith.constant 4 : index
    %c0_25 = arith.constant 0 : index
    %c0_26 = arith.constant 0 : index
    %36 = vector.load %arg2[%c4, %c0_25, %c0_26] : memref<9x1x512xf32, #tpu.memory_space<vmem>>, vector<1x1x512xf32>
    %37 = vector.shape_cast %36 : vector<1x1x512xf32> to vector<1x512xf32>
    %38 = vector.broadcast %37 : vector<1x512xf32> to vector<4x512xf32>
    %39 = arith.mulf %0, %38 : vector<4x512xf32>
    %c4_27 = arith.constant 4 : index
    %c0_28 = arith.constant 0 : index
    %c0_29 = arith.constant 0 : index
    %40 = vector.load %arg3[%c4_27, %c0_28, %c0_29] : memref<9x4x4xf32, #tpu.memory_space<vmem>>, vector<1x4x4xf32>
    %41 = vector.shape_cast %40 : vector<1x4x4xf32> to vector<4x4xf32>
    %cst_30 = arith.constant dense<0.000000e+00> : vector<4x512xf32>
    %42 = tpu.matmul %41, %39, %cst_30 {dimension_numbers = #tpu.dot_dimension_numbers<[1], [0], [0], [1], [0, 0, 1, 1], [], []>} : vector<4x4xf32>, vector<4x512xf32>, vector<4x512xf32> -> vector<4x512xf32>
    %43 = arith.addf %35, %42 : vector<4x512xf32>
    %c511_i32 = arith.constant 511 : i32
    %44 = tpu.dynamic_rotate %0 by %c511_i32 dim 1 : vector<4x512xf32>, i32 -> vector<4x512xf32>
    %c5 = arith.constant 5 : index
    %c0_31 = arith.constant 0 : index
    %c0_32 = arith.constant 0 : index
    %45 = vector.load %arg2[%c5, %c0_31, %c0_32] : memref<9x1x512xf32, #tpu.memory_space<vmem>>, vector<1x1x512xf32>
    %46 = vector.shape_cast %45 : vector<1x1x512xf32> to vector<1x512xf32>
    %47 = vector.broadcast %46 : vector<1x512xf32> to vector<4x512xf32>
    %48 = arith.mulf %44, %47 : vector<4x512xf32>
    %c5_33 = arith.constant 5 : index
    %c0_34 = arith.constant 0 : index
    %c0_35 = arith.constant 0 : index
    %49 = vector.load %arg3[%c5_33, %c0_34, %c0_35] : memref<9x4x4xf32, #tpu.memory_space<vmem>>, vector<1x4x4xf32>
    %50 = vector.shape_cast %49 : vector<1x4x4xf32> to vector<4x4xf32>
    %cst_36 = arith.constant dense<0.000000e+00> : vector<4x512xf32>
    %51 = tpu.matmul %50, %48, %cst_36 {dimension_numbers = #tpu.dot_dimension_numbers<[1], [0], [0], [1], [0, 0, 1, 1], [], []>} : vector<4x4xf32>, vector<4x512xf32>, vector<4x512xf32> -> vector<4x512xf32>
    %52 = arith.addf %43, %51 : vector<4x512xf32>
    %c497_i32 = arith.constant 497 : i32
    %53 = tpu.dynamic_rotate %0 by %c497_i32 dim 1 : vector<4x512xf32>, i32 -> vector<4x512xf32>
    %c6 = arith.constant 6 : index
    %c0_37 = arith.constant 0 : index
    %c0_38 = arith.constant 0 : index
    %54 = vector.load %arg2[%c6, %c0_37, %c0_38] : memref<9x1x512xf32, #tpu.memory_space<vmem>>, vector<1x1x512xf32>
    %55 = vector.shape_cast %54 : vector<1x1x512xf32> to vector<1x512xf32>
    %56 = vector.broadcast %55 : vector<1x512xf32> to vector<4x512xf32>
    %57 = arith.mulf %53, %56 : vector<4x512xf32>
    %c6_39 = arith.constant 6 : index
    %c0_40 = arith.constant 0 : index
    %c0_41 = arith.constant 0 : index
    %58 = vector.load %arg3[%c6_39, %c0_40, %c0_41] : memref<9x4x4xf32, #tpu.memory_space<vmem>>, vector<1x4x4xf32>
    %59 = vector.shape_cast %58 : vector<1x4x4xf32> to vector<4x4xf32>
    %cst_42 = arith.constant dense<0.000000e+00> : vector<4x512xf32>
    %60 = tpu.matmul %59, %57, %cst_42 {dimension_numbers = #tpu.dot_dimension_numbers<[1], [0], [0], [1], [0, 0, 1, 1], [], []>} : vector<4x4xf32>, vector<4x512xf32>, vector<4x512xf32> -> vector<4x512xf32>
    %61 = arith.addf %52, %60 : vector<4x512xf32>
    %c496_i32 = arith.constant 496 : i32
    %62 = tpu.dynamic_rotate %0 by %c496_i32 dim 1 : vector<4x512xf32>, i32 -> vector<4x512xf32>
    %c7 = arith.constant 7 : index
    %c0_43 = arith.constant 0 : index
    %c0_44 = arith.constant 0 : index
    %63 = vector.load %arg2[%c7, %c0_43, %c0_44] : memref<9x1x512xf32, #tpu.memory_space<vmem>>, vector<1x1x512xf32>
    %64 = vector.shape_cast %63 : vector<1x1x512xf32> to vector<1x512xf32>
    %65 = vector.broadcast %64 : vector<1x512xf32> to vector<4x512xf32>
    %66 = arith.mulf %62, %65 : vector<4x512xf32>
    %c7_45 = arith.constant 7 : index
    %c0_46 = arith.constant 0 : index
    %c0_47 = arith.constant 0 : index
    %67 = vector.load %arg3[%c7_45, %c0_46, %c0_47] : memref<9x4x4xf32, #tpu.memory_space<vmem>>, vector<1x4x4xf32>
    %68 = vector.shape_cast %67 : vector<1x4x4xf32> to vector<4x4xf32>
    %cst_48 = arith.constant dense<0.000000e+00> : vector<4x512xf32>
    %69 = tpu.matmul %68, %66, %cst_48 {dimension_numbers = #tpu.dot_dimension_numbers<[1], [0], [0], [1], [0, 0, 1, 1], [], []>} : vector<4x4xf32>, vector<4x512xf32>, vector<4x512xf32> -> vector<4x512xf32>
    %70 = arith.addf %61, %69 : vector<4x512xf32>
    %c495_i32 = arith.constant 495 : i32
    %71 = tpu.dynamic_rotate %0 by %c495_i32 dim 1 : vector<4x512xf32>, i32 -> vector<4x512xf32>
    %c8 = arith.constant 8 : index
    %c0_49 = arith.constant 0 : index
    %c0_50 = arith.constant 0 : index
    %72 = vector.load %arg2[%c8, %c0_49, %c0_50] : memref<9x1x512xf32, #tpu.memory_space<vmem>>, vector<1x1x512xf32>
    %73 = vector.shape_cast %72 : vector<1x1x512xf32> to vector<1x512xf32>
    %74 = vector.broadcast %73 : vector<1x512xf32> to vector<4x512xf32>
    %75 = arith.mulf %71, %74 : vector<4x512xf32>
    %c8_51 = arith.constant 8 : index
    %c0_52 = arith.constant 0 : index
    %c0_53 = arith.constant 0 : index
    %76 = vector.load %arg3[%c8_51, %c0_52, %c0_53] : memref<9x4x4xf32, #tpu.memory_space<vmem>>, vector<1x4x4xf32>
    %77 = vector.shape_cast %76 : vector<1x4x4xf32> to vector<4x4xf32>
    %cst_54 = arith.constant dense<0.000000e+00> : vector<4x512xf32>
    %78 = tpu.matmul %77, %75, %cst_54 {dimension_numbers = #tpu.dot_dimension_numbers<[1], [0], [0], [1], [0, 0, 1, 1], [], []>} : vector<4x4xf32>, vector<4x512xf32>, vector<4x512xf32> -> vector<4x512xf32>
    %79 = arith.addf %70, %78 : vector<4x512xf32>
    %c0_55 = arith.constant 0 : index
    %c0_56 = arith.constant 0 : index
    %80 = vector.load %arg4[%c0_55, %c0_56] : memref<4x1xf32, #tpu.memory_space<vmem>>, vector<4x1xf32>
    %81 = vector.broadcast %80 : vector<4x1xf32> to vector<4x512xf32>
    %82 = arith.addf %79, %81 : vector<4x512xf32>
    %cst_57 = arith.constant 0.000000e+00 : f32
    %83 = vector.broadcast %cst_57 : f32 to vector<4x512xf32>
    %84 = arith.maximumf %82, %83 : vector<4x512xf32>
    %c17_i32_58 = arith.constant 17 : i32
    %85 = tpu.dynamic_rotate %84 by %c17_i32_58 dim 1 : vector<4x512xf32>, i32 -> vector<4x512xf32>
    %c0_59 = arith.constant 0 : index
    %c0_60 = arith.constant 0 : index
    %c0_61 = arith.constant 0 : index
    %86 = vector.load %arg2[%c0_59, %c0_60, %c0_61] : memref<9x1x512xf32, #tpu.memory_space<vmem>>, vector<1x1x512xf32>
    %87 = vector.shape_cast %86 : vector<1x1x512xf32> to vector<1x512xf32>
    %88 = vector.broadcast %87 : vector<1x512xf32> to vector<4x512xf32>
    %89 = arith.mulf %85, %88 : vector<4x512xf32>
    %c0_62 = arith.constant 0 : index
    %c0_63 = arith.constant 0 : index
    %c0_64 = arith.constant 0 : index
    %90 = vector.load %arg5[%c0_62, %c0_63, %c0_64] : memref<9x4x4xf32, #tpu.memory_space<vmem>>, vector<1x4x4xf32>
    %91 = vector.shape_cast %90 : vector<1x4x4xf32> to vector<4x4xf32>
    %cst_65 = arith.constant dense<0.000000e+00> : vector<4x512xf32>
    %92 = tpu.matmul %91, %89, %cst_65 {dimension_numbers = #tpu.dot_dimension_numbers<[1], [0], [0], [1], [0, 0, 1, 1], [], []>} : vector<4x4xf32>, vector<4x512xf32>, vector<4x512xf32> -> vector<4x512xf32>
    %c16_i32_66 = arith.constant 16 : i32
    %93 = tpu.dynamic_rotate %84 by %c16_i32_66 dim 1 : vector<4x512xf32>, i32 -> vector<4x512xf32>
    %c1_67 = arith.constant 1 : index
    %c0_68 = arith.constant 0 : index
    %c0_69 = arith.constant 0 : index
    %94 = vector.load %arg2[%c1_67, %c0_68, %c0_69] : memref<9x1x512xf32, #tpu.memory_space<vmem>>, vector<1x1x512xf32>
    %95 = vector.shape_cast %94 : vector<1x1x512xf32> to vector<1x512xf32>
    %96 = vector.broadcast %95 : vector<1x512xf32> to vector<4x512xf32>
    %97 = arith.mulf %93, %96 : vector<4x512xf32>
    %c1_70 = arith.constant 1 : index
    %c0_71 = arith.constant 0 : index
    %c0_72 = arith.constant 0 : index
    %98 = vector.load %arg5[%c1_70, %c0_71, %c0_72] : memref<9x4x4xf32, #tpu.memory_space<vmem>>, vector<1x4x4xf32>
    %99 = vector.shape_cast %98 : vector<1x4x4xf32> to vector<4x4xf32>
    %cst_73 = arith.constant dense<0.000000e+00> : vector<4x512xf32>
    %100 = tpu.matmul %99, %97, %cst_73 {dimension_numbers = #tpu.dot_dimension_numbers<[1], [0], [0], [1], [0, 0, 1, 1], [], []>} : vector<4x4xf32>, vector<4x512xf32>, vector<4x512xf32> -> vector<4x512xf32>
    %101 = arith.addf %92, %100 : vector<4x512xf32>
    %c15_i32_74 = arith.constant 15 : i32
    %102 = tpu.dynamic_rotate %84 by %c15_i32_74 dim 1 : vector<4x512xf32>, i32 -> vector<4x512xf32>
    %c2_75 = arith.constant 2 : index
    %c0_76 = arith.constant 0 : index
    %c0_77 = arith.constant 0 : index
    %103 = vector.load %arg2[%c2_75, %c0_76, %c0_77] : memref<9x1x512xf32, #tpu.memory_space<vmem>>, vector<1x1x512xf32>
    %104 = vector.shape_cast %103 : vector<1x1x512xf32> to vector<1x512xf32>
    %105 = vector.broadcast %104 : vector<1x512xf32> to vector<4x512xf32>
    %106 = arith.mulf %102, %105 : vector<4x512xf32>
    %c2_78 = arith.constant 2 : index
    %c0_79 = arith.constant 0 : index
    %c0_80 = arith.constant 0 : index
    %107 = vector.load %arg5[%c2_78, %c0_79, %c0_80] : memref<9x4x4xf32, #tpu.memory_space<vmem>>, vector<1x4x4xf32>
    %108 = vector.shape_cast %107 : vector<1x4x4xf32> to vector<4x4xf32>
    %cst_81 = arith.constant dense<0.000000e+00> : vector<4x512xf32>
    %109 = tpu.matmul %108, %106, %cst_81 {dimension_numbers = #tpu.dot_dimension_numbers<[1], [0], [0], [1], [0, 0, 1, 1], [], []>} : vector<4x4xf32>, vector<4x512xf32>, vector<4x512xf32> -> vector<4x512xf32>
    %110 = arith.addf %101, %109 : vector<4x512xf32>
    %c1_i32_82 = arith.constant 1 : i32
    %111 = tpu.dynamic_rotate %84 by %c1_i32_82 dim 1 : vector<4x512xf32>, i32 -> vector<4x512xf32>
    %c3_83 = arith.constant 3 : index
    %c0_84 = arith.constant 0 : index
    %c0_85 = arith.constant 0 : index
    %112 = vector.load %arg2[%c3_83, %c0_84, %c0_85] : memref<9x1x512xf32, #tpu.memory_space<vmem>>, vector<1x1x512xf32>
    %113 = vector.shape_cast %112 : vector<1x1x512xf32> to vector<1x512xf32>
    %114 = vector.broadcast %113 : vector<1x512xf32> to vector<4x512xf32>
    %115 = arith.mulf %111, %114 : vector<4x512xf32>
    %c3_86 = arith.constant 3 : index
    %c0_87 = arith.constant 0 : index
    %c0_88 = arith.constant 0 : index
    %116 = vector.load %arg5[%c3_86, %c0_87, %c0_88] : memref<9x4x4xf32, #tpu.memory_space<vmem>>, vector<1x4x4xf32>
    %117 = vector.shape_cast %116 : vector<1x4x4xf32> to vector<4x4xf32>
    %cst_89 = arith.constant dense<0.000000e+00> : vector<4x512xf32>
    %118 = tpu.matmul %117, %115, %cst_89 {dimension_numbers = #tpu.dot_dimension_numbers<[1], [0], [0], [1], [0, 0, 1, 1], [], []>} : vector<4x4xf32>, vector<4x512xf32>, vector<4x512xf32> -> vector<4x512xf32>
    %119 = arith.addf %110, %118 : vector<4x512xf32>
    %c4_90 = arith.constant 4 : index
    %c0_91 = arith.constant 0 : index
    %c0_92 = arith.constant 0 : index
    %120 = vector.load %arg2[%c4_90, %c0_91, %c0_92] : memref<9x1x512xf32, #tpu.memory_space<vmem>>, vector<1x1x512xf32>
    %121 = vector.shape_cast %120 : vector<1x1x512xf32> to vector<1x512xf32>
    %122 = vector.broadcast %121 : vector<1x512xf32> to vector<4x512xf32>
    %123 = arith.mulf %84, %122 : vector<4x512xf32>
    %c4_93 = arith.constant 4 : index
    %c0_94 = arith.constant 0 : index
    %c0_95 = arith.constant 0 : index
    %124 = vector.load %arg5[%c4_93, %c0_94, %c0_95] : memref<9x4x4xf32, #tpu.memory_space<vmem>>, vector<1x4x4xf32>
    %125 = vector.shape_cast %124 : vector<1x4x4xf32> to vector<4x4xf32>
    %cst_96 = arith.constant dense<0.000000e+00> : vector<4x512xf32>
    %126 = tpu.matmul %125, %123, %cst_96 {dimension_numbers = #tpu.dot_dimension_numbers<[1], [0], [0], [1], [0, 0, 1, 1], [], []>} : vector<4x4xf32>, vector<4x512xf32>, vector<4x512xf32> -> vector<4x512xf32>
    %127 = arith.addf %119, %126 : vector<4x512xf32>
    %c511_i32_97 = arith.constant 511 : i32
    %128 = tpu.dynamic_rotate %84 by %c511_i32_97 dim 1 : vector<4x512xf32>, i32 -> vector<4x512xf32>
    %c5_98 = arith.constant 5 : index
    %c0_99 = arith.constant 0 : index
    %c0_100 = arith.constant 0 : index
    %129 = vector.load %arg2[%c5_98, %c0_99, %c0_100] : memref<9x1x512xf32, #tpu.memory_space<vmem>>, vector<1x1x512xf32>
    %130 = vector.shape_cast %129 : vector<1x1x512xf32> to vector<1x512xf32>
    %131 = vector.broadcast %130 : vector<1x512xf32> to vector<4x512xf32>
    %132 = arith.mulf %128, %131 : vector<4x512xf32>
    %c5_101 = arith.constant 5 : index
    %c0_102 = arith.constant 0 : index
    %c0_103 = arith.constant 0 : index
    %133 = vector.load %arg5[%c5_101, %c0_102, %c0_103] : memref<9x4x4xf32, #tpu.memory_space<vmem>>, vector<1x4x4xf32>
    %134 = vector.shape_cast %133 : vector<1x4x4xf32> to vector<4x4xf32>
    %cst_104 = arith.constant dense<0.000000e+00> : vector<4x512xf32>
    %135 = tpu.matmul %134, %132, %cst_104 {dimension_numbers = #tpu.dot_dimension_numbers<[1], [0], [0], [1], [0, 0, 1, 1], [], []>} : vector<4x4xf32>, vector<4x512xf32>, vector<4x512xf32> -> vector<4x512xf32>
    %136 = arith.addf %127, %135 : vector<4x512xf32>
    %c497_i32_105 = arith.constant 497 : i32
    %137 = tpu.dynamic_rotate %84 by %c497_i32_105 dim 1 : vector<4x512xf32>, i32 -> vector<4x512xf32>
    %c6_106 = arith.constant 6 : index
    %c0_107 = arith.constant 0 : index
    %c0_108 = arith.constant 0 : index
    %138 = vector.load %arg2[%c6_106, %c0_107, %c0_108] : memref<9x1x512xf32, #tpu.memory_space<vmem>>, vector<1x1x512xf32>
    %139 = vector.shape_cast %138 : vector<1x1x512xf32> to vector<1x512xf32>
    %140 = vector.broadcast %139 : vector<1x512xf32> to vector<4x512xf32>
    %141 = arith.mulf %137, %140 : vector<4x512xf32>
    %c6_109 = arith.constant 6 : index
    %c0_110 = arith.constant 0 : index
    %c0_111 = arith.constant 0 : index
    %142 = vector.load %arg5[%c6_109, %c0_110, %c0_111] : memref<9x4x4xf32, #tpu.memory_space<vmem>>, vector<1x4x4xf32>
    %143 = vector.shape_cast %142 : vector<1x4x4xf32> to vector<4x4xf32>
    %cst_112 = arith.constant dense<0.000000e+00> : vector<4x512xf32>
    %144 = tpu.matmul %143, %141, %cst_112 {dimension_numbers = #tpu.dot_dimension_numbers<[1], [0], [0], [1], [0, 0, 1, 1], [], []>} : vector<4x4xf32>, vector<4x512xf32>, vector<4x512xf32> -> vector<4x512xf32>
    %145 = arith.addf %136, %144 : vector<4x512xf32>
    %c496_i32_113 = arith.constant 496 : i32
    %146 = tpu.dynamic_rotate %84 by %c496_i32_113 dim 1 : vector<4x512xf32>, i32 -> vector<4x512xf32>
    %c7_114 = arith.constant 7 : index
    %c0_115 = arith.constant 0 : index
    %c0_116 = arith.constant 0 : index
    %147 = vector.load %arg2[%c7_114, %c0_115, %c0_116] : memref<9x1x512xf32, #tpu.memory_space<vmem>>, vector<1x1x512xf32>
    %148 = vector.shape_cast %147 : vector<1x1x512xf32> to vector<1x512xf32>
    %149 = vector.broadcast %148 : vector<1x512xf32> to vector<4x512xf32>
    %150 = arith.mulf %146, %149 : vector<4x512xf32>
    %c7_117 = arith.constant 7 : index
    %c0_118 = arith.constant 0 : index
    %c0_119 = arith.constant 0 : index
    %151 = vector.load %arg5[%c7_117, %c0_118, %c0_119] : memref<9x4x4xf32, #tpu.memory_space<vmem>>, vector<1x4x4xf32>
    %152 = vector.shape_cast %151 : vector<1x4x4xf32> to vector<4x4xf32>
    %cst_120 = arith.constant dense<0.000000e+00> : vector<4x512xf32>
    %153 = tpu.matmul %152, %150, %cst_120 {dimension_numbers = #tpu.dot_dimension_numbers<[1], [0], [0], [1], [0, 0, 1, 1], [], []>} : vector<4x4xf32>, vector<4x512xf32>, vector<4x512xf32> -> vector<4x512xf32>
    %154 = arith.addf %145, %153 : vector<4x512xf32>
    %c495_i32_121 = arith.constant 495 : i32
    %155 = tpu.dynamic_rotate %84 by %c495_i32_121 dim 1 : vector<4x512xf32>, i32 -> vector<4x512xf32>
    %c8_122 = arith.constant 8 : index
    %c0_123 = arith.constant 0 : index
    %c0_124 = arith.constant 0 : index
    %156 = vector.load %arg2[%c8_122, %c0_123, %c0_124] : memref<9x1x512xf32, #tpu.memory_space<vmem>>, vector<1x1x512xf32>
    %157 = vector.shape_cast %156 : vector<1x1x512xf32> to vector<1x512xf32>
    %158 = vector.broadcast %157 : vector<1x512xf32> to vector<4x512xf32>
    %159 = arith.mulf %155, %158 : vector<4x512xf32>
    %c8_125 = arith.constant 8 : index
    %c0_126 = arith.constant 0 : index
    %c0_127 = arith.constant 0 : index
    %160 = vector.load %arg5[%c8_125, %c0_126, %c0_127] : memref<9x4x4xf32, #tpu.memory_space<vmem>>, vector<1x4x4xf32>
    %161 = vector.shape_cast %160 : vector<1x4x4xf32> to vector<4x4xf32>
    %cst_128 = arith.constant dense<0.000000e+00> : vector<4x512xf32>
    %162 = tpu.matmul %161, %159, %cst_128 {dimension_numbers = #tpu.dot_dimension_numbers<[1], [0], [0], [1], [0, 0, 1, 1], [], []>} : vector<4x4xf32>, vector<4x512xf32>, vector<4x512xf32> -> vector<4x512xf32>
    %163 = arith.addf %154, %162 : vector<4x512xf32>
    %c0_129 = arith.constant 0 : index
    %c0_130 = arith.constant 0 : index
    %164 = vector.load %arg6[%c0_129, %c0_130] : memref<4x1xf32, #tpu.memory_space<vmem>>, vector<4x1xf32>
    %165 = vector.broadcast %164 : vector<4x1xf32> to vector<4x512xf32>
    %166 = arith.addf %163, %165 : vector<4x512xf32>
    %167 = arith.addf %0, %166 : vector<4x512xf32>
    %c0_131 = arith.constant 0 : index
    %c0_132 = arith.constant 0 : index
    %168 = vector.load %arg7[%c0_131, %c0_132] : memref<4x512xf32, #tpu.memory_space<vmem>>, vector<4x512xf32>
    tpu.vector_store %arg7[%c0_131, %c0_132], %167 {strides = array<i32>} : memref<4x512xf32, #tpu.memory_space<vmem>>, vector<4x512xf32>,
    return
  }
  func.func @transform_0(%arg0: i32) -> (i32, i32) {
    %c0_i32 = arith.constant 0 : i32
    %c0_i32_0 = arith.constant 0 : i32
    return %c0_i32, %arg0 : i32, i32
  }
  func.func @transform_1(%arg0: i32) -> (i32, i32, i32) {
    %c0_i32 = arith.constant 0 : i32
    %c0_i32_0 = arith.constant 0 : i32
    %c0_i32_1 = arith.constant 0 : i32
    %c0_i32_2 = arith.constant 0 : i32
    return %c0_i32, %c0_i32_0, %c0_i32_1 : i32, i32, i32
  }
  func.func @transform_2(%arg0: i32) -> (i32, i32, i32) {
    %c0_i32 = arith.constant 0 : i32
    %c0_i32_0 = arith.constant 0 : i32
    %c0_i32_1 = arith.constant 0 : i32
    %c0_i32_2 = arith.constant 0 : i32
    return %c0_i32, %c0_i32_0, %c0_i32_1 : i32, i32, i32
  }
  func.func @transform_3(%arg0: i32) -> (i32, i32) {
    %c0_i32 = arith.constant 0 : i32
    %c0_i32_0 = arith.constant 0 : i32
    %c0_i32_1 = arith.constant 0 : i32
    return %c0_i32, %c0_i32_0 : i32, i32
  }
  func.func @transform_4(%arg0: i32) -> (i32, i32, i32) {
    %c0_i32 = arith.constant 0 : i32
    %c0_i32_0 = arith.constant 0 : i32
    %c0_i32_1 = arith.constant 0 : i32
    %c0_i32_2 = arith.constant 0 : i32
    return %c0_i32, %c0_i32_0, %c0_i32_1 : i32, i32, i32
  }
  func.func @transform_5(%arg0: i32) -> (i32, i32) {
    %c0_i32 = arith.constant 0 : i32
    %c0_i32_0 = arith.constant 0 : i32
    %c0_i32_1 = arith.constant 0 : i32
    return %c0_i32, %c0_i32_0 : i32, i32
  }
  func.func @transform_6(%arg0: i32) -> (i32, i32) {
    %c0_i32 = arith.constant 0 : i32
    %c0_i32_0 = arith.constant 0 : i32
    return %c0_i32, %arg0 : i32, i32
  }
}

</mosaic_0001>

<llo_original>
// kernel: resblock_forward.1
$region0: #{resblock_forward.1}
  #allocation0 [shape = 'u32[]', space=smem, size = 0x4, offset = 0x4, fixed_abs, tag = 'smem constant byte address 0x4 - core index']
  #allocation1 [shape = 'u32[144,128]{1,0:T(1,128)}', space=vmem, size = 0x12000, scoped, tag = 'internal scratch']
  %s0 = inlined_call_operand.vmem [shape: f32[4,512], index: 0, kind: input, shape index: {}]
  %s1 = inlined_call_operand.vmem [shape: f32[9,1,512], index: 1, kind: input, shape index: {}]
  %s2 = inlined_call_operand.vmem [shape: f32[9,4,4], index: 2, kind: input, shape index: {}]
  %s3 = inlined_call_operand.vmem [shape: f32[4,1], index: 3, kind: input, shape index: {}]
  %s4 = inlined_call_operand.vmem [shape: f32[9,4,4], index: 4, kind: input, shape index: {}]
  %s5 = inlined_call_operand.vmem [shape: f32[4,1], index: 5, kind: input, shape index: {}]
  %s6 = inlined_call_operand.vmem [shape: f32[4,512], index: 6, kind: output, shape index: {}]
  %s7 = sld [smem:[#allocation0]]
  $region34: #{resblock_forward.1} parent=0
    _
  %s9 = ssub.s32 1, %s7
  %s10 = scalar_select 0, %s9, %s7
  // Predicated region
  $region2: #{resblock_forward.1} parent=0 // pred_check
    _
  $region3: #{resblock_forward.1} parent=0 // pred_check_branch
    %12 = sbr.rel (0) target = $region5
  $region4: #{resblock_forward.1} parent=0 // pred_region
    _
  $region5: #{resblock_forward.1} parent=0 // pred_fallthru
    _
  // Predicated region
  $region6: #{resblock_forward.1} parent=0 // pred_check
    _
  $region7: #{resblock_forward.1} parent=0 // pred_check_branch
    %14 = sbr.rel (0) target = $region9
  $region8: #{resblock_forward.1} parent=0 // pred_region
    _
  $region9: #{resblock_forward.1} parent=0 // pred_fallthru
    _
  // Predicated region
  $region10: #{resblock_forward.1} parent=0 // pred_check
    _
  $region11: #{resblock_forward.1} parent=0 // pred_check_branch
    %16 = sbr.rel (0) target = $region13
  $region12: #{resblock_forward.1} parent=0 // pred_region
    _
  $region13: #{resblock_forward.1} parent=0 // pred_fallthru
    _
  // Predicated region
  $region14: #{resblock_forward.1} parent=0 // pred_check
    _
  $region15: #{resblock_forward.1} parent=0 // pred_check_branch
    %18 = sbr.rel (0) target = $region17
  $region16: #{resblock_forward.1} parent=0 // pred_region
    _
  $region17: #{resblock_forward.1} parent=0 // pred_fallthru
    _
  // Predicated region
  $region18: #{resblock_forward.1} parent=0 // pred_check
    _
  $region19: #{resblock_forward.1} parent=0 // pred_check_branch
    %20 = sbr.rel (0) target = $region21
  $region20: #{resblock_forward.1} parent=0 // pred_region
    _
  $region21: #{resblock_forward.1} parent=0 // pred_fallthru
    _
  // Predicated region
  $region22: #{resblock_forward.1} parent=0 // pred_check
    _
  $region23: #{resblock_forward.1} parent=0 // pred_check_branch
    %22 = sbr.rel (0) target = $region25
  $region24: #{resblock_forward.1} parent=0 // pred_region
    _
  $region25: #{resblock_forward.1} parent=0 // pred_fallthru
    _
  %v23 = vld [vmem:[%s0] sm:$0xff]
  %v24 = vld [vmem:[%s0 + $0x8] sm:$0xff]
  %v27 = vcombine.high %v23, %v23
  %v28 = vcombine.high %v24, %v24
  %31 = vrot.lane.b32.xlu0 %v23, 17
  %v32 = vpop.permute.xlu0 %31
  %33 = vrot.lane.b32.xlu0 %v27, 17
  %v34 = vpop.permute.xlu0 %33
  %35 = vrot.lane.b32.xlu0 %v24, 17
  %v36 = vpop.permute.xlu0 %35
  %37 = vrot.lane.b32.xlu0 %v28, 17
  %v38 = vpop.permute.xlu0 %37
  %v39 = vlaneseq
  %v40 = vand.u32 %v39, 127
  %vm41 = vcmp.lt.s32.totalorder %v40, 17
  %v42 = vsel %vm41, %v36, %v38
  %v43 = vsel %vm41, %v34, %v36
  %v44 = vsel %vm41, %v32, %v34
  %v45 = vsel %vm41, %v38, %v32
  %v46 = vld [vmem:[%s1] sm:$0xf]
  %v48 = vlaneseq
  %v49 = vshrl.u32 %v48, 7
  %v50 = vsub.s32 0, %v49
  %v51 = vrot.slane %v46, %v50
  %v52 = vlaneseq
  %v53 = vshrl.u32 %v52, 7
  %v54 = vsub.s32 1, %v53
  %v55 = vrot.slane %v46, %v54
  %v56 = vlaneseq
  %v57 = vshrl.u32 %v56, 7
  %v58 = vsub.s32 2, %v57
  %v59 = vrot.slane %v46, %v58
  %v60 = vlaneseq
  %v61 = vshrl.u32 %v60, 7
  %v62 = vsub.s32 3, %v61
  %v63 = vrot.slane %v46, %v62
  %v68 = vmul.f32 %v45, %v51
  %v69 = vmul.f32 %v44, %v55
  %v70 = vmul.f32 %v43, %v59
  %v71 = vmul.f32 %v42, %v63
  %v72 = vld [vmem:[%s2] sm:$0xf]
  %73 = vrot.lane.b32.xlu0 %v23, 16
  %v74 = vpop.permute.xlu0 %73
  %75 = vrot.lane.b32.xlu0 %v27, 16
  %v76 = vpop.permute.xlu0 %75
  %77 = vrot.lane.b32.xlu0 %v24, 16
  %v78 = vpop.permute.xlu0 %77
  %79 = vrot.lane.b32.xlu0 %v28, 16
  %v80 = vpop.permute.xlu0 %79
  %vm81 = vcmp.lt.s32.totalorder %v40, 16
  %v82 = vsel %vm81, %v78, %v80
  %v83 = vsel %vm81, %v76, %v78
  %v84 = vsel %vm81, %v74, %v76
  %v85 = vsel %vm81, %v80, %v74
  %s86 = scalar_lea.vmem %s1, 4
  %v87 = vld [vmem:[%s86] sm:$0xf]
  %v89 = vlaneseq
  %v90 = vshrl.u32 %v89, 7
  %v91 = vsub.s32 0, %v90
  %v92 = vrot.slane %v87, %v91
  %v93 = vlaneseq
  %v94 = vshrl.u32 %v93, 7
  %v95 = vsub.s32 1, %v94
  %v96 = vrot.slane %v87, %v95
  %v97 = vlaneseq
  %v98 = vshrl.u32 %v97, 7
  %v99 = vsub.s32 2, %v98
  %v100 = vrot.slane %v87, %v99
  %v101 = vlaneseq
  %v102 = vshrl.u32 %v101, 7
  %v103 = vsub.s32 3, %v102
  %v104 = vrot.slane %v87, %v103
  %v109 = vmul.f32 %v85, %v92
  %v110 = vmul.f32 %v84, %v96
  %v111 = vmul.f32 %v83, %v100
  %v112 = vmul.f32 %v82, %v104
  %s113 = scalar_lea.vmem %s2, 4
  %v114 = vld [vmem:[%s113] sm:$0xf]
  %vm115 = vcmask 31744
  %v117 = vsel %vm115, %v114, 0
  %vm119 = vcmask 1043456
  %v121 = vsel %vm119, %v109, 0
  %v124 = vsel %vm119, %v110, 0
  %v127 = vsel %vm119, %v111, 0
  %v130 = vsel %vm119, %v112, 0
  %132 = vmatprep.subr.mxu0 %v124
  %133 = vmatpush1.msra.mxu0 %v121
  %134 = vmatprep.subr.mxu0 0.0
  %135 = vmatpush1.msra.mxu0 0.0
  %136 = vmatprep.subr.mxu0 0.0
  %137 = vmatpush1.msra.mxu0 0.0
  %138 = vmatprep.subr.mxu0 0.0
  %139 = vmatpush1.msra.mxu0 0.0
  %140 = vmatprep.subr.mxu0 0.0
  %141 = vmatpush1.msra.mxu0 0.0
  %142 = vmatprep.subr.mxu0 0.0
  %143 = vmatpush1.msra.mxu0 0.0
  %144 = vmatprep.subr.mxu0 0.0
  %145 = vmatpush1.msra.mxu0 0.0
  %146 = vmatprep.subr.mxu0 0.0
  %147 = vmatpush1.msra.mxu0 0.0
  %148 = vmatprep.subr.mxu0 0.0
  %149 = vmatpush1.msra.mxu0 0.0
  %150 = vmatprep.subr.mxu0 0.0
  %151 = vmatpush1.msra.mxu0 0.0
  %152 = vmatprep.subr.mxu0 0.0
  %153 = vmatpush1.msra.mxu0 0.0
  %154 = vmatprep.subr.mxu0 0.0
  %155 = vmatpush1.msra.mxu0 0.0
  %156 = vmatprep.subr.mxu0 0.0
  %157 = vmatpush1.msra.mxu0 0.0
  %158 = vmatprep.subr.mxu0 0.0
  %159 = vmatpush1.msra.mxu0 0.0
  %160 = vmatprep.subr.mxu0 0.0
  %161 = vmatpush1.msra.mxu0 0.0
  %162 = vmatprep.subr.mxu0 0.0
  %163 = vmatpush1.msra.mxu0 0.0
  %164 = vmatprep.subr.mxu0 0.0
  %165 = vmatpush1.msra.mxu0 0.0
  %166 = vmatprep.subr.mxu0 0.0
  %167 = vmatpush1.msra.mxu0 0.0
  %168 = vmatprep.subr.mxu0 0.0
  %169 = vmatpush1.msra.mxu0 0.0
  %170 = vmatprep.subr.mxu0 0.0
  %171 = vmatpush1.msra.mxu0 0.0
  %172 = vmatprep.subr.mxu0 0.0
  %173 = vmatpush1.msra.mxu0 0.0
  %174 = vmatprep.subr.mxu0 0.0
  %175 = vmatpush1.msra.mxu0 0.0
  %176 = vmatprep.subr.mxu0 0.0
  %177 = vmatpush1.msra.mxu0 0.0
  %178 = vmatprep.subr.mxu0 0.0
  %179 = vmatpush1.msra.mxu0 0.0
  %180 = vmatprep.subr.mxu0 0.0
  %181 = vmatpush1.msra.mxu0 0.0
  %182 = vmatprep.subr.mxu0 0.0
  %183 = vmatpush1.msra.mxu0 0.0
  %184 = vmatprep.subr.mxu0 0.0
  %185 = vmatpush1.msra.mxu0 0.0
  %186 = vmatprep.subr.mxu0 0.0
  %187 = vmatpush1.msra.mxu0 0.0
  %188 = vmatprep.subr.mxu0 0.0
  %189 = vmatpush1.msra.mxu0 0.0
  %190 = vmatprep.subr.mxu0 0.0
  %191 = vmatpush1.msra.mxu0 0.0
  %192 = vmatprep.subr.mxu0 0.0
  %193 = vmatpush1.msra.mxu0 0.0
  %194 = vmatprep.subr.mxu0 0.0
  %195 = vmatpush1.msra.mxu0 0.0
  %196 = vmatprep.mubr.f32.mxu0 0.0
  %197 = vmatmul.mubr.f32.gmra.mrb[0].mxu0 %v117
  %v198 = vpop.f32.mrb[0].mxu0
  %v199 = vadd.f32 0.0, %v198
  %v200 = vpop.f32.mrb[0].mxu0
  %v201 = vadd.f32 0.0, %v200
  %202 = vdwg.mxu0
  %203 = vmatprep.subr.mxu0 %v130
  %204 = vmatpush1.msra.mxu0 %v127
  %205 = vmatprep.subr.mxu0 0.0
  %206 = vmatpush1.msra.mxu0 0.0
  %207 = vmatprep.subr.mxu0 0.0
  %208 = vmatpush1.msra.mxu0 0.0
  %209 = vmatprep.subr.mxu0 0.0
  %210 = vmatpush1.msra.mxu0 0.0
  %211 = vmatprep.subr.mxu0 0.0
  %212 = vmatpush1.msra.mxu0 0.0
  %213 = vmatprep.subr.mxu0 0.0
  %214 = vmatpush1.msra.mxu0 0.0
  %215 = vmatprep.subr.mxu0 0.0
  %216 = vmatpush1.msra.mxu0 0.0
  %217 = vmatprep.subr.mxu0 0.0
  %218 = vmatpush1.msra.mxu0 0.0
  %219 = vmatprep.subr.mxu0 0.0
  %220 = vmatpush1.msra.mxu0 0.0
  %221 = vmatprep.subr.mxu0 0.0
  %222 = vmatpush1.msra.mxu0 0.0
  %223 = vmatprep.subr.mxu0 0.0
  %224 = vmatpush1.msra.mxu0 0.0
  %225 = vmatprep.subr.mxu0 0.0
  %226 = vmatpush1.msra.mxu0 0.0
  %227 = vmatprep.subr.mxu0 0.0
  %228 = vmatpush1.msra.mxu0 0.0
  %229 = vmatprep.subr.mxu0 0.0
  %230 = vmatpush1.msra.mxu0 0.0
  %231 = vmatprep.subr.mxu0 0.0
  %232 = vmatpush1.msra.mxu0 0.0
  %233 = vmatprep.subr.mxu0 0.0
  %234 = vmatpush1.msra.mxu0 0.0
  %235 = vmatprep.subr.mxu0 0.0
  %236 = vmatpush1.msra.mxu0 0.0
  %237 = vmatprep.subr.mxu0 0.0
  %238 = vmatpush1.msra.mxu0 0.0
  %239 = vmatprep.subr.mxu0 0.0
  %240 = vmatpush1.msra.mxu0 0.0
  %241 = vmatprep.subr.mxu0 0.0
  %242 = vmatpush1.msra.mxu0 0.0
  %243 = vmatprep.subr.mxu0 0.0
  %244 = vmatpush1.msra.mxu0 0.0
  %245 = vmatprep.subr.mxu0 0.0
  %246 = vmatpush1.msra.mxu0 0.0
  %247 = vmatprep.subr.mxu0 0.0
  %248 = vmatpush1.msra.mxu0 0.0
  %249 = vmatprep.subr.mxu0 0.0
  %250 = vmatpush1.msra.mxu0 0.0
  %251 = vmatprep.subr.mxu0 0.0
  %252 = vmatpush1.msra.mxu0 0.0
  %253 = vmatprep.subr.mxu0 0.0
  %254 = vmatpush1.msra.mxu0 0.0
  %255 = vmatprep.subr.mxu0 0.0
  %256 = vmatpush1.msra.mxu0 0.0
  %257 = vmatprep.subr.mxu0 0.0
  %258 = vmatpush1.msra.mxu0 0.0
  %259 = vmatprep.subr.mxu0 0.0
  %260 = vmatpush1.msra.mxu0 0.0
  %261 = vmatprep.subr.mxu0 0.0
  %262 = vmatpush1.msra.mxu0 0.0
  %263 = vmatprep.subr.mxu0 0.0
  %264 = vmatpush1.msra.mxu0 0.0
  %265 = vmatprep.subr.mxu0 0.0
  %266 = vmatpush1.msra.mxu0 0.0
  %267 = vmatprep.mubr.f32.mxu0 0.0
  %268 = vmatmul.mubr.f32.gmra.mrb[0].mxu0 %v117
  %v269 = vpop.f32.mrb[0].mxu0
  %v270 = vadd.f32 0.0, %v269
  %v271 = vpop.f32.mrb[0].mxu0
  %v272 = vadd.f32 0.0, %v271
  %273 = vdwg.mxu0
  %v275 = vsel %vm115, %v72, 0
  %v278 = vsel %vm119, %v68, 0
  %v281 = vsel %vm119, %v69, 0
  %v284 = vsel %vm119, %v70, 0
  %v287 = vsel %vm119, %v71, 0
  %289 = vmatprep.subr.mxu0 %v281
  %290 = vmatpush1.msra.mxu0 %v278
  %291 = vmatprep.subr.mxu0 0.0
  %292 = vmatpush1.msra.mxu0 0.0
  %293 = vmatprep.subr.mxu0 0.0
  %294 = vmatpush1.msra.mxu0 0.0
  %295 = vmatprep.subr.mxu0 0.0
  %296 = vmatpush1.msra.mxu0 0.0
  %297 = vmatprep.subr.mxu0 0.0
  %298 = vmatpush1.msra.mxu0 0.0
  %299 = vmatprep.subr.mxu0 0.0
  %300 = vmatpush1.msra.mxu0 0.0
  %301 = vmatprep.subr.mxu0 0.0
  %302 = vmatpush1.msra.mxu0 0.0
  %303 = vmatprep.subr.mxu0 0.0
  %304 = vmatpush1.msra.mxu0 0.0
  %305 = vmatprep.subr.mxu0 0.0
  %306 = vmatpush1.msra.mxu0 0.0
  %307 = vmatprep.subr.mxu0 0.0
  %308 = vmatpush1.msra.mxu0 0.0
  %309 = vmatprep.subr.mxu0 0.0
  %310 = vmatpush1.msra.mxu0 0.0
  %311 = vmatprep.subr.mxu0 0.0
  %312 = vmatpush1.msra.mxu0 0.0
  %313 = vmatprep.subr.mxu0 0.0
  %314 = vmatpush1.msra.mxu0 0.0
  %315 = vmatprep.subr.mxu0 0.0
  %316 = vmatpush1.msra.mxu0 0.0
  %317 = vmatprep.subr.mxu0 0.0
  %318 = vmatpush1.msra.mxu0 0.0
  %319 = vmatprep.subr.mxu0 0.0
  %320 = vmatpush1.msra.mxu0 0.0
  %321 = vmatprep.subr.mxu0 0.0
  %322 = vmatpush1.msra.mxu0 0.0
  %323 = vmatprep.subr.mxu0 0.0
  %324 = vmatpush1.msra.mxu0 0.0
  %325 = vmatprep.subr.mxu0 0.0
  %326 = vmatpush1.msra.mxu0 0.0
  %327 = vmatprep.subr.mxu0 0.0
  %328 = vmatpush1.msra.mxu0 0.0
  %329 = vmatprep.subr.mxu0 0.0
  %330 = vmatpush1.msra.mxu0 0.0
  %331 = vmatprep.subr.mxu0 0.0
  %332 = vmatpush1.msra.mxu0 0.0
  %333 = vmatprep.subr.mxu0 0.0
  %334 = vmatpush1.msra.mxu0 0.0
  %335 = vmatprep.subr.mxu0 0.0
  %336 = vmatpush1.msra.mxu0 0.0
  %337 = vmatprep.subr.mxu0 0.0
  %338 = vmatpush1.msra.mxu0 0.0
  %339 = vmatprep.subr.mxu0 0.0
  %340 = vmatpush1.msra.mxu0 0.0
  %341 = vmatprep.subr.mxu0 0.0
  %342 = vmatpush1.msra.mxu0 0.0
  %343 = vmatprep.subr.mxu0 0.0
  %344 = vmatpush1.msra.mxu0 0.0
  %345 = vmatprep.subr.mxu0 0.0
  %346 = vmatpush1.msra.mxu0 0.0
  %347 = vmatprep.subr.mxu0 0.0
  %348 = vmatpush1.msra.mxu0 0.0
  %349 = vmatprep.subr.mxu0 0.0
  %350 = vmatpush1.msra.mxu0 0.0
  %351 = vmatprep.subr.mxu0 0.0
  %352 = vmatpush1.msra.mxu0 0.0
  %353 = vmatprep.mubr.f32.mxu0 0.0
  %354 = vmatmul.mubr.f32.gmra.mrb[0].mxu0 %v275
  %v355 = vpop.f32.mrb[0].mxu0
  %v356 = vadd.f32 %v199, %v355
  %v357 = vpop.f32.mrb[0].mxu0
  %v358 = vadd.f32 %v201, %v357
  %359 = vdwg.mxu0
  %360 = vmatprep.subr.mxu0 %v287
  %361 = vmatpush1.msra.mxu0 %v284
  %362 = vmatprep.subr.mxu0 0.0
  %363 = vmatpush1.msra.mxu0 0.0
  %364 = vmatprep.subr.mxu0 0.0
  %365 = vmatpush1.msra.mxu0 0.0
  %366 = vmatprep.subr.mxu0 0.0
  %367 = vmatpush1.msra.mxu0 0.0
  %368 = vmatprep.subr.mxu0 0.0
  %369 = vmatpush1.msra.mxu0 0.0
  %370 = vmatprep.subr.mxu0 0.0
  %371 = vmatpush1.msra.mxu0 0.0
  %372 = vmatprep.subr.mxu0 0.0
  %373 = vmatpush1.msra.mxu0 0.0
  %374 = vmatprep.subr.mxu0 0.0
  %375 = vmatpush1.msra.mxu0 0.0
  %376 = vmatprep.subr.mxu0 0.0
  %377 = vmatpush1.msra.mxu0 0.0
  %378 = vmatprep.subr.mxu0 0.0
  %379 = vmatpush1.msra.mxu0 0.0
  %380 = vmatprep.subr.mxu0 0.0
  %381 = vmatpush1.msra.mxu0 0.0
  %382 = vmatprep.subr.mxu0 0.0
  %383 = vmatpush1.msra.mxu0 0.0
  %384 = vmatprep.subr.mxu0 0.0
  %385 = vmatpush1.msra.mxu0 0.0
  %386 = vmatprep.subr.mxu0 0.0
  %387 = vmatpush1.msra.mxu0 0.0
  %388 = vmatprep.subr.mxu0 0.0
  %389 = vmatpush1.msra.mxu0 0.0
  %390 = vmatprep.subr.mxu0 0.0
  %391 = vmatpush1.msra.mxu0 0.0
  %392 = vmatprep.subr.mxu0 0.0
  %393 = vmatpush1.msra.mxu0 0.0
  %394 = vmatprep.subr.mxu0 0.0
  %395 = vmatpush1.msra.mxu0 0.0
  %396 = vmatprep.subr.mxu0 0.0
  %397 = vmatpush1.msra.mxu0 0.0
  %398 = vmatprep.subr.mxu0 0.0
  %399 = vmatpush1.msra.mxu0 0.0
  %400 = vmatprep.subr.mxu0 0.0
  %401 = vmatpush1.msra.mxu0 0.0
  %402 = vmatprep.subr.mxu0 0.0
  %403 = vmatpush1.msra.mxu0 0.0
  %404 = vmatprep.subr.mxu0 0.0
  %405 = vmatpush1.msra.mxu0 0.0
  %406 = vmatprep.subr.mxu0 0.0
  %407 = vmatpush1.msra.mxu0 0.0
  %408 = vmatprep.subr.mxu0 0.0
  %409 = vmatpush1.msra.mxu0 0.0
  %410 = vmatprep.subr.mxu0 0.0
  %411 = vmatpush1.msra.mxu0 0.0
  %412 = vmatprep.subr.mxu0 0.0
  %413 = vmatpush1.msra.mxu0 0.0
  %414 = vmatprep.subr.mxu0 0.0
  %415 = vmatpush1.msra.mxu0 0.0
  %416 = vmatprep.subr.mxu0 0.0
  %417 = vmatpush1.msra.mxu0 0.0
  %418 = vmatprep.subr.mxu0 0.0
  %419 = vmatpush1.msra.mxu0 0.0
  %420 = vmatprep.subr.mxu0 0.0
  %421 = vmatpush1.msra.mxu0 0.0
  %422 = vmatprep.subr.mxu0 0.0
  %423 = vmatpush1.msra.mxu0 0.0
  %424 = vmatprep.mubr.f32.mxu0 0.0
  %425 = vmatmul.mubr.f32.gmra.mrb[0].mxu0 %v275
  %v426 = vpop.f32.mrb[0].mxu0
  %v427 = vadd.f32 %v270, %v426
  %v428 = vpop.f32.mrb[0].mxu0
  %v429 = vadd.f32 %v272, %v428
  %430 = vdwg.mxu0
  %431 = vrot.lane.b32.xlu0 %v23, 15
  %v432 = vpop.permute.xlu0 %431
  %433 = vrot.lane.b32.xlu0 %v27, 15
  %v434 = vpop.permute.xlu0 %433
  %435 = vrot.lane.b32.xlu0 %v24, 15
  %v436 = vpop.permute.xlu0 %435
  %437 = vrot.lane.b32.xlu0 %v28, 15
  %v438 = vpop.permute.xlu0 %437
  %vm439 = vcmp.lt.s32.totalorder %v40, 15
  %v440 = vsel %vm439, %v436, %v438
  %v441 = vsel %vm439, %v434, %v436
  %v442 = vsel %vm439, %v432, %v434
  %v443 = vsel %vm439, %v438, %v432
  %s444 = scalar_lea.vmem %s1, 8
  %v445 = vld [vmem:[%s444] sm:$0xf]
  %v447 = vlaneseq
  %v448 = vshrl.u32 %v447, 7
  %v449 = vsub.s32 0, %v448
  %v450 = vrot.slane %v445, %v449
  %v451 = vlaneseq
  %v452 = vshrl.u32 %v451, 7
  %v453 = vsub.s32 1, %v452
  %v454 = vrot.slane %v445, %v453
  %v455 = vlaneseq
  %v456 = vshrl.u32 %v455, 7
  %v457 = vsub.s32 2, %v456
  %v458 = vrot.slane %v445, %v457
  %v459 = vlaneseq
  %v460 = vshrl.u32 %v459, 7
  %v461 = vsub.s32 3, %v460
  %v462 = vrot.slane %v445, %v461
  %v467 = vmul.f32 %v443, %v450
  %v468 = vmul.f32 %v442, %v454
  %v469 = vmul.f32 %v441, %v458
  %v470 = vmul.f32 %v440, %v462
  %s471 = scalar_lea.vmem %s2, 8
  %v472 = vld [vmem:[%s471] sm:$0xf]
  %v474 = vsel %vm115, %v472, 0
  %v477 = vsel %vm119, %v467, 0
  %v480 = vsel %vm119, %v468, 0
  %v483 = vsel %vm119, %v469, 0
  %v486 = vsel %vm119, %v470, 0
  %488 = vmatprep.subr.mxu0 %v480
  %489 = vmatpush1.msra.mxu0 %v477
  %490 = vmatprep.subr.mxu0 0.0
  %491 = vmatpush1.msra.mxu0 0.0
  %492 = vmatprep.subr.mxu0 0.0
  %493 = vmatpush1.msra.mxu0 0.0
  %494 = vmatprep.subr.mxu0 0.0
  %495 = vmatpush1.msra.mxu0 0.0
  %496 = vmatprep.subr.mxu0 0.0
  %497 = vmatpush1.msra.mxu0 0.0
  %498 = vmatprep.subr.mxu0 0.0
  %499 = vmatpush1.msra.mxu0 0.0
  %500 = vmatprep.subr.mxu0 0.0
  %501 = vmatpush1.msra.mxu0 0.0
  %502 = vmatprep.subr.mxu0 0.0
  %503 = vmatpush1.msra.mxu0 0.0
  %504 = vmatprep.subr.mxu0 0.0
  %505 = vmatpush1.msra.mxu0 0.0
  %506 = vmatprep.subr.mxu0 0.0
  %507 = vmatpush1.msra.mxu0 0.0
  %508 = vmatprep.subr.mxu0 0.0
  %509 = vmatpush1.msra.mxu0 0.0
  %510 = vmatprep.subr.mxu0 0.0
  %511 = vmatpush1.msra.mxu0 0.0
  %512 = vmatprep.subr.mxu0 0.0
  %513 = vmatpush1.msra.mxu0 0.0
  %514 = vmatprep.subr.mxu0 0.0
  %515 = vmatpush1.msra.mxu0 0.0
  %516 = vmatprep.subr.mxu0 0.0
  %517 = vmatpush1.msra.mxu0 0.0
  %518 = vmatprep.subr.mxu0 0.0
  %519 = vmatpush1.msra.mxu0 0.0
  %520 = vmatprep.subr.mxu0 0.0
  %521 = vmatpush1.msra.mxu0 0.0
  %522 = vmatprep.subr.mxu0 0.0
  %523 = vmatpush1.msra.mxu0 0.0
  %524 = vmatprep.subr.mxu0 0.0
  %525 = vmatpush1.msra.mxu0 0.0
  %526 = vmatprep.subr.mxu0 0.0
  %527 = vmatpush1.msra.mxu0 0.0
  %528 = vmatprep.subr.mxu0 0.0
  %529 = vmatpush1.msra.mxu0 0.0
  %530 = vmatprep.subr.mxu0 0.0
  %531 = vmatpush1.msra.mxu0 0.0
  %532 = vmatprep.subr.mxu0 0.0
  %533 = vmatpush1.msra.mxu0 0.0
  %534 = vmatprep.subr.mxu0 0.0
  %535 = vmatpush1.msra.mxu0 0.0
  %536 = vmatprep.subr.mxu0 0.0
  %537 = vmatpush1.msra.mxu0 0.0
  %538 = vmatprep.subr.mxu0 0.0
  %539 = vmatpush1.msra.mxu0 0.0
  %540 = vmatprep.subr.mxu0 0.0
  %541 = vmatpush1.msra.mxu0 0.0
  %542 = vmatprep.subr.mxu0 0.0
  %543 = vmatpush1.msra.mxu0 0.0
  %544 = vmatprep.subr.mxu0 0.0
  %545 = vmatpush1.msra.mxu0 0.0
  %546 = vmatprep.subr.mxu0 0.0
  %547 = vmatpush1.msra.mxu0 0.0
  %548 = vmatprep.subr.mxu0 0.0
  %549 = vmatpush1.msra.mxu0 0.0
  %550 = vmatprep.subr.mxu0 0.0
  %551 = vmatpush1.msra.mxu0 0.0
  %552 = vmatprep.mubr.f32.mxu0 0.0
  %553 = vmatmul.mubr.f32.gmra.mrb[0].mxu0 %v474
  %v554 = vpop.f32.mrb[0].mxu0
  %v555 = vadd.f32 0.0, %v554
  %v556 = vpop.f32.mrb[0].mxu0
  %v557 = vadd.f32 0.0, %v556
  %558 = vdwg.mxu0
  %559 = vmatprep.subr.mxu0 %v486
  %560 = vmatpush1.msra.mxu0 %v483
  %561 = vmatprep.subr.mxu0 0.0
  %562 = vmatpush1.msra.mxu0 0.0
  %563 = vmatprep.subr.mxu0 0.0
  %564 = vmatpush1.msra.mxu0 0.0
  %565 = vmatprep.subr.mxu0 0.0
  %566 = vmatpush1.msra.mxu0 0.0
  %567 = vmatprep.subr.mxu0 0.0
  %568 = vmatpush1.msra.mxu0 0.0
  %569 = vmatprep.subr.mxu0 0.0
  %570 = vmatpush1.msra.mxu0 0.0
  %571 = vmatprep.subr.mxu0 0.0
  %572 = vmatpush1.msra.mxu0 0.0
  %573 = vmatprep.subr.mxu0 0.0
  %574 = vmatpush1.msra.mxu0 0.0
  %575 = vmatprep.subr.mxu0 0.0
  %576 = vmatpush1.msra.mxu0 0.0
  %577 = vmatprep.subr.mxu0 0.0
  %578 = vmatpush1.msra.mxu0 0.0
  %579 = vmatprep.subr.mxu0 0.0
  %580 = vmatpush1.msra.mxu0 0.0
  %581 = vmatprep.subr.mxu0 0.0
  %582 = vmatpush1.msra.mxu0 0.0
  %583 = vmatprep.subr.mxu0 0.0
  %584 = vmatpush1.msra.mxu0 0.0
  %585 = vmatprep.subr.mxu0 0.0
  %586 = vmatpush1.msra.mxu0 0.0
  %587 = vmatprep.subr.mxu0 0.0
  %588 = vmatpush1.msra.mxu0 0.0
  %589 = vmatprep.subr.mxu0 0.0
  %590 = vmatpush1.msra.mxu0 0.0
  %591 = vmatprep.subr.mxu0 0.0
  %592 = vmatpush1.msra.mxu0 0.0
  %593 = vmatprep.subr.mxu0 0.0
  %594 = vmatpush1.msra.mxu0 0.0
  %595 = vmatprep.subr.mxu0 0.0
  %596 = vmatpush1.msra.mxu0 0.0
  %597 = vmatprep.subr.mxu0 0.0
  %598 = vmatpush1.msra.mxu0 0.0
  %599 = vmatprep.subr.mxu0 0.0
  %600 = vmatpush1.msra.mxu0 0.0
  %601 = vmatprep.subr.mxu0 0.0
  %602 = vmatpush1.msra.mxu0 0.0
  %603 = vmatprep.subr.mxu0 0.0
  %604 = vmatpush1.msra.mxu0 0.0
  %605 = vmatprep.subr.mxu0 0.0
  %606 = vmatpush1.msra.mxu0 0.0
  %607 = vmatprep.subr.mxu0 0.0
  %608 = vmatpush1.msra.mxu0 0.0
  %609 = vmatprep.subr.mxu0 0.0
  %610 = vmatpush1.msra.mxu0 0.0
  %611 = vmatprep.subr.mxu0 0.0
  %612 = vmatpush1.msra.mxu0 0.0
  %613 = vmatprep.subr.mxu0 0.0
  %614 = vmatpush1.msra.mxu0 0.0
  %615 = vmatprep.subr.mxu0 0.0
  %616 = vmatpush1.msra.mxu0 0.0
  %617 = vmatprep.subr.mxu0 0.0
  %618 = vmatpush1.msra.mxu0 0.0
  %619 = vmatprep.subr.mxu0 0.0
  %620 = vmatpush1.msra.mxu0 0.0
  %621 = vmatprep.subr.mxu0 0.0
  %622 = vmatpush1.msra.mxu0 0.0
  %623 = vmatprep.mubr.f32.mxu0 0.0
  %624 = vmatmul.mubr.f32.gmra.mrb[0].mxu0 %v474
  %v625 = vpop.f32.mrb[0].mxu0
  %v626 = vadd.f32 0.0, %v625
  %v627 = vpop.f32.mrb[0].mxu0
  %v628 = vadd.f32 0.0, %v627
  %629 = vdwg.mxu0
  %v630 = vadd.f32 %v356, %v555
  %v631 = vadd.f32 %v358, %v557
  %v632 = vadd.f32 %v427, %v626
  %v633 = vadd.f32 %v429, %v628
  %634 = vrot.lane.b32.xlu0 %v23, 1
  %v635 = vpop.permute.xlu0 %634
  %636 = vrot.lane.b32.xlu0 %v27, 1
  %v637 = vpop.permute.xlu0 %636
  %638 = vrot.lane.b32.xlu0 %v24, 1
  %v639 = vpop.permute.xlu0 %638
  %640 = vrot.lane.b32.xlu0 %v28, 1
  %v641 = vpop.permute.xlu0 %640
  %vm642 = vcmp.lt.s32.totalorder %v40, 1
  %v643 = vsel %vm642, %v639, %v641
  %v644 = vsel %vm642, %v637, %v639
  %v645 = vsel %vm642, %v635, %v637
  %v646 = vsel %vm642, %v641, %v635
  %s647 = scalar_lea.vmem %s1, 12
  %v648 = vld [vmem:[%s647] sm:$0xf]
  %v650 = vlaneseq
  %v651 = vshrl.u32 %v650, 7
  %v652 = vsub.s32 0, %v651
  %v653 = vrot.slane %v648, %v652
  %v654 = vlaneseq
  %v655 = vshrl.u32 %v654, 7
  %v656 = vsub.s32 1, %v655
  %v657 = vrot.slane %v648, %v656
  %v658 = vlaneseq
  %v659 = vshrl.u32 %v658, 7
  %v660 = vsub.s32 2, %v659
  %v661 = vrot.slane %v648, %v660
  %v662 = vlaneseq
  %v663 = vshrl.u32 %v662, 7
  %v664 = vsub.s32 3, %v663
  %v665 = vrot.slane %v648, %v664
  %v670 = vmul.f32 %v646, %v653
  %v671 = vmul.f32 %v645, %v657
  %v672 = vmul.f32 %v644, %v661
  %v673 = vmul.f32 %v643, %v665
  %s674 = scalar_lea.vmem %s2, 12
  %v675 = vld [vmem:[%s674] sm:$0xf]
  %v677 = vsel %vm115, %v675, 0
  %v680 = vsel %vm119, %v670, 0
  %v683 = vsel %vm119, %v671, 0
  %v686 = vsel %vm119, %v672, 0
  %v689 = vsel %vm119, %v673, 0
  %691 = vmatprep.subr.mxu0 %v683
  %692 = vmatpush1.msra.mxu0 %v680
  %693 = vmatprep.subr.mxu0 0.0
  %694 = vmatpush1.msra.mxu0 0.0
  %695 = vmatprep.subr.mxu0 0.0
  %696 = vmatpush1.msra.mxu0 0.0
  %697 = vmatprep.subr.mxu0 0.0
  %698 = vmatpush1.msra.mxu0 0.0
  %699 = vmatprep.subr.mxu0 0.0
  %700 = vmatpush1.msra.mxu0 0.0
  %701 = vmatprep.subr.mxu0 0.0
  %702 = vmatpush1.msra.mxu0 0.0
  %703 = vmatprep.subr.mxu0 0.0
  %704 = vmatpush1.msra.mxu0 0.0
  %705 = vmatprep.subr.mxu0 0.0
  %706 = vmatpush1.msra.mxu0 0.0
  %707 = vmatprep.subr.mxu0 0.0
  %708 = vmatpush1.msra.mxu0 0.0
  %709 = vmatprep.subr.mxu0 0.0
  %710 = vmatpush1.msra.mxu0 0.0
  %711 = vmatprep.subr.mxu0 0.0
  %712 = vmatpush1.msra.mxu0 0.0
  %713 = vmatprep.subr.mxu0 0.0
  %714 = vmatpush1.msra.mxu0 0.0
  %715 = vmatprep.subr.mxu0 0.0
  %716 = vmatpush1.msra.mxu0 0.0
  %717 = vmatprep.subr.mxu0 0.0
  %718 = vmatpush1.msra.mxu0 0.0
  %719 = vmatprep.subr.mxu0 0.0
  %720 = vmatpush1.msra.mxu0 0.0
  %721 = vmatprep.subr.mxu0 0.0
  %722 = vmatpush1.msra.mxu0 0.0
  %723 = vmatprep.subr.mxu0 0.0
  %724 = vmatpush1.msra.mxu0 0.0
  %725 = vmatprep.subr.mxu0 0.0
  %726 = vmatpush1.msra.mxu0 0.0
  %727 = vmatprep.subr.mxu0 0.0
  %728 = vmatpush1.msra.mxu0 0.0
  %729 = vmatprep.subr.mxu0 0.0
  %730 = vmatpush1.msra.mxu0 0.0
  %731 = vmatprep.subr.mxu0 0.0
  %732 = vmatpush1.msra.mxu0 0.0
  %733 = vmatprep.subr.mxu0 0.0
  %734 = vmatpush1.msra.mxu0 0.0
  %735 = vmatprep.subr.mxu0 0.0
  %736 = vmatpush1.msra.mxu0 0.0
  %737 = vmatprep.subr.mxu0 0.0
  %738 = vmatpush1.msra.mxu0 0.0
  %739 = vmatprep.subr.mxu0 0.0
  %740 = vmatpush1.msra.mxu0 0.0
  %741 = vmatprep.subr.mxu0 0.0
  %742 = vmatpush1.msra.mxu0 0.0
  %743 = vmatprep.subr.mxu0 0.0
  %744 = vmatpush1.msra.mxu0 0.0
  %745 = vmatprep.subr.mxu0 0.0
  %746 = vmatpush1.msra.mxu0 0.0
  %747 = vmatprep.subr.mxu0 0.0
  %748 = vmatpush1.msra.mxu0 0.0
  %749 = vmatprep.subr.mxu0 0.0
  %750 = vmatpush1.msra.mxu0 0.0
  %751 = vmatprep.subr.mxu0 0.0
  %752 = vmatpush1.msra.mxu0 0.0
  %753 = vmatprep.subr.mxu0 0.0
  %754 = vmatpush1.msra.mxu0 0.0
  %755 = vmatprep.mubr.f32.mxu0 0.0
  %756 = vmatmul.mubr.f32.gmra.mrb[0].mxu0 %v677
  %v757 = vpop.f32.mrb[0].mxu0
  %v758 = vadd.f32 0.0, %v757
  %v759 = vpop.f32.mrb[0].mxu0
  %v760 = vadd.f32 0.0, %v759
  %761 = vdwg.mxu0
  %762 = vmatprep.subr.mxu0 %v689
  %763 = vmatpush1.msra.mxu0 %v686
  %764 = vmatprep.subr.mxu0 0.0
  %765 = vmatpush1.msra.mxu0 0.0
  %766 = vmatprep.subr.mxu0 0.0
  %767 = vmatpush1.msra.mxu0 0.0
  %768 = vmatprep.subr.mxu0 0.0
  %769 = vmatpush1.msra.mxu0 0.0
  %770 = vmatprep.subr.mxu0 0.0
  %771 = vmatpush1.msra.mxu0 0.0
  %772 = vmatprep.subr.mxu0 0.0
  %773 = vmatpush1.msra.mxu0 0.0
  %774 = vmatprep.subr.mxu0 0.0
  %775 = vmatpush1.msra.mxu0 0.0
  %776 = vmatprep.subr.mxu0 0.0
  %777 = vmatpush1.msra.mxu0 0.0
  %778 = vmatprep.subr.mxu0 0.0
  %779 = vmatpush1.msra.mxu0 0.0
  %780 = vmatprep.subr.mxu0 0.0
  %781 = vmatpush1.msra.mxu0 0.0
  %782 = vmatprep.subr.mxu0 0.0
  %783 = vmatpush1.msra.mxu0 0.0
  %784 = vmatprep.subr.mxu0 0.0
  %785 = vmatpush1.msra.mxu0 0.0
  %786 = vmatprep.subr.mxu0 0.0
  %787 = vmatpush1.msra.mxu0 0.0
  %788 = vmatprep.subr.mxu0 0.0
  %789 = vmatpush1.msra.mxu0 0.0
  %790 = vmatprep.subr.mxu0 0.0
  %791 = vmatpush1.msra.mxu0 0.0
  %792 = vmatprep.subr.mxu0 0.0
  %793 = vmatpush1.msra.mxu0 0.0
  %794 = vmatprep.subr.mxu0 0.0
  %795 = vmatpush1.msra.mxu0 0.0
  %796 = vmatprep.subr.mxu0 0.0
  %797 = vmatpush1.msra.mxu0 0.0
  %798 = vmatprep.subr.mxu0 0.0
  %799 = vmatpush1.msra.mxu0 0.0
  %800 = vmatprep.subr.mxu0 0.0
  %801 = vmatpush1.msra.mxu0 0.0
  %802 = vmatprep.subr.mxu0 0.0
  %803 = vmatpush1.msra.mxu0 0.0
  %804 = vmatprep.subr.mxu0 0.0
  %805 = vmatpush1.msra.mxu0 0.0
  %806 = vmatprep.subr.mxu0 0.0
  %807 = vmatpush1.msra.mxu0 0.0
  %808 = vmatprep.subr.mxu0 0.0
  %809 = vmatpush1.msra.mxu0 0.0
  %810 = vmatprep.subr.mxu0 0.0
  %811 = vmatpush1.msra.mxu0 0.0
  %812 = vmatprep.subr.mxu0 0.0
  %813 = vmatpush1.msra.mxu0 0.0
  %814 = vmatprep.subr.mxu0 0.0
  %815 = vmatpush1.msra.mxu0 0.0
  %816 = vmatprep.subr.mxu0 0.0
  %817 = vmatpush1.msra.mxu0 0.0
  %818 = vmatprep.subr.mxu0 0.0
  %819 = vmatpush1.msra.mxu0 0.0
  %820 = vmatprep.subr.mxu0 0.0
  %821 = vmatpush1.msra.mxu0 0.0
  %822 = vmatprep.subr.mxu0 0.0
  %823 = vmatpush1.msra.mxu0 0.0
  %824 = vmatprep.subr.mxu0 0.0
  %825 = vmatpush1.msra.mxu0 0.0
  %826 = vmatprep.mubr.f32.mxu0 0.0
  %827 = vmatmul.mubr.f32.gmra.mrb[0].mxu0 %v677
  %v828 = vpop.f32.mrb[0].mxu0
  %v829 = vadd.f32 0.0, %v828
  %v830 = vpop.f32.mrb[0].mxu0
  %v831 = vadd.f32 0.0, %v830
  %832 = vdwg.mxu0
  %v833 = vadd.f32 %v630, %v758
  %v834 = vadd.f32 %v631, %v760
  %v835 = vadd.f32 %v632, %v829
  %v836 = vadd.f32 %v633, %v831
  %s837 = scalar_lea.vmem %s1, 16
  %v838 = vld [vmem:[%s837] sm:$0xf]
  %v840 = vlaneseq
  %v841 = vshrl.u32 %v840, 7
  %v842 = vsub.s32 0, %v841
  %v843 = vrot.slane %v838, %v842
  %v844 = vlaneseq
  %v845 = vshrl.u32 %v844, 7
  %v846 = vsub.s32 1, %v845
  %v847 = vrot.slane %v838, %v846
  %v848 = vlaneseq
  %v849 = vshrl.u32 %v848, 7
  %v850 = vsub.s32 2, %v849
  %v851 = vrot.slane %v838, %v850
  %v852 = vlaneseq
  %v853 = vshrl.u32 %v852, 7
  %v854 = vsub.s32 3, %v853
  %v855 = vrot.slane %v838, %v854
  %v860 = vcombine.low %v843, %v847
  %v861 = vcombine.low %v851, %v855
  %v864 = vmul.f32 %v23, %v860
  %v865 = vmul.f32 %v24, %v861
  %s866 = scalar_lea.vmem %s2, 16
  %v867 = vld [vmem:[%s866] sm:$0xf]
  %v870 = vcombine.high %v864, %v864
  %v871 = vcombine.high %v865, %v865
  %v873 = vsel %vm115, %v867, 0
  %v875 = vsel %vm119, %v864, 0
  %v877 = vsel %vm119, %v870, 0
  %v879 = vsel %vm119, %v865, 0
  %v881 = vsel %vm119, %v871, 0
  %883 = vmatprep.subr.mxu0 %v877
  %884 = vmatpush1.msra.mxu0 %v875
  %885 = vmatprep.subr.mxu0 0.0
  %886 = vmatpush1.msra.mxu0 0.0
  %887 = vmatprep.subr.mxu0 0.0
  %888 = vmatpush1.msra.mxu0 0.0
  %889 = vmatprep.subr.mxu0 0.0
  %890 = vmatpush1.msra.mxu0 0.0
  %891 = vmatprep.subr.mxu0 0.0
  %892 = vmatpush1.msra.mxu0 0.0
  %893 = vmatprep.subr.mxu0 0.0
  %894 = vmatpush1.msra.mxu0 0.0
  %895 = vmatprep.subr.mxu0 0.0
  %896 = vmatpush1.msra.mxu0 0.0
  %897 = vmatprep.subr.mxu0 0.0
  %898 = vmatpush1.msra.mxu0 0.0
  %899 = vmatprep.subr.mxu0 0.0
  %900 = vmatpush1.msra.mxu0 0.0
  %901 = vmatprep.subr.mxu0 0.0
  %902 = vmatpush1.msra.mxu0 0.0
  %903 = vmatprep.subr.mxu0 0.0
  %904 = vmatpush1.msra.mxu0 0.0
  %905 = vmatprep.subr.mxu0 0.0
  %906 = vmatpush1.msra.mxu0 0.0
  %907 = vmatprep.subr.mxu0 0.0
  %908 = vmatpush1.msra.mxu0 0.0
  %909 = vmatprep.subr.mxu0 0.0
  %910 = vmatpush1.msra.mxu0 0.0
  %911 = vmatprep.subr.mxu0 0.0
  %912 = vmatpush1.msra.mxu0 0.0
  %913 = vmatprep.subr.mxu0 0.0
  %914 = vmatpush1.msra.mxu0 0.0
  %915 = vmatprep.subr.mxu0 0.0
  %916 = vmatpush1.msra.mxu0 0.0
  %917 = vmatprep.subr.mxu0 0.0
  %918 = vmatpush1.msra.mxu0 0.0
  %919 = vmatprep.subr.mxu0 0.0
  %920 = vmatpush1.msra.mxu0 0.0
  %921 = vmatprep.subr.mxu0 0.0
  %922 = vmatpush1.msra.mxu0 0.0
  %923 = vmatprep.subr.mxu0 0.0
  %924 = vmatpush1.msra.mxu0 0.0
  %925 = vmatprep.subr.mxu0 0.0
  %926 = vmatpush1.msra.mxu0 0.0
  %927 = vmatprep.subr.mxu0 0.0
  %928 = vmatpush1.msra.mxu0 0.0
  %929 = vmatprep.subr.mxu0 0.0
  %930 = vmatpush1.msra.mxu0 0.0
  %931 = vmatprep.subr.mxu0 0.0
  %932 = vmatpush1.msra.mxu0 0.0
  %933 = vmatprep.subr.mxu0 0.0
  %934 = vmatpush1.msra.mxu0 0.0
  %935 = vmatprep.subr.mxu0 0.0
  %936 = vmatpush1.msra.mxu0 0.0
  %937 = vmatprep.subr.mxu0 0.0
  %938 = vmatpush1.msra.mxu0 0.0
  %939 = vmatprep.subr.mxu0 0.0
  %940 = vmatpush1.msra.mxu0 0.0
  %941 = vmatprep.subr.mxu0 0.0
  %942 = vmatpush1.msra.mxu0 0.0
  %943 = vmatprep.subr.mxu0 0.0
  %944 = vmatpush1.msra.mxu0 0.0
  %945 = vmatprep.subr.mxu0 0.0
  %946 = vmatpush1.msra.mxu0 0.0
  %947 = vmatprep.mubr.f32.mxu0 0.0
  %948 = vmatmul.mubr.f32.gmra.mrb[0].mxu0 %v873
  %v949 = vpop.f32.mrb[0].mxu0
  %v950 = vadd.f32 0.0, %v949
  %v951 = vpop.f32.mrb[0].mxu0
  %v952 = vadd.f32 0.0, %v951
  %953 = vdwg.mxu0
  %954 = vmatprep.subr.mxu0 %v881
  %955 = vmatpush1.msra.mxu0 %v879
  %956 = vmatprep.subr.mxu0 0.0
  %957 = vmatpush1.msra.mxu0 0.0
  %958 = vmatprep.subr.mxu0 0.0
  %959 = vmatpush1.msra.mxu0 0.0
  %960 = vmatprep.subr.mxu0 0.0
  %961 = vmatpush1.msra.mxu0 0.0
  %962 = vmatprep.subr.mxu0 0.0
  %963 = vmatpush1.msra.mxu0 0.0
  %964 = vmatprep.subr.mxu0 0.0
  %965 = vmatpush1.msra.mxu0 0.0
  %966 = vmatprep.subr.mxu0 0.0
  %967 = vmatpush1.msra.mxu0 0.0
  %968 = vmatprep.subr.mxu0 0.0
  %969 = vmatpush1.msra.mxu0 0.0
  %970 = vmatprep.subr.mxu0 0.0
  %971 = vmatpush1.msra.mxu0 0.0
  %972 = vmatprep.subr.mxu0 0.0
  %973 = vmatpush1.msra.mxu0 0.0
  %974 = vmatprep.subr.mxu0 0.0
  %975 = vmatpush1.msra.mxu0 0.0
  %976 = vmatprep.subr.mxu0 0.0
  %977 = vmatpush1.msra.mxu0 0.0
  %978 = vmatprep.subr.mxu0 0.0
  %979 = vmatpush1.msra.mxu0 0.0
  %980 = vmatprep.subr.mxu0 0.0
  %981 = vmatpush1.msra.mxu0 0.0
  %982 = vmatprep.subr.mxu0 0.0
  %983 = vmatpush1.msra.mxu0 0.0
  %984 = vmatprep.subr.mxu0 0.0
  %985 = vmatpush1.msra.mxu0 0.0
  %986 = vmatprep.subr.mxu0 0.0
  %987 = vmatpush1.msra.mxu0 0.0
  %988 = vmatprep.subr.mxu0 0.0
  %989 = vmatpush1.msra.mxu0 0.0
  %990 = vmatprep.subr.mxu0 0.0
  %991 = vmatpush1.msra.mxu0 0.0
  %992 = vmatprep.subr.mxu0 0.0
  %993 = vmatpush1.msra.mxu0 0.0
  %994 = vmatprep.subr.mxu0 0.0
  %995 = vmatpush1.msra.mxu0 0.0
  %996 = vmatprep.subr.mxu0 0.0
  %997 = vmatpush1.msra.mxu0 0.0
  %998 = vmatprep.subr.mxu0 0.0
  %999 = vmatpush1.msra.mxu0 0.0
  %1000 = vmatprep.subr.mxu0 0.0
  %1001 = vmatpush1.msra.mxu0 0.0
  %1002 = vmatprep.subr.mxu0 0.0
  %1003 = vmatpush1.msra.mxu0 0.0
  %1004 = vmatprep.subr.mxu0 0.0
  %1005 = vmatpush1.msra.mxu0 0.0
  %1006 = vmatprep.subr.mxu0 0.0
  %1007 = vmatpush1.msra.mxu0 0.0
  %1008 = vmatprep.subr.mxu0 0.0
  %1009 = vmatpush1.msra.mxu0 0.0
  %1010 = vmatprep.subr.mxu0 0.0
  %1011 = vmatpush1.msra.mxu0 0.0
  %1012 = vmatprep.subr.mxu0 0.0
  %1013 = vmatpush1.msra.mxu0 0.0
  %1014 = vmatprep.subr.mxu0 0.0
  %1015 = vmatpush1.msra.mxu0 0.0
  %1016 = vmatprep.subr.mxu0 0.0
  %1017 = vmatpush1.msra.mxu0 0.0
  %1018 = vmatprep.mubr.f32.mxu0 0.0
  %1019 = vmatmul.mubr.f32.gmra.mrb[0].mxu0 %v873
  %v1020 = vpop.f32.mrb[0].mxu0
  %v1021 = vadd.f32 0.0, %v1020
  %v1022 = vpop.f32.mrb[0].mxu0
  %v1023 = vadd.f32 0.0, %v1022
  %1024 = vdwg.mxu0
  %v1025 = vadd.f32 %v833, %v950
  %v1026 = vadd.f32 %v834, %v952
  %v1027 = vadd.f32 %v835, %v1021
  %v1028 = vadd.f32 %v836, %v1023
  %1029 = vrot.lane.b32.xlu0 %v23, 127
  %v1030 = vpop.permute.xlu0 %1029
  %1031 = vrot.lane.b32.xlu0 %v27, 127
  %v1032 = vpop.permute.xlu0 %1031
  %1033 = vrot.lane.b32.xlu0 %v24, 127
  %v1034 = vpop.permute.xlu0 %1033
  %1035 = vrot.lane.b32.xlu0 %v28, 127
  %v1036 = vpop.permute.xlu0 %1035
  %vm1037 = vcmp.lt.s32.totalorder %v40, 127
  %v1038 = vsel %vm1037, %v1034, %v1036
  %v1039 = vsel %vm1037, %v1032, %v1034
  %v1040 = vsel %vm1037, %v1030, %v1032
  %v1041 = vsel %vm1037, %v1036, %v1030
  %s1042 = scalar_lea.vmem %s1, 20
  %v1043 = vld [vmem:[%s1042] sm:$0xf]
  %v1045 = vlaneseq
  %v1046 = vshrl.u32 %v1045, 7
  %v1047 = vsub.s32 0, %v1046
  %v1048 = vrot.slane %v1043, %v1047
  %v1049 = vlaneseq
  %v1050 = vshrl.u32 %v1049, 7
  %v1051 = vsub.s32 1, %v1050
  %v1052 = vrot.slane %v1043, %v1051
  %v1053 = vlaneseq
  %v1054 = vshrl.u32 %v1053, 7
  %v1055 = vsub.s32 2, %v1054
  %v1056 = vrot.slane %v1043, %v1055
  %v1057 = vlaneseq
  %v1058 = vshrl.u32 %v1057, 7
  %v1059 = vsub.s32 3, %v1058
  %v1060 = vrot.slane %v1043, %v1059
  %v1065 = vmul.f32 %v1040, %v1048
  %v1066 = vmul.f32 %v1039, %v1052
  %v1067 = vmul.f32 %v1038, %v1056
  %v1068 = vmul.f32 %v1041, %v1060
  %s1069 = scalar_lea.vmem %s2, 20
  %v1070 = vld [vmem:[%s1069] sm:$0xf]
  %v1072 = vsel %vm115, %v1070, 0
  %v1075 = vsel %vm119, %v1065, 0
  %v1078 = vsel %vm119, %v1066, 0
  %v1081 = vsel %vm119, %v1067, 0
  %v1084 = vsel %vm119, %v1068, 0
  %1086 = vmatprep.subr.mxu0 %v1078
  %1087 = vmatpush1.msra.mxu0 %v1075
  %1088 = vmatprep.subr.mxu0 0.0
  %1089 = vmatpush1.msra.mxu0 0.0
  %1090 = vmatprep.subr.mxu0 0.0
  %1091 = vmatpush1.msra.mxu0 0.0
  %1092 = vmatprep.subr.mxu0 0.0
  %1093 = vmatpush1.msra.mxu0 0.0
  %1094 = vmatprep.subr.mxu0 0.0
  %1095 = vmatpush1.msra.mxu0 0.0
  %1096 = vmatprep.subr.mxu0 0.0
  %1097 = vmatpush1.msra.mxu0 0.0
  %1098 = vmatprep.subr.mxu0 0.0
  %1099 = vmatpush1.msra.mxu0 0.0
  %1100 = vmatprep.subr.mxu0 0.0
  %1101 = vmatpush1.msra.mxu0 0.0
  %1102 = vmatprep.subr.mxu0 0.0
  %1103 = vmatpush1.msra.mxu0 0.0
  %1104 = vmatprep.subr.mxu0 0.0
  %1105 = vmatpush1.msra.mxu0 0.0
  %1106 = vmatprep.subr.mxu0 0.0
  %1107 = vmatpush1.msra.mxu0 0.0
  %1108 = vmatprep.subr.mxu0 0.0
  %1109 = vmatpush1.msra.mxu0 0.0
  %1110 = vmatprep.subr.mxu0 0.0
  %1111 = vmatpush1.msra.mxu0 0.0
  %1112 = vmatprep.subr.mxu0 0.0
  %1113 = vmatpush1.msra.mxu0 0.0
  %1114 = vmatprep.subr.mxu0 0.0
  %1115 = vmatpush1.msra.mxu0 0.0
  %1116 = vmatprep.subr.mxu0 0.0
  %1117 = vmatpush1.msra.mxu0 0.0
  %1118 = vmatprep.subr.mxu0 0.0
  %1119 = vmatpush1.msra.mxu0 0.0
  %1120 = vmatprep.subr.mxu0 0.0
  %1121 = vmatpush1.msra.mxu0 0.0
  %1122 = vmatprep.subr.mxu0 0.0
  %1123 = vmatpush1.msra.mxu0 0.0
  %1124 = vmatprep.subr.mxu0 0.0
  %1125 = vmatpush1.msra.mxu0 0.0
  %1126 = vmatprep.subr.mxu0 0.0
  %1127 = vmatpush1.msra.mxu0 0.0
  %1128 = vmatprep.subr.mxu0 0.0
  %1129 = vmatpush1.msra.mxu0 0.0
  %1130 = vmatprep.subr.mxu0 0.0
  %1131 = vmatpush1.msra.mxu0 0.0
  %1132 = vmatprep.subr.mxu0 0.0
  %1133 = vmatpush1.msra.mxu0 0.0
  %1134 = vmatprep.subr.mxu0 0.0
  %1135 = vmatpush1.msra.mxu0 0.0
  %1136 = vmatprep.subr.mxu0 0.0
  %1137 = vmatpush1.msra.mxu0 0.0
  %1138 = vmatprep.subr.mxu0 0.0
  %1139 = vmatpush1.msra.mxu0 0.0
  %1140 = vmatprep.subr.mxu0 0.0
  %1141 = vmatpush1.msra.mxu0 0.0
  %1142 = vmatprep.subr.mxu0 0.0
  %1143 = vmatpush1.msra.mxu0 0.0
  %1144 = vmatprep.subr.mxu0 0.0
  %1145 = vmatpush1.msra.mxu0 0.0
  %1146 = vmatprep.subr.mxu0 0.0
  %1147 = vmatpush1.msra.mxu0 0.0
  %1148 = vmatprep.subr.mxu0 0.0
  %1149 = vmatpush1.msra.mxu0 0.0
  %1150 = vmatprep.mubr.f32.mxu0 0.0
  %1151 = vmatmul.mubr.f32.gmra.mrb[0].mxu0 %v1072
  %v1152 = vpop.f32.mrb[0].mxu0
  %v1153 = vadd.f32 0.0, %v1152
  %v1154 = vpop.f32.mrb[0].mxu0
  %v1155 = vadd.f32 0.0, %v1154
  %1156 = vdwg.mxu0
  %1157 = vmatprep.subr.mxu0 %v1084
  %1158 = vmatpush1.msra.mxu0 %v1081
  %1159 = vmatprep.subr.mxu0 0.0
  %1160 = vmatpush1.msra.mxu0 0.0
  %1161 = vmatprep.subr.mxu0 0.0
  %1162 = vmatpush1.msra.mxu0 0.0
  %1163 = vmatprep.subr.mxu0 0.0
  %1164 = vmatpush1.msra.mxu0 0.0
  %1165 = vmatprep.subr.mxu0 0.0
  %1166 = vmatpush1.msra.mxu0 0.0
  %1167 = vmatprep.subr.mxu0 0.0
  %1168 = vmatpush1.msra.mxu0 0.0
  %1169 = vmatprep.subr.mxu0 0.0
  %1170 = vmatpush1.msra.mxu0 0.0
  %1171 = vmatprep.subr.mxu0 0.0
  %1172 = vmatpush1.msra.mxu0 0.0
  %1173 = vmatprep.subr.mxu0 0.0
  %1174 = vmatpush1.msra.mxu0 0.0
  %1175 = vmatprep.subr.mxu0 0.0
  %1176 = vmatpush1.msra.mxu0 0.0
  %1177 = vmatprep.subr.mxu0 0.0
  %1178 = vmatpush1.msra.mxu0 0.0
  %1179 = vmatprep.subr.mxu0 0.0
  %1180 = vmatpush1.msra.mxu0 0.0
  %1181 = vmatprep.subr.mxu0 0.0
  %1182 = vmatpush1.msra.mxu0 0.0
  %1183 = vmatprep.subr.mxu0 0.0
  %1184 = vmatpush1.msra.mxu0 0.0
  %1185 = vmatprep.subr.mxu0 0.0
  %1186 = vmatpush1.msra.mxu0 0.0
  %1187 = vmatprep.subr.mxu0 0.0
  %1188 = vmatpush1.msra.mxu0 0.0
  %1189 = vmatprep.subr.mxu0 0.0
  %1190 = vmatpush1.msra.mxu0 0.0
  %1191 = vmatprep.subr.mxu0 0.0
  %1192 = vmatpush1.msra.mxu0 0.0
  %1193 = vmatprep.subr.mxu0 0.0
  %1194 = vmatpush1.msra.mxu0 0.0
  %1195 = vmatprep.subr.mxu0 0.0
  %1196 = vmatpush1.msra.mxu0 0.0
  %1197 = vmatprep.subr.mxu0 0.0
  %1198 = vmatpush1.msra.mxu0 0.0
  %1199 = vmatprep.subr.mxu0 0.0
  %1200 = vmatpush1.msra.mxu0 0.0
  %1201 = vmatprep.subr.mxu0 0.0
  %1202 = vmatpush1.msra.mxu0 0.0
  %1203 = vmatprep.subr.mxu0 0.0
  %1204 = vmatpush1.msra.mxu0 0.0
  %1205 = vmatprep.subr.mxu0 0.0
  %1206 = vmatpush1.msra.mxu0 0.0
  %1207 = vmatprep.subr.mxu0 0.0
  %1208 = vmatpush1.msra.mxu0 0.0
  %1209 = vmatprep.subr.mxu0 0.0
  %1210 = vmatpush1.msra.mxu0 0.0
  %1211 = vmatprep.subr.mxu0 0.0
  %1212 = vmatpush1.msra.mxu0 0.0
  %1213 = vmatprep.subr.mxu0 0.0
  %1214 = vmatpush1.msra.mxu0 0.0
  %1215 = vmatprep.subr.mxu0 0.0
  %1216 = vmatpush1.msra.mxu0 0.0
  %1217 = vmatprep.subr.mxu0 0.0
  %1218 = vmatpush1.msra.mxu0 0.0
  %1219 = vmatprep.subr.mxu0 0.0
  %1220 = vmatpush1.msra.mxu0 0.0
  %1221 = vmatprep.mubr.f32.mxu0 0.0
  %1222 = vmatmul.mubr.f32.gmra.mrb[0].mxu0 %v1072
  %v1223 = vpop.f32.mrb[0].mxu0
  %v1224 = vadd.f32 0.0, %v1223
  %v1225 = vpop.f32.mrb[0].mxu0
  %v1226 = vadd.f32 0.0, %v1225
  %1227 = vdwg.mxu0
  %v1228 = vadd.f32 %v1025, %v1153
  %v1229 = vadd.f32 %v1026, %v1155
  %v1230 = vadd.f32 %v1027, %v1224
  %v1231 = vadd.f32 %v1028, %v1226
  %1232 = vrot.lane.b32.xlu0 %v23, 113
  %v1233 = vpop.permute.xlu0 %1232
  %1234 = vrot.lane.b32.xlu0 %v27, 113
  %v1235 = vpop.permute.xlu0 %1234
  %1236 = vrot.lane.b32.xlu0 %v24, 113
  %v1237 = vpop.permute.xlu0 %1236
  %1238 = vrot.lane.b32.xlu0 %v28, 113
  %v1239 = vpop.permute.xlu0 %1238
  %vm1240 = vcmp.lt.s32.totalorder %v40, 113
  %v1241 = vsel %vm1240, %v1237, %v1239
  %v1242 = vsel %vm1240, %v1235, %v1237
  %v1243 = vsel %vm1240, %v1233, %v1235
  %v1244 = vsel %vm1240, %v1239, %v1233
  %s1245 = scalar_lea.vmem %s1, 24
  %v1246 = vld [vmem:[%s1245] sm:$0xf]
  %v1248 = vlaneseq
  %v1249 = vshrl.u32 %v1248, 7
  %v1250 = vsub.s32 0, %v1249
  %v1251 = vrot.slane %v1246, %v1250
  %v1252 = vlaneseq
  %v1253 = vshrl.u32 %v1252, 7
  %v1254 = vsub.s32 1, %v1253
  %v1255 = vrot.slane %v1246, %v1254
  %v1256 = vlaneseq
  %v1257 = vshrl.u32 %v1256, 7
  %v1258 = vsub.s32 2, %v1257
  %v1259 = vrot.slane %v1246, %v1258
  %v1260 = vlaneseq
  %v1261 = vshrl.u32 %v1260, 7
  %v1262 = vsub.s32 3, %v1261
  %v1263 = vrot.slane %v1246, %v1262
  %v1268 = vmul.f32 %v1243, %v1251
  %v1269 = vmul.f32 %v1242, %v1255
  %v1270 = vmul.f32 %v1241, %v1259
  %v1271 = vmul.f32 %v1244, %v1263
  %s1272 = scalar_lea.vmem %s2, 24
  %v1273 = vld [vmem:[%s1272] sm:$0xf]
  %v1275 = vsel %vm115, %v1273, 0
  %v1278 = vsel %vm119, %v1268, 0
  %v1281 = vsel %vm119, %v1269, 0
  %v1284 = vsel %vm119, %v1270, 0
  %v1287 = vsel %vm119, %v1271, 0
  %1289 = vmatprep.subr.mxu0 %v1281
  %1290 = vmatpush1.msra.mxu0 %v1278
  %1291 = vmatprep.subr.mxu0 0.0
  %1292 = vmatpush1.msra.mxu0 0.0
  %1293 = vmatprep.subr.mxu0 0.0
  %1294 = vmatpush1.msra.mxu0 0.0
  %1295 = vmatprep.subr.mxu0 0.0
  %1296 = vmatpush1.msra.mxu0 0.0
  %1297 = vmatprep.subr.mxu0 0.0
  %1298 = vmatpush1.msra.mxu0 0.0
  %1299 = vmatprep.subr.mxu0 0.0
  %1300 = vmatpush1.msra.mxu0 0.0
  %1301 = vmatprep.subr.mxu0 0.0
  %1302 = vmatpush1.msra.mxu0 0.0
  %1303 = vmatprep.subr.mxu0 0.0
  %1304 = vmatpush1.msra.mxu0 0.0
  %1305 = vmatprep.subr.mxu0 0.0
  %1306 = vmatpush1.msra.mxu0 0.0
  %1307 = vmatprep.subr.mxu0 0.0
  %1308 = vmatpush1.msra.mxu0 0.0
  %1309 = vmatprep.subr.mxu0 0.0
  %1310 = vmatpush1.msra.mxu0 0.0
  %1311 = vmatprep.subr.mxu0 0.0
  %1312 = vmatpush1.msra.mxu0 0.0
  %1313 = vmatprep.subr.mxu0 0.0
  %1314 = vmatpush1.msra.mxu0 0.0
  %1315 = vmatprep.subr.mxu0 0.0
  %1316 = vmatpush1.msra.mxu0 0.0
  %1317 = vmatprep.subr.mxu0 0.0
  %1318 = vmatpush1.msra.mxu0 0.0
  %1319 = vmatprep.subr.mxu0 0.0
  %1320 = vmatpush1.msra.mxu0 0.0
  %1321 = vmatprep.subr.mxu0 0.0
  %1322 = vmatpush1.msra.mxu0 0.0
  %1323 = vmatprep.subr.mxu0 0.0
  %1324 = vmatpush1.msra.mxu0 0.0
  %1325 = vmatprep.subr.mxu0 0.0
  %1326 = vmatpush1.msra.mxu0 0.0
  %1327 = vmatprep.subr.mxu0 0.0
  %1328 = vmatpush1.msra.mxu0 0.0
  %1329 = vmatprep.subr.mxu0 0.0
  %1330 = vmatpush1.msra.mxu0 0.0
  %1331 = vmatprep.subr.mxu0 0.0
  %1332 = vmatpush1.msra.mxu0 0.0
  %1333 = vmatprep.subr.mxu0 0.0
  %1334 = vmatpush1.msra.mxu0 0.0
  %1335 = vmatprep.subr.mxu0 0.0
  %1336 = vmatpush1.msra.mxu0 0.0
  %1337 = vmatprep.subr.mxu0 0.0
  %1338 = vmatpush1.msra.mxu0 0.0
  %1339 = vmatprep.subr.mxu0 0.0
  %1340 = vmatpush1.msra.mxu0 0.0
  %1341 = vmatprep.subr.mxu0 0.0
  %1342 = vmatpush1.msra.mxu0 0.0
  %1343 = vmatprep.subr.mxu0 0.0
  %1344 = vmatpush1.msra.mxu0 0.0
  %1345 = vmatprep.subr.mxu0 0.0
  %1346 = vmatpush1.msra.mxu0 0.0
  %1347 = vmatprep.subr.mxu0 0.0
  %1348 = vmatpush1.msra.mxu0 0.0
  %1349 = vmatprep.subr.mxu0 0.0
  %1350 = vmatpush1.msra.mxu0 0.0
  %1351 = vmatprep.subr.mxu0 0.0
  %1352 = vmatpush1.msra.mxu0 0.0
  %1353 = vmatprep.mubr.f32.mxu0 0.0
  %1354 = vmatmul.mubr.f32.gmra.mrb[0].mxu0 %v1275
  %v1355 = vpop.f32.mrb[0].mxu0
  %v1356 = vadd.f32 0.0, %v1355
  %v1357 = vpop.f32.mrb[0].mxu0
  %v1358 = vadd.f32 0.0, %v1357
  %1359 = vdwg.mxu0
  %1360 = vmatprep.subr.mxu0 %v1287
  %1361 = vmatpush1.msra.mxu0 %v1284
  %1362 = vmatprep.subr.mxu0 0.0
  %1363 = vmatpush1.msra.mxu0 0.0
  %1364 = vmatprep.subr.mxu0 0.0
  %1365 = vmatpush1.msra.mxu0 0.0
  %1366 = vmatprep.subr.mxu0 0.0
  %1367 = vmatpush1.msra.mxu0 0.0
  %1368 = vmatprep.subr.mxu0 0.0
  %1369 = vmatpush1.msra.mxu0 0.0
  %1370 = vmatprep.subr.mxu0 0.0
  %1371 = vmatpush1.msra.mxu0 0.0
  %1372 = vmatprep.subr.mxu0 0.0
  %1373 = vmatpush1.msra.mxu0 0.0
  %1374 = vmatprep.subr.mxu0 0.0
  %1375 = vmatpush1.msra.mxu0 0.0
  %1376 = vmatprep.subr.mxu0 0.0
  %1377 = vmatpush1.msra.mxu0 0.0
  %1378 = vmatprep.subr.mxu0 0.0
  %1379 = vmatpush1.msra.mxu0 0.0
  %1380 = vmatprep.subr.mxu0 0.0
  %1381 = vmatpush1.msra.mxu0 0.0
  %1382 = vmatprep.subr.mxu0 0.0
  %1383 = vmatpush1.msra.mxu0 0.0
  %1384 = vmatprep.subr.mxu0 0.0
  %1385 = vmatpush1.msra.mxu0 0.0
  %1386 = vmatprep.subr.mxu0 0.0
  %1387 = vmatpush1.msra.mxu0 0.0
  %1388 = vmatprep.subr.mxu0 0.0
  %1389 = vmatpush1.msra.mxu0 0.0
  %1390 = vmatprep.subr.mxu0 0.0
  %1391 = vmatpush1.msra.mxu0 0.0
  %1392 = vmatprep.subr.mxu0 0.0
  %1393 = vmatpush1.msra.mxu0 0.0
  %1394 = vmatprep.subr.mxu0 0.0
  %1395 = vmatpush1.msra.mxu0 0.0
  %1396 = vmatprep.subr.mxu0 0.0
  %1397 = vmatpush1.msra.mxu0 0.0
  %1398 = vmatprep.subr.mxu0 0.0
  %1399 = vmatpush1.msra.mxu0 0.0
  %1400 = vmatprep.subr.mxu0 0.0
  %1401 = vmatpush1.msra.mxu0 0.0
  %1402 = vmatprep.subr.mxu0 0.0
  %1403 = vmatpush1.msra.mxu0 0.0
  %1404 = vmatprep.subr.mxu0 0.0
  %1405 = vmatpush1.msra.mxu0 0.0
  %1406 = vmatprep.subr.mxu0 0.0
  %1407 = vmatpush1.msra.mxu0 0.0
  %1408 = vmatprep.subr.mxu0 0.0
  %1409 = vmatpush1.msra.mxu0 0.0
  %1410 = vmatprep.subr.mxu0 0.0
  %1411 = vmatpush1.msra.mxu0 0.0
  %1412 = vmatprep.subr.mxu0 0.0
  %1413 = vmatpush1.msra.mxu0 0.0
  %1414 = vmatprep.subr.mxu0 0.0
  %1415 = vmatpush1.msra.mxu0 0.0
  %1416 = vmatprep.subr.mxu0 0.0
  %1417 = vmatpush1.msra.mxu0 0.0
  %1418 = vmatprep.subr.mxu0 0.0
  %1419 = vmatpush1.msra.mxu0 0.0
  %1420 = vmatprep.subr.mxu0 0.0
  %1421 = vmatpush1.msra.mxu0 0.0
  %1422 = vmatprep.subr.mxu0 0.0
  %1423 = vmatpush1.msra.mxu0 0.0
  %1424 = vmatprep.mubr.f32.mxu0 0.0
  %1425 = vmatmul.mubr.f32.gmra.mrb[0].mxu0 %v1275
  %v1426 = vpop.f32.mrb[0].mxu0
  %v1427 = vadd.f32 0.0, %v1426
  %v1428 = vpop.f32.mrb[0].mxu0
  %v1429 = vadd.f32 0.0, %v1428
  %1430 = vdwg.mxu0
  %v1431 = vadd.f32 %v1228, %v1356
  %v1432 = vadd.f32 %v1229, %v1358
  %v1433 = vadd.f32 %v1230, %v1427
  %v1434 = vadd.f32 %v1231, %v1429
  %1435 = vrot.lane.b32.xlu0 %v23, 112
  %v1436 = vpop.permute.xlu0 %1435
  %1437 = vrot.lane.b32.xlu0 %v27, 112
  %v1438 = vpop.permute.xlu0 %1437
  %1439 = vrot.lane.b32.xlu0 %v24, 112
  %v1440 = vpop.permute.xlu0 %1439
  %1441 = vrot.lane.b32.xlu0 %v28, 112
  %v1442 = vpop.permute.xlu0 %1441
  %vm1443 = vcmp.lt.s32.totalorder %v40, 112
  %v1444 = vsel %vm1443, %v1440, %v1442
  %v1445 = vsel %vm1443, %v1438, %v1440
  %v1446 = vsel %vm1443, %v1436, %v1438
  %v1447 = vsel %vm1443, %v1442, %v1436
  %s1448 = scalar_lea.vmem %s1, 28
  %v1449 = vld [vmem:[%s1448] sm:$0xf]
  %v1451 = vlaneseq
  %v1452 = vshrl.u32 %v1451, 7
  %v1453 = vsub.s32 0, %v1452
  %v1454 = vrot.slane %v1449, %v1453
  %v1455 = vlaneseq
  %v1456 = vshrl.u32 %v1455, 7
  %v1457 = vsub.s32 1, %v1456
  %v1458 = vrot.slane %v1449, %v1457
  %v1459 = vlaneseq
  %v1460 = vshrl.u32 %v1459, 7
  %v1461 = vsub.s32 2, %v1460
  %v1462 = vrot.slane %v1449, %v1461
  %v1463 = vlaneseq
  %v1464 = vshrl.u32 %v1463, 7
  %v1465 = vsub.s32 3, %v1464
  %v1466 = vrot.slane %v1449, %v1465
  %v1471 = vmul.f32 %v1446, %v1454
  %v1472 = vmul.f32 %v1445, %v1458
  %v1473 = vmul.f32 %v1444, %v1462
  %v1474 = vmul.f32 %v1447, %v1466
  %s1475 = scalar_lea.vmem %s2, 28
  %v1476 = vld [vmem:[%s1475] sm:$0xf]
  %v1478 = vsel %vm115, %v1476, 0
  %v1481 = vsel %vm119, %v1471, 0
  %v1484 = vsel %vm119, %v1472, 0
  %v1487 = vsel %vm119, %v1473, 0
  %v1490 = vsel %vm119, %v1474, 0
  %1492 = vmatprep.subr.mxu0 %v1484
  %1493 = vmatpush1.msra.mxu0 %v1481
  %1494 = vmatprep.subr.mxu0 0.0
  %1495 = vmatpush1.msra.mxu0 0.0
  %1496 = vmatprep.subr.mxu0 0.0
  %1497 = vmatpush1.msra.mxu0 0.0
  %1498 = vmatprep.subr.mxu0 0.0
  %1499 = vmatpush1.msra.mxu0 0.0
  %1500 = vmatprep.subr.mxu0 0.0
  %1501 = vmatpush1.msra.mxu0 0.0
  %1502 = vmatprep.subr.mxu0 0.0
  %1503 = vmatpush1.msra.mxu0 0.0
  %1504 = vmatprep.subr.mxu0 0.0
  %1505 = vmatpush1.msra.mxu0 0.0
  %1506 = vmatprep.subr.mxu0 0.0
  %1507 = vmatpush1.msra.mxu0 0.0
  %1508 = vmatprep.subr.mxu0 0.0
  %1509 = vmatpush1.msra.mxu0 0.0
  %1510 = vmatprep.subr.mxu0 0.0
  %1511 = vmatpush1.msra.mxu0 0.0
  %1512 = vmatprep.subr.mxu0 0.0
  %1513 = vmatpush1.msra.mxu0 0.0
  %1514 = vmatprep.subr.mxu0 0.0
  %1515 = vmatpush1.msra.mxu0 0.0
  %1516 = vmatprep.subr.mxu0 0.0
  %1517 = vmatpush1.msra.mxu0 0.0
  %1518 = vmatprep.subr.mxu0 0.0
  %1519 = vmatpush1.msra.mxu0 0.0
  %1520 = vmatprep.subr.mxu0 0.0
  %1521 = vmatpush1.msra.mxu0 0.0
  %1522 = vmatprep.subr.mxu0 0.0
  %1523 = vmatpush1.msra.mxu0 0.0
  %1524 = vmatprep.subr.mxu0 0.0
  %1525 = vmatpush1.msra.mxu0 0.0
  %1526 = vmatprep.subr.mxu0 0.0
  %1527 = vmatpush1.msra.mxu0 0.0
  %1528 = vmatprep.subr.mxu0 0.0
  %1529 = vmatpush1.msra.mxu0 0.0
  %1530 = vmatprep.subr.mxu0 0.0
  %1531 = vmatpush1.msra.mxu0 0.0
  %1532 = vmatprep.subr.mxu0 0.0
  %1533 = vmatpush1.msra.mxu0 0.0
  %1534 = vmatprep.subr.mxu0 0.0
  %1535 = vmatpush1.msra.mxu0 0.0
  %1536 = vmatprep.subr.mxu0 0.0
  %1537 = vmatpush1.msra.mxu0 0.0
  %1538 = vmatprep.subr.mxu0 0.0
  %1539 = vmatpush1.msra.mxu0 0.0
  %1540 = vmatprep.subr.mxu0 0.0
  %1541 = vmatpush1.msra.mxu0 0.0
  %1542 = vmatprep.subr.mxu0 0.0
  %1543 = vmatpush1.msra.mxu0 0.0
  %1544 = vmatprep.subr.mxu0 0.0
  %1545 = vmatpush1.msra.mxu0 0.0
  %1546 = vmatprep.subr.mxu0 0.0
  %1547 = vmatpush1.msra.mxu0 0.0
  %1548 = vmatprep.subr.mxu0 0.0
  %1549 = vmatpush1.msra.mxu0 0.0
  %1550 = vmatprep.subr.mxu0 0.0
  %1551 = vmatpush1.msra.mxu0 0.0
  %1552 = vmatprep.subr.mxu0 0.0
  %1553 = vmatpush1.msra.mxu0 0.0
  %1554 = vmatprep.subr.mxu0 0.0
  %1555 = vmatpush1.msra.mxu0 0.0
  %1556 = vmatprep.mubr.f32.mxu0 0.0
  %1557 = vmatmul.mubr.f32.gmra.mrb[0].mxu0 %v1478
  %v1558 = vpop.f32.mrb[0].mxu0
  %v1559 = vadd.f32 0.0, %v1558
  %v1560 = vpop.f32.mrb[0].mxu0
  %v1561 = vadd.f32 0.0, %v1560
  %1562 = vdwg.mxu0
  %1563 = vmatprep.subr.mxu0 %v1490
  %1564 = vmatpush1.msra.mxu0 %v1487
  %1565 = vmatprep.subr.mxu0 0.0
  %1566 = vmatpush1.msra.mxu0 0.0
  %1567 = vmatprep.subr.mxu0 0.0
  %1568 = vmatpush1.msra.mxu0 0.0
  %1569 = vmatprep.subr.mxu0 0.0
  %1570 = vmatpush1.msra.mxu0 0.0
  %1571 = vmatprep.subr.mxu0 0.0
  %1572 = vmatpush1.msra.mxu0 0.0
  %1573 = vmatprep.subr.mxu0 0.0
  %1574 = vmatpush1.msra.mxu0 0.0
  %1575 = vmatprep.subr.mxu0 0.0
  %1576 = vmatpush1.msra.mxu0 0.0
  %1577 = vmatprep.subr.mxu0 0.0
  %1578 = vmatpush1.msra.mxu0 0.0
  %1579 = vmatprep.subr.mxu0 0.0
  %1580 = vmatpush1.msra.mxu0 0.0
  %1581 = vmatprep.subr.mxu0 0.0
  %1582 = vmatpush1.msra.mxu0 0.0
  %1583 = vmatprep.subr.mxu0 0.0
  %1584 = vmatpush1.msra.mxu0 0.0
  %1585 = vmatprep.subr.mxu0 0.0
  %1586 = vmatpush1.msra.mxu0 0.0
  %1587 = vmatprep.subr.mxu0 0.0
  %1588 = vmatpush1.msra.mxu0 0.0
  %1589 = vmatprep.subr.mxu0 0.0
  %1590 = vmatpush1.msra.mxu0 0.0
  %1591 = vmatprep.subr.mxu0 0.0
  %1592 = vmatpush1.msra.mxu0 0.0
  %1593 = vmatprep.subr.mxu0 0.0
  %1594 = vmatpush1.msra.mxu0 0.0
  %1595 = vmatprep.subr.mxu0 0.0
  %1596 = vmatpush1.msra.mxu0 0.0
  %1597 = vmatprep.subr.mxu0 0.0
  %1598 = vmatpush1.msra.mxu0 0.0
  %1599 = vmatprep.subr.mxu0 0.0
  %1600 = vmatpush1.msra.mxu0 0.0
  %1601 = vmatprep.subr.mxu0 0.0
  %1602 = vmatpush1.msra.mxu0 0.0
  %1603 = vmatprep.subr.mxu0 0.0
  %1604 = vmatpush1.msra.mxu0 0.0
  %1605 = vmatprep.subr.mxu0 0.0
  %1606 = vmatpush1.msra.mxu0 0.0
  %1607 = vmatprep.subr.mxu0 0.0
  %1608 = vmatpush1.msra.mxu0 0.0
  %1609 = vmatprep.subr.mxu0 0.0
  %1610 = vmatpush1.msra.mxu0 0.0
  %1611 = vmatprep.subr.mxu0 0.0
  %1612 = vmatpush1.msra.mxu0 0.0
  %1613 = vmatprep.subr.mxu0 0.0
  %1614 = vmatpush1.msra.mxu0 0.0
  %1615 = vmatprep.subr.mxu0 0.0
  %1616 = vmatpush1.msra.mxu0 0.0
  %1617 = vmatprep.subr.mxu0 0.0
  %1618 = vmatpush1.msra.mxu0 0.0
  %1619 = vmatprep.subr.mxu0 0.0
  %1620 = vmatpush1.msra.mxu0 0.0
  %1621 = vmatprep.subr.mxu0 0.0
  %1622 = vmatpush1.msra.mxu0 0.0
  %1623 = vmatprep.subr.mxu0 0.0
  %1624 = vmatpush1.msra.mxu0 0.0
  %1625 = vmatprep.subr.mxu0 0.0
  %1626 = vmatpush1.msra.mxu0 0.0
  %1627 = vmatprep.mubr.f32.mxu0 0.0
  %1628 = vmatmul.mubr.f32.gmra.mrb[0].mxu0 %v1478
  %v1629 = vpop.f32.mrb[0].mxu0
  %v1630 = vadd.f32 0.0, %v1629
  %v1631 = vpop.f32.mrb[0].mxu0
  %v1632 = vadd.f32 0.0, %v1631
  %1633 = vdwg.mxu0
  %v1634 = vadd.f32 %v1431, %v1559
  %v1635 = vadd.f32 %v1432, %v1561
  %v1636 = vadd.f32 %v1433, %v1630
  %v1637 = vadd.f32 %v1434, %v1632
  %1638 = vrot.lane.b32.xlu0 %v23, 111
  %v1639 = vpop.permute.xlu0 %1638
  %1640 = vrot.lane.b32.xlu0 %v27, 111
  %v1641 = vpop.permute.xlu0 %1640
  %1642 = vrot.lane.b32.xlu0 %v24, 111
  %v1643 = vpop.permute.xlu0 %1642
  %1644 = vrot.lane.b32.xlu0 %v28, 111
  %v1645 = vpop.permute.xlu0 %1644
  %vm1646 = vcmp.lt.s32.totalorder %v40, 111
  %v1647 = vsel %vm1646, %v1643, %v1645
  %v1648 = vsel %vm1646, %v1641, %v1643
  %v1649 = vsel %vm1646, %v1639, %v1641
  %v1650 = vsel %vm1646, %v1645, %v1639
  %s1651 = scalar_lea.vmem %s1, 32
  %v1652 = vld [vmem:[%s1651] sm:$0xf]
  %v1654 = vlaneseq
  %v1655 = vshrl.u32 %v1654, 7
  %v1656 = vsub.s32 0, %v1655
  %v1657 = vrot.slane %v1652, %v1656
  %v1658 = vlaneseq
  %v1659 = vshrl.u32 %v1658, 7
  %v1660 = vsub.s32 1, %v1659
  %v1661 = vrot.slane %v1652, %v1660
  %v1662 = vlaneseq
  %v1663 = vshrl.u32 %v1662, 7
  %v1664 = vsub.s32 2, %v1663
  %v1665 = vrot.slane %v1652, %v1664
  %v1666 = vlaneseq
  %v1667 = vshrl.u32 %v1666, 7
  %v1668 = vsub.s32 3, %v1667
  %v1669 = vrot.slane %v1652, %v1668
  %v1674 = vmul.f32 %v1649, %v1657
  %v1675 = vmul.f32 %v1648, %v1661
  %v1676 = vmul.f32 %v1647, %v1665
  %v1677 = vmul.f32 %v1650, %v1669
  %s1678 = scalar_lea.vmem %s2, 32
  %v1679 = vld [vmem:[%s1678] sm:$0xf]
  %v1681 = vsel %vm115, %v1679, 0
  %v1684 = vsel %vm119, %v1674, 0
  %v1687 = vsel %vm119, %v1675, 0
  %v1690 = vsel %vm119, %v1676, 0
  %v1693 = vsel %vm119, %v1677, 0
  %1695 = vmatprep.subr.mxu0 %v1687
  %1696 = vmatpush1.msra.mxu0 %v1684
  %1697 = vmatprep.subr.mxu0 0.0
  %1698 = vmatpush1.msra.mxu0 0.0
  %1699 = vmatprep.subr.mxu0 0.0
  %1700 = vmatpush1.msra.mxu0 0.0
  %1701 = vmatprep.subr.mxu0 0.0
  %1702 = vmatpush1.msra.mxu0 0.0
  %1703 = vmatprep.subr.mxu0 0.0
  %1704 = vmatpush1.msra.mxu0 0.0
  %1705 = vmatprep.subr.mxu0 0.0
  %1706 = vmatpush1.msra.mxu0 0.0
  %1707 = vmatprep.subr.mxu0 0.0
  %1708 = vmatpush1.msra.mxu0 0.0
  %1709 = vmatprep.subr.mxu0 0.0
  %1710 = vmatpush1.msra.mxu0 0.0
  %1711 = vmatprep.subr.mxu0 0.0
  %1712 = vmatpush1.msra.mxu0 0.0
  %1713 = vmatprep.subr.mxu0 0.0
  %1714 = vmatpush1.msra.mxu0 0.0
  %1715 = vmatprep.subr.mxu0 0.0
  %1716 = vmatpush1.msra.mxu0 0.0
  %1717 = vmatprep.subr.mxu0 0.0
  %1718 = vmatpush1.msra.mxu0 0.0
  %1719 = vmatprep.subr.mxu0 0.0
  %1720 = vmatpush1.msra.mxu0 0.0
  %1721 = vmatprep.subr.mxu0 0.0
  %1722 = vmatpush1.msra.mxu0 0.0
  %1723 = vmatprep.subr.mxu0 0.0
  %1724 = vmatpush1.msra.mxu0 0.0
  %1725 = vmatprep.subr.mxu0 0.0
  %1726 = vmatpush1.msra.mxu0 0.0
  %1727 = vmatprep.subr.mxu0 0.0
  %1728 = vmatpush1.msra.mxu0 0.0
  %1729 = vmatprep.subr.mxu0 0.0
  %1730 = vmatpush1.msra.mxu0 0.0
  %1731 = vmatprep.subr.mxu0 0.0
  %1732 = vmatpush1.msra.mxu0 0.0
  %1733 = vmatprep.subr.mxu0 0.0
  %1734 = vmatpush1.msra.mxu0 0.0
  %1735 = vmatprep.subr.mxu0 0.0
  %1736 = vmatpush1.msra.mxu0 0.0
  %1737 = vmatprep.subr.mxu0 0.0
  %1738 = vmatpush1.msra.mxu0 0.0
  %1739 = vmatprep.subr.mxu0 0.0
  %1740 = vmatpush1.msra.mxu0 0.0
  %1741 = vmatprep.subr.mxu0 0.0
  %1742 = vmatpush1.msra.mxu0 0.0
  %1743 = vmatprep.subr.mxu0 0.0
  %1744 = vmatpush1.msra.mxu0 0.0
  %1745 = vmatprep.subr.mxu0 0.0
  %1746 = vmatpush1.msra.mxu0 0.0
  %1747 = vmatprep.subr.mxu0 0.0
  %1748 = vmatpush1.msra.mxu0 0.0
  %1749 = vmatprep.subr.mxu0 0.0
  %1750 = vmatpush1.msra.mxu0 0.0
  %1751 = vmatprep.subr.mxu0 0.0
  %1752 = vmatpush1.msra.mxu0 0.0
  %1753 = vmatprep.subr.mxu0 0.0
  %1754 = vmatpush1.msra.mxu0 0.0
  %1755 = vmatprep.subr.mxu0 0.0
  %1756 = vmatpush1.msra.mxu0 0.0
  %1757 = vmatprep.subr.mxu0 0.0
  %1758 = vmatpush1.msra.mxu0 0.0
  %1759 = vmatprep.mubr.f32.mxu0 0.0
  %1760 = vmatmul.mubr.f32.gmra.mrb[0].mxu0 %v1681
  %v1761 = vpop.f32.mrb[0].mxu0
  %v1762 = vadd.f32 0.0, %v1761
  %v1763 = vpop.f32.mrb[0].mxu0
  %v1764 = vadd.f32 0.0, %v1763
  %1765 = vdwg.mxu0
  %1766 = vmatprep.subr.mxu0 %v1693
  %1767 = vmatpush1.msra.mxu0 %v1690
  %1768 = vmatprep.subr.mxu0 0.0
  %1769 = vmatpush1.msra.mxu0 0.0
  %1770 = vmatprep.subr.mxu0 0.0
  %1771 = vmatpush1.msra.mxu0 0.0
  %1772 = vmatprep.subr.mxu0 0.0
  %1773 = vmatpush1.msra.mxu0 0.0
  %1774 = vmatprep.subr.mxu0 0.0
  %1775 = vmatpush1.msra.mxu0 0.0
  %1776 = vmatprep.subr.mxu0 0.0
  %1777 = vmatpush1.msra.mxu0 0.0
  %1778 = vmatprep.subr.mxu0 0.0
  %1779 = vmatpush1.msra.mxu0 0.0
  %1780 = vmatprep.subr.mxu0 0.0
  %1781 = vmatpush1.msra.mxu0 0.0
  %1782 = vmatprep.subr.mxu0 0.0
  %1783 = vmatpush1.msra.mxu0 0.0
  %1784 = vmatprep.subr.mxu0 0.0
  %1785 = vmatpush1.msra.mxu0 0.0
  %1786 = vmatprep.subr.mxu0 0.0
  %1787 = vmatpush1.msra.mxu0 0.0
  %1788 = vmatprep.subr.mxu0 0.0
  %1789 = vmatpush1.msra.mxu0 0.0
  %1790 = vmatprep.subr.mxu0 0.0
  %1791 = vmatpush1.msra.mxu0 0.0
  %1792 = vmatprep.subr.mxu0 0.0
  %1793 = vmatpush1.msra.mxu0 0.0
  %1794 = vmatprep.subr.mxu0 0.0
  %1795 = vmatpush1.msra.mxu0 0.0
  %1796 = vmatprep.subr.mxu0 0.0
  %1797 = vmatpush1.msra.mxu0 0.0
  %1798 = vmatprep.subr.mxu0 0.0
  %1799 = vmatpush1.msra.mxu0 0.0
  %1800 = vmatprep.subr.mxu0 0.0
  %1801 = vmatpush1.msra.mxu0 0.0
  %1802 = vmatprep.subr.mxu0 0.0
  %1803 = vmatpush1.msra.mxu0 0.0
  %1804 = vmatprep.subr.mxu0 0.0
  %1805 = vmatpush1.msra.mxu0 0.0
  %1806 = vmatprep.subr.mxu0 0.0
  %1807 = vmatpush1.msra.mxu0 0.0
  %1808 = vmatprep.subr.mxu0 0.0
  %1809 = vmatpush1.msra.mxu0 0.0
  %1810 = vmatprep.subr.mxu0 0.0
  %1811 = vmatpush1.msra.mxu0 0.0
  %1812 = vmatprep.subr.mxu0 0.0
  %1813 = vmatpush1.msra.mxu0 0.0
  %1814 = vmatprep.subr.mxu0 0.0
  %1815 = vmatpush1.msra.mxu0 0.0
  %1816 = vmatprep.subr.mxu0 0.0
  %1817 = vmatpush1.msra.mxu0 0.0
  %1818 = vmatprep.subr.mxu0 0.0
  %1819 = vmatpush1.msra.mxu0 0.0
  %1820 = vmatprep.subr.mxu0 0.0
  %1821 = vmatpush1.msra.mxu0 0.0
  %1822 = vmatprep.subr.mxu0 0.0
  %1823 = vmatpush1.msra.mxu0 0.0
  %1824 = vmatprep.subr.mxu0 0.0
  %1825 = vmatpush1.msra.mxu0 0.0
  %1826 = vmatprep.subr.mxu0 0.0
  %1827 = vmatpush1.msra.mxu0 0.0
  %1828 = vmatprep.subr.mxu0 0.0
  %1829 = vmatpush1.msra.mxu0 0.0
  %1830 = vmatprep.mubr.f32.mxu0 0.0
  %1831 = vmatmul.mubr.f32.gmra.mrb[0].mxu0 %v1681
  %v1832 = vpop.f32.mrb[0].mxu0
  %v1833 = vadd.f32 0.0, %v1832
  %v1834 = vpop.f32.mrb[0].mxu0
  %v1835 = vadd.f32 0.0, %v1834
  %1836 = vdwg.mxu0
  %v1837 = vadd.f32 %v1634, %v1762
  %v1838 = vadd.f32 %v1635, %v1764
  %v1839 = vadd.f32 %v1636, %v1833
  %v1840 = vadd.f32 %v1637, %v1835
  %v1841 = vld [vmem:[%s3] sm:$0xf]
  %1843 = vset.pattern.permute.xlu0 0
  %1844 = vperm.xlu0 %1843, %v1841
  %v1845 = vpop.permute.xlu0 %1844
  %v1847 = vadd.f32 %v1837, %v1845
  %v1848 = vadd.f32 %v1838, %v1845
  %v1849 = vadd.f32 %v1839, %v1845
  %v1850 = vadd.f32 %v1840, %v1845
  %v1851 = vmax.f32 %v1847, 0.0
  %v1852 = vmax.f32 %v1848, 0.0
  %v1853 = vmax.f32 %v1849, 0.0
  %v1854 = vmax.f32 %v1850, 0.0
  %1855 = vrot.lane.b32.xlu0 %v1851, 17
  %v1856 = vpop.permute.xlu0 %1855
  %1857 = vrot.lane.b32.xlu0 %v1852, 17
  %v1858 = vpop.permute.xlu0 %1857
  %1859 = vrot.lane.b32.xlu0 %v1853, 17
  %v1860 = vpop.permute.xlu0 %1859
  %1861 = vrot.lane.b32.xlu0 %v1854, 17
  %v1862 = vpop.permute.xlu0 %1861
  %v1863 = vsel %vm41, %v1860, %v1862
  %v1864 = vsel %vm41, %v1858, %v1860
  %v1865 = vsel %vm41, %v1856, %v1858
  %v1866 = vsel %vm41, %v1862, %v1856
  %v1867 = vmul.f32 %v1866, %v51
  %v1868 = vmul.f32 %v1865, %v55
  %v1869 = vmul.f32 %v1864, %v59
  %v1870 = vmul.f32 %v1863, %v63
  %v1871 = vld [vmem:[%s4] sm:$0xf]
  %1872 = vrot.lane.b32.xlu0 %v1851, 16
  %v1873 = vpop.permute.xlu0 %1872
  %1874 = vrot.lane.b32.xlu0 %v1852, 16
  %v1875 = vpop.permute.xlu0 %1874
  %1876 = vrot.lane.b32.xlu0 %v1853, 16
  %v1877 = vpop.permute.xlu0 %1876
  %1878 = vrot.lane.b32.xlu0 %v1854, 16
  %v1879 = vpop.permute.xlu0 %1878
  %v1880 = vsel %vm81, %v1877, %v1879
  %v1881 = vsel %vm81, %v1875, %v1877
  %v1882 = vsel %vm81, %v1873, %v1875
  %v1883 = vsel %vm81, %v1879, %v1873
  %v1884 = vmul.f32 %v1883, %v92
  %v1885 = vmul.f32 %v1882, %v96
  %v1886 = vmul.f32 %v1881, %v100
  %v1887 = vmul.f32 %v1880, %v104
  %s1888 = scalar_lea.vmem %s4, 4
  %v1889 = vld [vmem:[%s1888] sm:$0xf]
  %v1891 = vsel %vm115, %v1889, 0
  %v1894 = vsel %vm119, %v1884, 0
  %v1897 = vsel %vm119, %v1885, 0
  %v1900 = vsel %vm119, %v1886, 0
  %v1903 = vsel %vm119, %v1887, 0
  %1905 = vmatprep.subr.mxu0 %v1897
  %1906 = vmatpush1.msra.mxu0 %v1894
  %1907 = vmatprep.subr.mxu0 0.0
  %1908 = vmatpush1.msra.mxu0 0.0
  %1909 = vmatprep.subr.mxu0 0.0
  %1910 = vmatpush1.msra.mxu0 0.0
  %1911 = vmatprep.subr.mxu0 0.0
  %1912 = vmatpush1.msra.mxu0 0.0
  %1913 = vmatprep.subr.mxu0 0.0
  %1914 = vmatpush1.msra.mxu0 0.0
  %1915 = vmatprep.subr.mxu0 0.0
  %1916 = vmatpush1.msra.mxu0 0.0
  %1917 = vmatprep.subr.mxu0 0.0
  %1918 = vmatpush1.msra.mxu0 0.0
  %1919 = vmatprep.subr.mxu0 0.0
  %1920 = vmatpush1.msra.mxu0 0.0
  %1921 = vmatprep.subr.mxu0 0.0
  %1922 = vmatpush1.msra.mxu0 0.0
  %1923 = vmatprep.subr.mxu0 0.0
  %1924 = vmatpush1.msra.mxu0 0.0
  %1925 = vmatprep.subr.mxu0 0.0
  %1926 = vmatpush1.msra.mxu0 0.0
  %1927 = vmatprep.subr.mxu0 0.0
  %1928 = vmatpush1.msra.mxu0 0.0
  %1929 = vmatprep.subr.mxu0 0.0
  %1930 = vmatpush1.msra.mxu0 0.0
  %1931 = vmatprep.subr.mxu0 0.0
  %1932 = vmatpush1.msra.mxu0 0.0
  %1933 = vmatprep.subr.mxu0 0.0
  %1934 = vmatpush1.msra.mxu0 0.0
  %1935 = vmatprep.subr.mxu0 0.0
  %1936 = vmatpush1.msra.mxu0 0.0
  %1937 = vmatprep.subr.mxu0 0.0
  %1938 = vmatpush1.msra.mxu0 0.0
  %1939 = vmatprep.subr.mxu0 0.0
  %1940 = vmatpush1.msra.mxu0 0.0
  %1941 = vmatprep.subr.mxu0 0.0
  %1942 = vmatpush1.msra.mxu0 0.0
  %1943 = vmatprep.subr.mxu0 0.0
  %1944 = vmatpush1.msra.mxu0 0.0
  %1945 = vmatprep.subr.mxu0 0.0
  %1946 = vmatpush1.msra.mxu0 0.0
  %1947 = vmatprep.subr.mxu0 0.0
  %1948 = vmatpush1.msra.mxu0 0.0
  %1949 = vmatprep.subr.mxu0 0.0
  %1950 = vmatpush1.msra.mxu0 0.0
  %1951 = vmatprep.subr.mxu0 0.0
  %1952 = vmatpush1.msra.mxu0 0.0
  %1953 = vmatprep.subr.mxu0 0.0
  %1954 = vmatpush1.msra.mxu0 0.0
  %1955 = vmatprep.subr.mxu0 0.0
  %1956 = vmatpush1.msra.mxu0 0.0
  %1957 = vmatprep.subr.mxu0 0.0
  %1958 = vmatpush1.msra.mxu0 0.0
  %1959 = vmatprep.subr.mxu0 0.0
  %1960 = vmatpush1.msra.mxu0 0.0
  %1961 = vmatprep.subr.mxu0 0.0
  %1962 = vmatpush1.msra.mxu0 0.0
  %1963 = vmatprep.subr.mxu0 0.0
  %1964 = vmatpush1.msra.mxu0 0.0
  %1965 = vmatprep.subr.mxu0 0.0
  %1966 = vmatpush1.msra.mxu0 0.0
  %1967 = vmatprep.subr.mxu0 0.0
  %1968 = vmatpush1.msra.mxu0 0.0
  %1969 = vmatprep.mubr.f32.mxu0 0.0
  %1970 = vmatmul.mubr.f32.gmra.mrb[0].mxu0 %v1891
  %v1971 = vpop.f32.mrb[0].mxu0
  %v1972 = vadd.f32 0.0, %v1971
  %v1973 = vpop.f32.mrb[0].mxu0
  %v1974 = vadd.f32 0.0, %v1973
  %1975 = vdwg.mxu0
  %1976 = vmatprep.subr.mxu0 %v1903
  %1977 = vmatpush1.msra.mxu0 %v1900
  %1978 = vmatprep.subr.mxu0 0.0
  %1979 = vmatpush1.msra.mxu0 0.0
  %1980 = vmatprep.subr.mxu0 0.0
  %1981 = vmatpush1.msra.mxu0 0.0
  %1982 = vmatprep.subr.mxu0 0.0
  %1983 = vmatpush1.msra.mxu0 0.0
  %1984 = vmatprep.subr.mxu0 0.0
  %1985 = vmatpush1.msra.mxu0 0.0
  %1986 = vmatprep.subr.mxu0 0.0
  %1987 = vmatpush1.msra.mxu0 0.0
  %1988 = vmatprep.subr.mxu0 0.0
  %1989 = vmatpush1.msra.mxu0 0.0
  %1990 = vmatprep.subr.mxu0 0.0
  %1991 = vmatpush1.msra.mxu0 0.0
  %1992 = vmatprep.subr.mxu0 0.0
  %1993 = vmatpush1.msra.mxu0 0.0
  %1994 = vmatprep.subr.mxu0 0.0
  %1995 = vmatpush1.msra.mxu0 0.0
  %1996 = vmatprep.subr.mxu0 0.0
  %1997 = vmatpush1.msra.mxu0 0.0
  %1998 = vmatprep.subr.mxu0 0.0
  %1999 = vmatpush1.msra.mxu0 0.0
  %2000 = vmatprep.subr.mxu0 0.0
  %2001 = vmatpush1.msra.mxu0 0.0
  %2002 = vmatprep.subr.mxu0 0.0
  %2003 = vmatpush1.msra.mxu0 0.0
  %2004 = vmatprep.subr.mxu0 0.0
  %2005 = vmatpush1.msra.mxu0 0.0
  %2006 = vmatprep.subr.mxu0 0.0
  %2007 = vmatpush1.msra.mxu0 0.0
  %2008 = vmatprep.subr.mxu0 0.0
  %2009 = vmatpush1.msra.mxu0 0.0
  %2010 = vmatprep.subr.mxu0 0.0
  %2011 = vmatpush1.msra.mxu0 0.0
  %2012 = vmatprep.subr.mxu0 0.0
  %2013 = vmatpush1.msra.mxu0 0.0
  %2014 = vmatprep.subr.mxu0 0.0
  %2015 = vmatpush1.msra.mxu0 0.0
  %2016 = vmatprep.subr.mxu0 0.0
  %2017 = vmatpush1.msra.mxu0 0.0
  %2018 = vmatprep.subr.mxu0 0.0
  %2019 = vmatpush1.msra.mxu0 0.0
  %2020 = vmatprep.subr.mxu0 0.0
  %2021 = vmatpush1.msra.mxu0 0.0
  %2022 = vmatprep.subr.mxu0 0.0
  %2023 = vmatpush1.msra.mxu0 0.0
  %2024 = vmatprep.subr.mxu0 0.0
  %2025 = vmatpush1.msra.mxu0 0.0
  %2026 = vmatprep.subr.mxu0 0.0
  %2027 = vmatpush1.msra.mxu0 0.0
  %2028 = vmatprep.subr.mxu0 0.0
  %2029 = vmatpush1.msra.mxu0 0.0
  %2030 = vmatprep.subr.mxu0 0.0
  %2031 = vmatpush1.msra.mxu0 0.0
  %2032 = vmatprep.subr.mxu0 0.0
  %2033 = vmatpush1.msra.mxu0 0.0
  %2034 = vmatprep.subr.mxu0 0.0
  %2035 = vmatpush1.msra.mxu0 0.0
  %2036 = vmatprep.subr.mxu0 0.0
  %2037 = vmatpush1.msra.mxu0 0.0
  %2038 = vmatprep.subr.mxu0 0.0
  %2039 = vmatpush1.msra.mxu0 0.0
  %2040 = vmatprep.mubr.f32.mxu0 0.0
  %2041 = vmatmul.mubr.f32.gmra.mrb[0].mxu0 %v1891
  %v2042 = vpop.f32.mrb[0].mxu0
  %v2043 = vadd.f32 0.0, %v2042
  %v2044 = vpop.f32.mrb[0].mxu0
  %v2045 = vadd.f32 0.0, %v2044
  %2046 = vdwg.mxu0
  %v2048 = vsel %vm115, %v1871, 0
  %v2051 = vsel %vm119, %v1867, 0
  %v2054 = vsel %vm119, %v1868, 0
  %v2057 = vsel %vm119, %v1869, 0
  %v2060 = vsel %vm119, %v1870, 0
  %2062 = vmatprep.subr.mxu0 %v2054
  %2063 = vmatpush1.msra.mxu0 %v2051
  %2064 = vmatprep.subr.mxu0 0.0
  %2065 = vmatpush1.msra.mxu0 0.0
  %2066 = vmatprep.subr.mxu0 0.0
  %2067 = vmatpush1.msra.mxu0 0.0
  %2068 = vmatprep.subr.mxu0 0.0
  %2069 = vmatpush1.msra.mxu0 0.0
  %2070 = vmatprep.subr.mxu0 0.0
  %2071 = vmatpush1.msra.mxu0 0.0
  %2072 = vmatprep.subr.mxu0 0.0
  %2073 = vmatpush1.msra.mxu0 0.0
  %2074 = vmatprep.subr.mxu0 0.0
  %2075 = vmatpush1.msra.mxu0 0.0
  %2076 = vmatprep.subr.mxu0 0.0
  %2077 = vmatpush1.msra.mxu0 0.0
  %2078 = vmatprep.subr.mxu0 0.0
  %2079 = vmatpush1.msra.mxu0 0.0
  %2080 = vmatprep.subr.mxu0 0.0
  %2081 = vmatpush1.msra.mxu0 0.0
  %2082 = vmatprep.subr.mxu0 0.0
  %2083 = vmatpush1.msra.mxu0 0.0
  %2084 = vmatprep.subr.mxu0 0.0
  %2085 = vmatpush1.msra.mxu0 0.0
  %2086 = vmatprep.subr.mxu0 0.0
  %2087 = vmatpush1.msra.mxu0 0.0
  %2088 = vmatprep.subr.mxu0 0.0
  %2089 = vmatpush1.msra.mxu0 0.0
  %2090 = vmatprep.subr.mxu0 0.0
  %2091 = vmatpush1.msra.mxu0 0.0
  %2092 = vmatprep.subr.mxu0 0.0
  %2093 = vmatpush1.msra.mxu0 0.0
  %2094 = vmatprep.subr.mxu0 0.0
  %2095 = vmatpush1.msra.mxu0 0.0
  %2096 = vmatprep.subr.mxu0 0.0
  %2097 = vmatpush1.msra.mxu0 0.0
  %2098 = vmatprep.subr.mxu0 0.0
  %2099 = vmatpush1.msra.mxu0 0.0
  %2100 = vmatprep.subr.mxu0 0.0
  %2101 = vmatpush1.msra.mxu0 0.0
  %2102 = vmatprep.subr.mxu0 0.0
  %2103 = vmatpush1.msra.mxu0 0.0
  %2104 = vmatprep.subr.mxu0 0.0
  %2105 = vmatpush1.msra.mxu0 0.0
  %2106 = vmatprep.subr.mxu0 0.0
  %2107 = vmatpush1.msra.mxu0 0.0
  %2108 = vmatprep.subr.mxu0 0.0
  %2109 = vmatpush1.msra.mxu0 0.0
  %2110 = vmatprep.subr.mxu0 0.0
  %2111 = vmatpush1.msra.mxu0 0.0
  %2112 = vmatprep.subr.mxu0 0.0
  %2113 = vmatpush1.msra.mxu0 0.0
  %2114 = vmatprep.subr.mxu0 0.0
  %2115 = vmatpush1.msra.mxu0 0.0
  %2116 = vmatprep.subr.mxu0 0.0
  %2117 = vmatpush1.msra.mxu0 0.0
  %2118 = vmatprep.subr.mxu0 0.0
  %2119 = vmatpush1.msra.mxu0 0.0
  %2120 = vmatprep.subr.mxu0 0.0
  %2121 = vmatpush1.msra.mxu0 0.0
  %2122 = vmatprep.subr.mxu0 0.0
  %2123 = vmatpush1.msra.mxu0 0.0
  %2124 = vmatprep.subr.mxu0 0.0
  %2125 = vmatpush1.msra.mxu0 0.0
  %2126 = vmatprep.mubr.f32.mxu0 0.0
  %2127 = vmatmul.mubr.f32.gmra.mrb[0].mxu0 %v2048
  %v2128 = vpop.f32.mrb[0].mxu0
  %v2129 = vadd.f32 %v1972, %v2128
  %v2130 = vpop.f32.mrb[0].mxu0
  %v2131 = vadd.f32 %v1974, %v2130
  %2132 = vdwg.mxu0
  %2133 = vmatprep.subr.mxu0 %v2060
  %2134 = vmatpush1.msra.mxu0 %v2057
  %2135 = vmatprep.subr.mxu0 0.0
  %2136 = vmatpush1.msra.mxu0 0.0
  %2137 = vmatprep.subr.mxu0 0.0
  %2138 = vmatpush1.msra.mxu0 0.0
  %2139 = vmatprep.subr.mxu0 0.0
  %2140 = vmatpush1.msra.mxu0 0.0
  %2141 = vmatprep.subr.mxu0 0.0
  %2142 = vmatpush1.msra.mxu0 0.0
  %2143 = vmatprep.subr.mxu0 0.0
  %2144 = vmatpush1.msra.mxu0 0.0
  %2145 = vmatprep.subr.mxu0 0.0
  %2146 = vmatpush1.msra.mxu0 0.0
  %2147 = vmatprep.subr.mxu0 0.0
  %2148 = vmatpush1.msra.mxu0 0.0
  %2149 = vmatprep.subr.mxu0 0.0
  %2150 = vmatpush1.msra.mxu0 0.0
  %2151 = vmatprep.subr.mxu0 0.0
  %2152 = vmatpush1.msra.mxu0 0.0
  %2153 = vmatprep.subr.mxu0 0.0
  %2154 = vmatpush1.msra.mxu0 0.0
  %2155 = vmatprep.subr.mxu0 0.0
  %2156 = vmatpush1.msra.mxu0 0.0
  %2157 = vmatprep.subr.mxu0 0.0
  %2158 = vmatpush1.msra.mxu0 0.0
  %2159 = vmatprep.subr.mxu0 0.0
  %2160 = vmatpush1.msra.mxu0 0.0
  %2161 = vmatprep.subr.mxu0 0.0
  %2162 = vmatpush1.msra.mxu0 0.0
  %2163 = vmatprep.subr.mxu0 0.0
  %2164 = vmatpush1.msra.mxu0 0.0
  %2165 = vmatprep.subr.mxu0 0.0
  %2166 = vmatpush1.msra.mxu0 0.0
  %2167 = vmatprep.subr.mxu0 0.0
  %2168 = vmatpush1.msra.mxu0 0.0
  %2169 = vmatprep.subr.mxu0 0.0
  %2170 = vmatpush1.msra.mxu0 0.0
  %2171 = vmatprep.subr.mxu0 0.0
  %2172 = vmatpush1.msra.mxu0 0.0
  %2173 = vmatprep.subr.mxu0 0.0
  %2174 = vmatpush1.msra.mxu0 0.0
  %2175 = vmatprep.subr.mxu0 0.0
  %2176 = vmatpush1.msra.mxu0 0.0
  %2177 = vmatprep.subr.mxu0 0.0
  %2178 = vmatpush1.msra.mxu0 0.0
  %2179 = vmatprep.subr.mxu0 0.0
  %2180 = vmatpush1.msra.mxu0 0.0
  %2181 = vmatprep.subr.mxu0 0.0
  %2182 = vmatpush1.msra.mxu0 0.0
  %2183 = vmatprep.subr.mxu0 0.0
  %2184 = vmatpush1.msra.mxu0 0.0
  %2185 = vmatprep.subr.mxu0 0.0
  %2186 = vmatpush1.msra.mxu0 0.0
  %2187 = vmatprep.subr.mxu0 0.0
  %2188 = vmatpush1.msra.mxu0 0.0
  %2189 = vmatprep.subr.mxu0 0.0
  %2190 = vmatpush1.msra.mxu0 0.0
  %2191 = vmatprep.subr.mxu0 0.0
  %2192 = vmatpush1.msra.mxu0 0.0
  %2193 = vmatprep.subr.mxu0 0.0
  %2194 = vmatpush1.msra.mxu0 0.0
  %2195 = vmatprep.subr.mxu0 0.0
  %2196 = vmatpush1.msra.mxu0 0.0
  %2197 = vmatprep.mubr.f32.mxu0 0.0
  %2198 = vmatmul.mubr.f32.gmra.mrb[0].mxu0 %v2048
  %v2199 = vpop.f32.mrb[0].mxu0
  %v2200 = vadd.f32 %v2043, %v2199
  %v2201 = vpop.f32.mrb[0].mxu0
  %v2202 = vadd.f32 %v2045, %v2201
  %2203 = vdwg.mxu0
  %2204 = vrot.lane.b32.xlu0 %v1851, 15
  %v2205 = vpop.permute.xlu0 %2204
  %2206 = vrot.lane.b32.xlu0 %v1852, 15
  %v2207 = vpop.permute.xlu0 %2206
  %2208 = vrot.lane.b32.xlu0 %v1853, 15
  %v2209 = vpop.permute.xlu0 %2208
  %2210 = vrot.lane.b32.xlu0 %v1854, 15
  %v2211 = vpop.permute.xlu0 %2210
  %v2212 = vsel %vm439, %v2209, %v2211
  %v2213 = vsel %vm439, %v2207, %v2209
  %v2214 = vsel %vm439, %v2205, %v2207
  %v2215 = vsel %vm439, %v2211, %v2205
  %v2216 = vmul.f32 %v2215, %v450
  %v2217 = vmul.f32 %v2214, %v454
  %v2218 = vmul.f32 %v2213, %v458
  %v2219 = vmul.f32 %v2212, %v462
  %s2220 = scalar_lea.vmem %s4, 8
  %v2221 = vld [vmem:[%s2220] sm:$0xf]
  %v2223 = vsel %vm115, %v2221, 0
  %v2226 = vsel %vm119, %v2216, 0
  %v2229 = vsel %vm119, %v2217, 0
  %v2232 = vsel %vm119, %v2218, 0
  %v2235 = vsel %vm119, %v2219, 0
  %2237 = vmatprep.subr.mxu0 %v2229
  %2238 = vmatpush1.msra.mxu0 %v2226
  %2239 = vmatprep.subr.mxu0 0.0
  %2240 = vmatpush1.msra.mxu0 0.0
  %2241 = vmatprep.subr.mxu0 0.0
  %2242 = vmatpush1.msra.mxu0 0.0
  %2243 = vmatprep.subr.mxu0 0.0
  %2244 = vmatpush1.msra.mxu0 0.0
  %2245 = vmatprep.subr.mxu0 0.0
  %2246 = vmatpush1.msra.mxu0 0.0
  %2247 = vmatprep.subr.mxu0 0.0
  %2248 = vmatpush1.msra.mxu0 0.0
  %2249 = vmatprep.subr.mxu0 0.0
  %2250 = vmatpush1.msra.mxu0 0.0
  %2251 = vmatprep.subr.mxu0 0.0
  %2252 = vmatpush1.msra.mxu0 0.0
  %2253 = vmatprep.subr.mxu0 0.0
  %2254 = vmatpush1.msra.mxu0 0.0
  %2255 = vmatprep.subr.mxu0 0.0
  %2256 = vmatpush1.msra.mxu0 0.0
  %2257 = vmatprep.subr.mxu0 0.0
  %2258 = vmatpush1.msra.mxu0 0.0
  %2259 = vmatprep.subr.mxu0 0.0
  %2260 = vmatpush1.msra.mxu0 0.0
  %2261 = vmatprep.subr.mxu0 0.0
  %2262 = vmatpush1.msra.mxu0 0.0
  %2263 = vmatprep.subr.mxu0 0.0
  %2264 = vmatpush1.msra.mxu0 0.0
  %2265 = vmatprep.subr.mxu0 0.0
  %2266 = vmatpush1.msra.mxu0 0.0
  %2267 = vmatprep.subr.mxu0 0.0
  %2268 = vmatpush1.msra.mxu0 0.0
  %2269 = vmatprep.subr.mxu0 0.0
  %2270 = vmatpush1.msra.mxu0 0.0
  %2271 = vmatprep.subr.mxu0 0.0
  %2272 = vmatpush1.msra.mxu0 0.0
  %2273 = vmatprep.subr.mxu0 0.0
  %2274 = vmatpush1.msra.mxu0 0.0
  %2275 = vmatprep.subr.mxu0 0.0
  %2276 = vmatpush1.msra.mxu0 0.0
  %2277 = vmatprep.subr.mxu0 0.0
  %2278 = vmatpush1.msra.mxu0 0.0
  %2279 = vmatprep.subr.mxu0 0.0
  %2280 = vmatpush1.msra.mxu0 0.0
  %2281 = vmatprep.subr.mxu0 0.0
  %2282 = vmatpush1.msra.mxu0 0.0
  %2283 = vmatprep.subr.mxu0 0.0
  %2284 = vmatpush1.msra.mxu0 0.0
  %2285 = vmatprep.subr.mxu0 0.0
  %2286 = vmatpush1.msra.mxu0 0.0
  %2287 = vmatprep.subr.mxu0 0.0
  %2288 = vmatpush1.msra.mxu0 0.0
  %2289 = vmatprep.subr.mxu0 0.0
  %2290 = vmatpush1.msra.mxu0 0.0
  %2291 = vmatprep.subr.mxu0 0.0
  %2292 = vmatpush1.msra.mxu0 0.0
  %2293 = vmatprep.subr.mxu0 0.0
  %2294 = vmatpush1.msra.mxu0 0.0
  %2295 = vmatprep.subr.mxu0 0.0
  %2296 = vmatpush1.msra.mxu0 0.0
  %2297 = vmatprep.subr.mxu0 0.0
  %2298 = vmatpush1.msra.mxu0 0.0
  %2299 = vmatprep.subr.mxu0 0.0
  %2300 = vmatpush1.msra.mxu0 0.0
  %2301 = vmatprep.mubr.f32.mxu0 0.0
  %2302 = vmatmul.mubr.f32.gmra.mrb[0].mxu0 %v2223
  %v2303 = vpop.f32.mrb[0].mxu0
  %v2304 = vadd.f32 0.0, %v2303
  %v2305 = vpop.f32.mrb[0].mxu0
  %v2306 = vadd.f32 0.0, %v2305
  %2307 = vdwg.mxu0
  %2308 = vmatprep.subr.mxu0 %v2235
  %2309 = vmatpush1.msra.mxu0 %v2232
  %2310 = vmatprep.subr.mxu0 0.0
  %2311 = vmatpush1.msra.mxu0 0.0
  %2312 = vmatprep.subr.mxu0 0.0
  %2313 = vmatpush1.msra.mxu0 0.0
  %2314 = vmatprep.subr.mxu0 0.0
  %2315 = vmatpush1.msra.mxu0 0.0
  %2316 = vmatprep.subr.mxu0 0.0
  %2317 = vmatpush1.msra.mxu0 0.0
  %2318 = vmatprep.subr.mxu0 0.0
  %2319 = vmatpush1.msra.mxu0 0.0
  %2320 = vmatprep.subr.mxu0 0.0
  %2321 = vmatpush1.msra.mxu0 0.0
  %2322 = vmatprep.subr.mxu0 0.0
  %2323 = vmatpush1.msra.mxu0 0.0
  %2324 = vmatprep.subr.mxu0 0.0
  %2325 = vmatpush1.msra.mxu0 0.0
  %2326 = vmatprep.subr.mxu0 0.0
  %2327 = vmatpush1.msra.mxu0 0.0
  %2328 = vmatprep.subr.mxu0 0.0
  %2329 = vmatpush1.msra.mxu0 0.0
  %2330 = vmatprep.subr.mxu0 0.0
  %2331 = vmatpush1.msra.mxu0 0.0
  %2332 = vmatprep.subr.mxu0 0.0
  %2333 = vmatpush1.msra.mxu0 0.0
  %2334 = vmatprep.subr.mxu0 0.0
  %2335 = vmatpush1.msra.mxu0 0.0
  %2336 = vmatprep.subr.mxu0 0.0
  %2337 = vmatpush1.msra.mxu0 0.0
  %2338 = vmatprep.subr.mxu0 0.0
  %2339 = vmatpush1.msra.mxu0 0.0
  %2340 = vmatprep.subr.mxu0 0.0
  %2341 = vmatpush1.msra.mxu0 0.0
  %2342 = vmatprep.subr.mxu0 0.0
  %2343 = vmatpush1.msra.mxu0 0.0
  %2344 = vmatprep.subr.mxu0 0.0
  %2345 = vmatpush1.msra.mxu0 0.0
  %2346 = vmatprep.subr.mxu0 0.0
  %2347 = vmatpush1.msra.mxu0 0.0
  %2348 = vmatprep.subr.mxu0 0.0
  %2349 = vmatpush1.msra.mxu0 0.0
  %2350 = vmatprep.subr.mxu0 0.0
  %2351 = vmatpush1.msra.mxu0 0.0
  %2352 = vmatprep.subr.mxu0 0.0
  %2353 = vmatpush1.msra.mxu0 0.0
  %2354 = vmatprep.subr.mxu0 0.0
  %2355 = vmatpush1.msra.mxu0 0.0
  %2356 = vmatprep.subr.mxu0 0.0
  %2357 = vmatpush1.msra.mxu0 0.0
  %2358 = vmatprep.subr.mxu0 0.0
  %2359 = vmatpush1.msra.mxu0 0.0
  %2360 = vmatprep.subr.mxu0 0.0
  %2361 = vmatpush1.msra.mxu0 0.0
  %2362 = vmatprep.subr.mxu0 0.0
  %2363 = vmatpush1.msra.mxu0 0.0
  %2364 = vmatprep.subr.mxu0 0.0
  %2365 = vmatpush1.msra.mxu0 0.0
  %2366 = vmatprep.subr.mxu0 0.0
  %2367 = vmatpush1.msra.mxu0 0.0
  %2368 = vmatprep.subr.mxu0 0.0
  %2369 = vmatpush1.msra.mxu0 0.0
  %2370 = vmatprep.subr.mxu0 0.0
  %2371 = vmatpush1.msra.mxu0 0.0
  %2372 = vmatprep.mubr.f32.mxu0 0.0
  %2373 = vmatmul.mubr.f32.gmra.mrb[0].mxu0 %v2223
  %v2374 = vpop.f32.mrb[0].mxu0
  %v2375 = vadd.f32 0.0, %v2374
  %v2376 = vpop.f32.mrb[0].mxu0
  %v2377 = vadd.f32 0.0, %v2376
  %2378 = vdwg.mxu0
  %v2379 = vadd.f32 %v2129, %v2304
  %v2380 = vadd.f32 %v2131, %v2306
  %v2381 = vadd.f32 %v2200, %v2375
  %v2382 = vadd.f32 %v2202, %v2377
  %2383 = vrot.lane.b32.xlu0 %v1851, 1
  %v2384 = vpop.permute.xlu0 %2383
  %2385 = vrot.lane.b32.xlu0 %v1852, 1
  %v2386 = vpop.permute.xlu0 %2385
  %2387 = vrot.lane.b32.xlu0 %v1853, 1
  %v2388 = vpop.permute.xlu0 %2387
  %2389 = vrot.lane.b32.xlu0 %v1854, 1
  %v2390 = vpop.permute.xlu0 %2389
  %v2391 = vsel %vm642, %v2388, %v2390
  %v2392 = vsel %vm642, %v2386, %v2388
  %v2393 = vsel %vm642, %v2384, %v2386
  %v2394 = vsel %vm642, %v2390, %v2384
  %v2395 = vmul.f32 %v2394, %v653
  %v2396 = vmul.f32 %v2393, %v657
  %v2397 = vmul.f32 %v2392, %v661
  %v2398 = vmul.f32 %v2391, %v665
  %s2399 = scalar_lea.vmem %s4, 12
  %v2400 = vld [vmem:[%s2399] sm:$0xf]
  %v2402 = vsel %vm115, %v2400, 0
  %v2405 = vsel %vm119, %v2395, 0
  %v2408 = vsel %vm119, %v2396, 0
  %v2411 = vsel %vm119, %v2397, 0
  %v2414 = vsel %vm119, %v2398, 0
  %2416 = vmatprep.subr.mxu0 %v2408
  %2417 = vmatpush1.msra.mxu0 %v2405
  %2418 = vmatprep.subr.mxu0 0.0
  %2419 = vmatpush1.msra.mxu0 0.0
  %2420 = vmatprep.subr.mxu0 0.0
  %2421 = vmatpush1.msra.mxu0 0.0
  %2422 = vmatprep.subr.mxu0 0.0
  %2423 = vmatpush1.msra.mxu0 0.0
  %2424 = vmatprep.subr.mxu0 0.0
  %2425 = vmatpush1.msra.mxu0 0.0
  %2426 = vmatprep.subr.mxu0 0.0
  %2427 = vmatpush1.msra.mxu0 0.0
  %2428 = vmatprep.subr.mxu0 0.0
  %2429 = vmatpush1.msra.mxu0 0.0
  %2430 = vmatprep.subr.mxu0 0.0
  %2431 = vmatpush1.msra.mxu0 0.0
  %2432 = vmatprep.subr.mxu0 0.0
  %2433 = vmatpush1.msra.mxu0 0.0
  %2434 = vmatprep.subr.mxu0 0.0
  %2435 = vmatpush1.msra.mxu0 0.0
  %2436 = vmatprep.subr.mxu0 0.0
  %2437 = vmatpush1.msra.mxu0 0.0
  %2438 = vmatprep.subr.mxu0 0.0
  %2439 = vmatpush1.msra.mxu0 0.0
  %2440 = vmatprep.subr.mxu0 0.0
  %2441 = vmatpush1.msra.mxu0 0.0
  %2442 = vmatprep.subr.mxu0 0.0
  %2443 = vmatpush1.msra.mxu0 0.0
  %2444 = vmatprep.subr.mxu0 0.0
  %2445 = vmatpush1.msra.mxu0 0.0
  %2446 = vmatprep.subr.mxu0 0.0
  %2447 = vmatpush1.msra.mxu0 0.0
  %2448 = vmatprep.subr.mxu0 0.0
  %2449 = vmatpush1.msra.mxu0 0.0
  %2450 = vmatprep.subr.mxu0 0.0
  %2451 = vmatpush1.msra.mxu0 0.0
  %2452 = vmatprep.subr.mxu0 0.0
  %2453 = vmatpush1.msra.mxu0 0.0
  %2454 = vmatprep.subr.mxu0 0.0
  %2455 = vmatpush1.msra.mxu0 0.0
  %2456 = vmatprep.subr.mxu0 0.0
  %2457 = vmatpush1.msra.mxu0 0.0
  %2458 = vmatprep.subr.mxu0 0.0
  %2459 = vmatpush1.msra.mxu0 0.0
  %2460 = vmatprep.subr.mxu0 0.0
  %2461 = vmatpush1.msra.mxu0 0.0
  %2462 = vmatprep.subr.mxu0 0.0
  %2463 = vmatpush1.msra.mxu0 0.0
  %2464 = vmatprep.subr.mxu0 0.0
  %2465 = vmatpush1.msra.mxu0 0.0
  %2466 = vmatprep.subr.mxu0 0.0
  %2467 = vmatpush1.msra.mxu0 0.0
  %2468 = vmatprep.subr.mxu0 0.0
  %2469 = vmatpush1.msra.mxu0 0.0
  %2470 = vmatprep.subr.mxu0 0.0
  %2471 = vmatpush1.msra.mxu0 0.0
  %2472 = vmatprep.subr.mxu0 0.0
  %2473 = vmatpush1.msra.mxu0 0.0
  %2474 = vmatprep.subr.mxu0 0.0
  %2475 = vmatpush1.msra.mxu0 0.0
  %2476 = vmatprep.subr.mxu0 0.0
  %2477 = vmatpush1.msra.mxu0 0.0
  %2478 = vmatprep.subr.mxu0 0.0
  %2479 = vmatpush1.msra.mxu0 0.0
  %2480 = vmatprep.mubr.f32.mxu0 0.0
  %2481 = vmatmul.mubr.f32.gmra.mrb[0].mxu0 %v2402
  %v2482 = vpop.f32.mrb[0].mxu0
  %v2483 = vadd.f32 0.0, %v2482
  %v2484 = vpop.f32.mrb[0].mxu0
  %v2485 = vadd.f32 0.0, %v2484
  %2486 = vdwg.mxu0
  %2487 = vmatprep.subr.mxu0 %v2414
  %2488 = vmatpush1.msra.mxu0 %v2411
  %2489 = vmatprep.subr.mxu0 0.0
  %2490 = vmatpush1.msra.mxu0 0.0
  %2491 = vmatprep.subr.mxu0 0.0
  %2492 = vmatpush1.msra.mxu0 0.0
  %2493 = vmatprep.subr.mxu0 0.0
  %2494 = vmatpush1.msra.mxu0 0.0
  %2495 = vmatprep.subr.mxu0 0.0
  %2496 = vmatpush1.msra.mxu0 0.0
  %2497 = vmatprep.subr.mxu0 0.0
  %2498 = vmatpush1.msra.mxu0 0.0
  %2499 = vmatprep.subr.mxu0 0.0
  %2500 = vmatpush1.msra.mxu0 0.0
  %2501 = vmatprep.subr.mxu0 0.0
  %2502 = vmatpush1.msra.mxu0 0.0
  %2503 = vmatprep.subr.mxu0 0.0
  %2504 = vmatpush1.msra.mxu0 0.0
  %2505 = vmatprep.subr.mxu0 0.0
  %2506 = vmatpush1.msra.mxu0 0.0
  %2507 = vmatprep.subr.mxu0 0.0
  %2508 = vmatpush1.msra.mxu0 0.0
  %2509 = vmatprep.subr.mxu0 0.0
  %2510 = vmatpush1.msra.mxu0 0.0
  %2511 = vmatprep.subr.mxu0 0.0
  %2512 = vmatpush1.msra.mxu0 0.0
  %2513 = vmatprep.subr.mxu0 0.0
  %2514 = vmatpush1.msra.mxu0 0.0
  %2515 = vmatprep.subr.mxu0 0.0
  %2516 = vmatpush1.msra.mxu0 0.0
  %2517 = vmatprep.subr.mxu0 0.0
  %2518 = vmatpush1.msra.mxu0 0.0
  %2519 = vmatprep.subr.mxu0 0.0
  %2520 = vmatpush1.msra.mxu0 0.0
  %2521 = vmatprep.subr.mxu0 0.0
  %2522 = vmatpush1.msra.mxu0 0.0
  %2523 = vmatprep.subr.mxu0 0.0
  %2524 = vmatpush1.msra.mxu0 0.0
  %2525 = vmatprep.subr.mxu0 0.0
  %2526 = vmatpush1.msra.mxu0 0.0
  %2527 = vmatprep.subr.mxu0 0.0
  %2528 = vmatpush1.msra.mxu0 0.0
  %2529 = vmatprep.subr.mxu0 0.0
  %2530 = vmatpush1.msra.mxu0 0.0
  %2531 = vmatprep.subr.mxu0 0.0
  %2532 = vmatpush1.msra.mxu0 0.0
  %2533 = vmatprep.subr.mxu0 0.0
  %2534 = vmatpush1.msra.mxu0 0.0
  %2535 = vmatprep.subr.mxu0 0.0
  %2536 = vmatpush1.msra.mxu0 0.0
  %2537 = vmatprep.subr.mxu0 0.0
  %2538 = vmatpush1.msra.mxu0 0.0
  %2539 = vmatprep.subr.mxu0 0.0
  %2540 = vmatpush1.msra.mxu0 0.0
  %2541 = vmatprep.subr.mxu0 0.0
  %2542 = vmatpush1.msra.mxu0 0.0
  %2543 = vmatprep.subr.mxu0 0.0
  %2544 = vmatpush1.msra.mxu0 0.0
  %2545 = vmatprep.subr.mxu0 0.0
  %2546 = vmatpush1.msra.mxu0 0.0
  %2547 = vmatprep.subr.mxu0 0.0
  %2548 = vmatpush1.msra.mxu0 0.0
  %2549 = vmatprep.subr.mxu0 0.0
  %2550 = vmatpush1.msra.mxu0 0.0
  %2551 = vmatprep.mubr.f32.mxu0 0.0
  %2552 = vmatmul.mubr.f32.gmra.mrb[0].mxu0 %v2402
  %v2553 = vpop.f32.mrb[0].mxu0
  %v2554 = vadd.f32 0.0, %v2553
  %v2555 = vpop.f32.mrb[0].mxu0
  %v2556 = vadd.f32 0.0, %v2555
  %2557 = vdwg.mxu0
  %v2558 = vadd.f32 %v2379, %v2483
  %v2559 = vadd.f32 %v2380, %v2485
  %v2560 = vadd.f32 %v2381, %v2554
  %v2561 = vadd.f32 %v2382, %v2556
  %v2562 = vmul.f32 %v1851, %v843
  %v2563 = vmul.f32 %v1852, %v847
  %v2564 = vmul.f32 %v1853, %v851
  %v2565 = vmul.f32 %v1854, %v855
  %s2566 = scalar_lea.vmem %s4, 16
  %v2567 = vld [vmem:[%s2566] sm:$0xf]
  %v2569 = vsel %vm115, %v2567, 0
  %v2572 = vsel %vm119, %v2562, 0
  %v2575 = vsel %vm119, %v2563, 0
  %v2578 = vsel %vm119, %v2564, 0
  %v2581 = vsel %vm119, %v2565, 0
  %2583 = vmatprep.subr.mxu0 %v2575
  %2584 = vmatpush1.msra.mxu0 %v2572
  %2585 = vmatprep.subr.mxu0 0.0
  %2586 = vmatpush1.msra.mxu0 0.0
  %2587 = vmatprep.subr.mxu0 0.0
  %2588 = vmatpush1.msra.mxu0 0.0
  %2589 = vmatprep.subr.mxu0 0.0
  %2590 = vmatpush1.msra.mxu0 0.0
  %2591 = vmatprep.subr.mxu0 0.0
  %2592 = vmatpush1.msra.mxu0 0.0
  %2593 = vmatprep.subr.mxu0 0.0
  %2594 = vmatpush1.msra.mxu0 0.0
  %2595 = vmatprep.subr.mxu0 0.0
  %2596 = vmatpush1.msra.mxu0 0.0
  %2597 = vmatprep.subr.mxu0 0.0
  %2598 = vmatpush1.msra.mxu0 0.0
  %2599 = vmatprep.subr.mxu0 0.0
  %2600 = vmatpush1.msra.mxu0 0.0
  %2601 = vmatprep.subr.mxu0 0.0
  %2602 = vmatpush1.msra.mxu0 0.0
  %2603 = vmatprep.subr.mxu0 0.0
  %2604 = vmatpush1.msra.mxu0 0.0
  %2605 = vmatprep.subr.mxu0 0.0
  %2606 = vmatpush1.msra.mxu0 0.0
  %2607 = vmatprep.subr.mxu0 0.0
  %2608 = vmatpush1.msra.mxu0 0.0
  %2609 = vmatprep.subr.mxu0 0.0
  %2610 = vmatpush1.msra.mxu0 0.0
  %2611 = vmatprep.subr.mxu0 0.0
  %2612 = vmatpush1.msra.mxu0 0.0
  %2613 = vmatprep.subr.mxu0 0.0
  %2614 = vmatpush1.msra.mxu0 0.0
  %2615 = vmatprep.subr.mxu0 0.0
  %2616 = vmatpush1.msra.mxu0 0.0
  %2617 = vmatprep.subr.mxu0 0.0
  %2618 = vmatpush1.msra.mxu0 0.0
  %2619 = vmatprep.subr.mxu0 0.0
  %2620 = vmatpush1.msra.mxu0 0.0
  %2621 = vmatprep.subr.mxu0 0.0
  %2622 = vmatpush1.msra.mxu0 0.0
  %2623 = vmatprep.subr.mxu0 0.0
  %2624 = vmatpush1.msra.mxu0 0.0
  %2625 = vmatprep.subr.mxu0 0.0
  %2626 = vmatpush1.msra.mxu0 0.0
  %2627 = vmatprep.subr.mxu0 0.0
  %2628 = vmatpush1.msra.mxu0 0.0
  %2629 = vmatprep.subr.mxu0 0.0
  %2630 = vmatpush1.msra.mxu0 0.0
  %2631 = vmatprep.subr.mxu0 0.0
  %2632 = vmatpush1.msra.mxu0 0.0
  %2633 = vmatprep.subr.mxu0 0.0
  %2634 = vmatpush1.msra.mxu0 0.0
  %2635 = vmatprep.subr.mxu0 0.0
  %2636 = vmatpush1.msra.mxu0 0.0
  %2637 = vmatprep.subr.mxu0 0.0
  %2638 = vmatpush1.msra.mxu0 0.0
  %2639 = vmatprep.subr.mxu0 0.0
  %2640 = vmatpush1.msra.mxu0 0.0
  %2641 = vmatprep.subr.mxu0 0.0
  %2642 = vmatpush1.msra.mxu0 0.0
  %2643 = vmatprep.subr.mxu0 0.0
  %2644 = vmatpush1.msra.mxu0 0.0
  %2645 = vmatprep.subr.mxu0 0.0
  %2646 = vmatpush1.msra.mxu0 0.0
  %2647 = vmatprep.mubr.f32.mxu0 0.0
  %2648 = vmatmul.mubr.f32.gmra.mrb[0].mxu0 %v2569
  %v2649 = vpop.f32.mrb[0].mxu0
  %v2650 = vadd.f32 0.0, %v2649
  %v2651 = vpop.f32.mrb[0].mxu0
  %v2652 = vadd.f32 0.0, %v2651
  %2653 = vdwg.mxu0
  %2654 = vmatprep.subr.mxu0 %v2581
  %2655 = vmatpush1.msra.mxu0 %v2578
  %2656 = vmatprep.subr.mxu0 0.0
  %2657 = vmatpush1.msra.mxu0 0.0
  %2658 = vmatprep.subr.mxu0 0.0
  %2659 = vmatpush1.msra.mxu0 0.0
  %2660 = vmatprep.subr.mxu0 0.0
  %2661 = vmatpush1.msra.mxu0 0.0
  %2662 = vmatprep.subr.mxu0 0.0
  %2663 = vmatpush1.msra.mxu0 0.0
  %2664 = vmatprep.subr.mxu0 0.0
  %2665 = vmatpush1.msra.mxu0 0.0
  %2666 = vmatprep.subr.mxu0 0.0
  %2667 = vmatpush1.msra.mxu0 0.0
  %2668 = vmatprep.subr.mxu0 0.0
  %2669 = vmatpush1.msra.mxu0 0.0
  %2670 = vmatprep.subr.mxu0 0.0
  %2671 = vmatpush1.msra.mxu0 0.0
  %2672 = vmatprep.subr.mxu0 0.0
  %2673 = vmatpush1.msra.mxu0 0.0
  %2674 = vmatprep.subr.mxu0 0.0
  %2675 = vmatpush1.msra.mxu0 0.0
  %2676 = vmatprep.subr.mxu0 0.0
  %2677 = vmatpush1.msra.mxu0 0.0
  %2678 = vmatprep.subr.mxu0 0.0
  %2679 = vmatpush1.msra.mxu0 0.0
  %2680 = vmatprep.subr.mxu0 0.0
  %2681 = vmatpush1.msra.mxu0 0.0
  %2682 = vmatprep.subr.mxu0 0.0
  %2683 = vmatpush1.msra.mxu0 0.0
  %2684 = vmatprep.subr.mxu0 0.0
  %2685 = vmatpush1.msra.mxu0 0.0
  %2686 = vmatprep.subr.mxu0 0.0
  %2687 = vmatpush1.msra.mxu0 0.0
  %2688 = vmatprep.subr.mxu0 0.0
  %2689 = vmatpush1.msra.mxu0 0.0
  %2690 = vmatprep.subr.mxu0 0.0
  %2691 = vmatpush1.msra.mxu0 0.0
  %2692 = vmatprep.subr.mxu0 0.0
  %2693 = vmatpush1.msra.mxu0 0.0
  %2694 = vmatprep.subr.mxu0 0.0
  %2695 = vmatpush1.msra.mxu0 0.0
  %2696 = vmatprep.subr.mxu0 0.0
  %2697 = vmatpush1.msra.mxu0 0.0
  %2698 = vmatprep.subr.mxu0 0.0
  %2699 = vmatpush1.msra.mxu0 0.0
  %2700 = vmatprep.subr.mxu0 0.0
  %2701 = vmatpush1.msra.mxu0 0.0
  %2702 = vmatprep.subr.mxu0 0.0
  %2703 = vmatpush1.msra.mxu0 0.0
  %2704 = vmatprep.subr.mxu0 0.0
  %2705 = vmatpush1.msra.mxu0 0.0
  %2706 = vmatprep.subr.mxu0 0.0
  %2707 = vmatpush1.msra.mxu0 0.0
  %2708 = vmatprep.subr.mxu0 0.0
  %2709 = vmatpush1.msra.mxu0 0.0
  %2710 = vmatprep.subr.mxu0 0.0
  %2711 = vmatpush1.msra.mxu0 0.0
  %2712 = vmatprep.subr.mxu0 0.0
  %2713 = vmatpush1.msra.mxu0 0.0
  %2714 = vmatprep.subr.mxu0 0.0
  %2715 = vmatpush1.msra.mxu0 0.0
  %2716 = vmatprep.subr.mxu0 0.0
  %2717 = vmatpush1.msra.mxu0 0.0
  %2718 = vmatprep.mubr.f32.mxu0 0.0
  %2719 = vmatmul.mubr.f32.gmra.mrb[0].mxu0 %v2569
  %v2720 = vpop.f32.mrb[0].mxu0
  %v2721 = vadd.f32 0.0, %v2720
  %v2722 = vpop.f32.mrb[0].mxu0
  %v2723 = vadd.f32 0.0, %v2722
  %2724 = vdwg.mxu0
  %v2725 = vadd.f32 %v2558, %v2650
  %v2726 = vadd.f32 %v2559, %v2652
  %v2727 = vadd.f32 %v2560, %v2721
  %v2728 = vadd.f32 %v2561, %v2723
  %2729 = vrot.lane.b32.xlu0 %v1851, 127
  %v2730 = vpop.permute.xlu0 %2729
  %2731 = vrot.lane.b32.xlu0 %v1852, 127
  %v2732 = vpop.permute.xlu0 %2731
  %2733 = vrot.lane.b32.xlu0 %v1853, 127
  %v2734 = vpop.permute.xlu0 %2733
  %2735 = vrot.lane.b32.xlu0 %v1854, 127
  %v2736 = vpop.permute.xlu0 %2735
  %v2737 = vsel %vm1037, %v2734, %v2736
  %v2738 = vsel %vm1037, %v2732, %v2734
  %v2739 = vsel %vm1037, %v2730, %v2732
  %v2740 = vsel %vm1037, %v2736, %v2730
  %v2741 = vmul.f32 %v2739, %v1048
  %v2742 = vmul.f32 %v2738, %v1052
  %v2743 = vmul.f32 %v2737, %v1056
  %v2744 = vmul.f32 %v2740, %v1060
  %s2745 = scalar_lea.vmem %s4, 20
  %v2746 = vld [vmem:[%s2745] sm:$0xf]
  %v2748 = vsel %vm115, %v2746, 0
  %v2751 = vsel %vm119, %v2741, 0
  %v2754 = vsel %vm119, %v2742, 0
  %v2757 = vsel %vm119, %v2743, 0
  %v2760 = vsel %vm119, %v2744, 0
  %2762 = vmatprep.subr.mxu0 %v2754
  %2763 = vmatpush1.msra.mxu0 %v2751
  %2764 = vmatprep.subr.mxu0 0.0
  %2765 = vmatpush1.msra.mxu0 0.0
  %2766 = vmatprep.subr.mxu0 0.0
  %2767 = vmatpush1.msra.mxu0 0.0
  %2768 = vmatprep.subr.mxu0 0.0
  %2769 = vmatpush1.msra.mxu0 0.0
  %2770 = vmatprep.subr.mxu0 0.0
  %2771 = vmatpush1.msra.mxu0 0.0
  %2772 = vmatprep.subr.mxu0 0.0
  %2773 = vmatpush1.msra.mxu0 0.0
  %2774 = vmatprep.subr.mxu0 0.0
  %2775 = vmatpush1.msra.mxu0 0.0
  %2776 = vmatprep.subr.mxu0 0.0
  %2777 = vmatpush1.msra.mxu0 0.0
  %2778 = vmatprep.subr.mxu0 0.0
  %2779 = vmatpush1.msra.mxu0 0.0
  %2780 = vmatprep.subr.mxu0 0.0
  %2781 = vmatpush1.msra.mxu0 0.0
  %2782 = vmatprep.subr.mxu0 0.0
  %2783 = vmatpush1.msra.mxu0 0.0
  %2784 = vmatprep.subr.mxu0 0.0
  %2785 = vmatpush1.msra.mxu0 0.0
  %2786 = vmatprep.subr.mxu0 0.0
  %2787 = vmatpush1.msra.mxu0 0.0
  %2788 = vmatprep.subr.mxu0 0.0
  %2789 = vmatpush1.msra.mxu0 0.0
  %2790 = vmatprep.subr.mxu0 0.0
  %2791 = vmatpush1.msra.mxu0 0.0
  %2792 = vmatprep.subr.mxu0 0.0
  %2793 = vmatpush1.msra.mxu0 0.0
  %2794 = vmatprep.subr.mxu0 0.0
  %2795 = vmatpush1.msra.mxu0 0.0
  %2796 = vmatprep.subr.mxu0 0.0
  %2797 = vmatpush1.msra.mxu0 0.0
  %2798 = vmatprep.subr.mxu0 0.0
  %2799 = vmatpush1.msra.mxu0 0.0
  %2800 = vmatprep.subr.mxu0 0.0
  %2801 = vmatpush1.msra.mxu0 0.0
  %2802 = vmatprep.subr.mxu0 0.0
  %2803 = vmatpush1.msra.mxu0 0.0
  %2804 = vmatprep.subr.mxu0 0.0
  %2805 = vmatpush1.msra.mxu0 0.0
  %2806 = vmatprep.subr.mxu0 0.0
  %2807 = vmatpush1.msra.mxu0 0.0
  %2808 = vmatprep.subr.mxu0 0.0
  %2809 = vmatpush1.msra.mxu0 0.0
  %2810 = vmatprep.subr.mxu0 0.0
  %2811 = vmatpush1.msra.mxu0 0.0
  %2812 = vmatprep.subr.mxu0 0.0
  %2813 = vmatpush1.msra.mxu0 0.0
  %2814 = vmatprep.subr.mxu0 0.0
  %2815 = vmatpush1.msra.mxu0 0.0
  %2816 = vmatprep.subr.mxu0 0.0
  %2817 = vmatpush1.msra.mxu0 0.0
  %2818 = vmatprep.subr.mxu0 0.0
  %2819 = vmatpush1.msra.mxu0 0.0
  %2820 = vmatprep.subr.mxu0 0.0
  %2821 = vmatpush1.msra.mxu0 0.0
  %2822 = vmatprep.subr.mxu0 0.0
  %2823 = vmatpush1.msra.mxu0 0.0
  %2824 = vmatprep.subr.mxu0 0.0
  %2825 = vmatpush1.msra.mxu0 0.0
  %2826 = vmatprep.mubr.f32.mxu0 0.0
  %2827 = vmatmul.mubr.f32.gmra.mrb[0].mxu0 %v2748
  %v2828 = vpop.f32.mrb[0].mxu0
  %v2829 = vadd.f32 0.0, %v2828
  %v2830 = vpop.f32.mrb[0].mxu0
  %v2831 = vadd.f32 0.0, %v2830
  %2832 = vdwg.mxu0
  %2833 = vmatprep.subr.mxu0 %v2760
  %2834 = vmatpush1.msra.mxu0 %v2757
  %2835 = vmatprep.subr.mxu0 0.0
  %2836 = vmatpush1.msra.mxu0 0.0
  %2837 = vmatprep.subr.mxu0 0.0
  %2838 = vmatpush1.msra.mxu0 0.0
  %2839 = vmatprep.subr.mxu0 0.0
  %2840 = vmatpush1.msra.mxu0 0.0
  %2841 = vmatprep.subr.mxu0 0.0
  %2842 = vmatpush1.msra.mxu0 0.0
  %2843 = vmatprep.subr.mxu0 0.0
  %2844 = vmatpush1.msra.mxu0 0.0
  %2845 = vmatprep.subr.mxu0 0.0
  %2846 = vmatpush1.msra.mxu0 0.0
  %2847 = vmatprep.subr.mxu0 0.0
  %2848 = vmatpush1.msra.mxu0 0.0
  %2849 = vmatprep.subr.mxu0 0.0
  %2850 = vmatpush1.msra.mxu0 0.0
  %2851 = vmatprep.subr.mxu0 0.0
  %2852 = vmatpush1.msra.mxu0 0.0
  %2853 = vmatprep.subr.mxu0 0.0
  %2854 = vmatpush1.msra.mxu0 0.0
  %2855 = vmatprep.subr.mxu0 0.0
  %2856 = vmatpush1.msra.mxu0 0.0
  %2857 = vmatprep.subr.mxu0 0.0
  %2858 = vmatpush1.msra.mxu0 0.0
  %2859 = vmatprep.subr.mxu0 0.0
  %2860 = vmatpush1.msra.mxu0 0.0
  %2861 = vmatprep.subr.mxu0 0.0
  %2862 = vmatpush1.msra.mxu0 0.0
  %2863 = vmatprep.subr.mxu0 0.0
  %2864 = vmatpush1.msra.mxu0 0.0
  %2865 = vmatprep.subr.mxu0 0.0
  %2866 = vmatpush1.msra.mxu0 0.0
  %2867 = vmatprep.subr.mxu0 0.0
  %2868 = vmatpush1.msra.mxu0 0.0
  %2869 = vmatprep.subr.mxu0 0.0
  %2870 = vmatpush1.msra.mxu0 0.0
  %2871 = vmatprep.subr.mxu0 0.0
  %2872 = vmatpush1.msra.mxu0 0.0
  %2873 = vmatprep.subr.mxu0 0.0
  %2874 = vmatpush1.msra.mxu0 0.0
  %2875 = vmatprep.subr.mxu0 0.0
  %2876 = vmatpush1.msra.mxu0 0.0
  %2877 = vmatprep.subr.mxu0 0.0
  %2878 = vmatpush1.msra.mxu0 0.0
  %2879 = vmatprep.subr.mxu0 0.0
  %2880 = vmatpush1.msra.mxu0 0.0
  %2881 = vmatprep.subr.mxu0 0.0
  %2882 = vmatpush1.msra.mxu0 0.0
  %2883 = vmatprep.subr.mxu0 0.0
  %2884 = vmatpush1.msra.mxu0 0.0
  %2885 = vmatprep.subr.mxu0 0.0
  %2886 = vmatpush1.msra.mxu0 0.0
  %2887 = vmatprep.subr.mxu0 0.0
  %2888 = vmatpush1.msra.mxu0 0.0
  %2889 = vmatprep.subr.mxu0 0.0
  %2890 = vmatpush1.msra.mxu0 0.0
  %2891 = vmatprep.subr.mxu0 0.0
  %2892 = vmatpush1.msra.mxu0 0.0
  %2893 = vmatprep.subr.mxu0 0.0
  %2894 = vmatpush1.msra.mxu0 0.0
  %2895 = vmatprep.subr.mxu0 0.0
  %2896 = vmatpush1.msra.mxu0 0.0
  %2897 = vmatprep.mubr.f32.mxu0 0.0
  %2898 = vmatmul.mubr.f32.gmra.mrb[0].mxu0 %v2748
  %v2899 = vpop.f32.mrb[0].mxu0
  %v2900 = vadd.f32 0.0, %v2899
  %v2901 = vpop.f32.mrb[0].mxu0
  %v2902 = vadd.f32 0.0, %v2901
  %2903 = vdwg.mxu0
  %v2904 = vadd.f32 %v2725, %v2829
  %v2905 = vadd.f32 %v2726, %v2831
  %v2906 = vadd.f32 %v2727, %v2900
  %v2907 = vadd.f32 %v2728, %v2902
  %2908 = vrot.lane.b32.xlu0 %v1851, 113
  %v2909 = vpop.permute.xlu0 %2908
  %2910 = vrot.lane.b32.xlu0 %v1852, 113
  %v2911 = vpop.permute.xlu0 %2910
  %2912 = vrot.lane.b32.xlu0 %v1853, 113
  %v2913 = vpop.permute.xlu0 %2912
  %2914 = vrot.lane.b32.xlu0 %v1854, 113
  %v2915 = vpop.permute.xlu0 %2914
  %v2916 = vsel %vm1240, %v2913, %v2915
  %v2917 = vsel %vm1240, %v2911, %v2913
  %v2918 = vsel %vm1240, %v2909, %v2911
  %v2919 = vsel %vm1240, %v2915, %v2909
  %v2920 = vmul.f32 %v2918, %v1251
  %v2921 = vmul.f32 %v2917, %v1255
  %v2922 = vmul.f32 %v2916, %v1259
  %v2923 = vmul.f32 %v2919, %v1263
  %s2924 = scalar_lea.vmem %s4, 24
  %v2925 = vld [vmem:[%s2924] sm:$0xf]
  %v2927 = vsel %vm115, %v2925, 0
  %v2930 = vsel %vm119, %v2920, 0
  %v2933 = vsel %vm119, %v2921, 0
  %v2936 = vsel %vm119, %v2922, 0
  %v2939 = vsel %vm119, %v2923, 0
  %2941 = vmatprep.subr.mxu0 %v2933
  %2942 = vmatpush1.msra.mxu0 %v2930
  %2943 = vmatprep.subr.mxu0 0.0
  %2944 = vmatpush1.msra.mxu0 0.0
  %2945 = vmatprep.subr.mxu0 0.0
  %2946 = vmatpush1.msra.mxu0 0.0
  %2947 = vmatprep.subr.mxu0 0.0
  %2948 = vmatpush1.msra.mxu0 0.0
  %2949 = vmatprep.subr.mxu0 0.0
  %2950 = vmatpush1.msra.mxu0 0.0
  %2951 = vmatprep.subr.mxu0 0.0
  %2952 = vmatpush1.msra.mxu0 0.0
  %2953 = vmatprep.subr.mxu0 0.0
  %2954 = vmatpush1.msra.mxu0 0.0
  %2955 = vmatprep.subr.mxu0 0.0
  %2956 = vmatpush1.msra.mxu0 0.0
  %2957 = vmatprep.subr.mxu0 0.0
  %2958 = vmatpush1.msra.mxu0 0.0
  %2959 = vmatprep.subr.mxu0 0.0
  %2960 = vmatpush1.msra.mxu0 0.0
  %2961 = vmatprep.subr.mxu0 0.0
  %2962 = vmatpush1.msra.mxu0 0.0
  %2963 = vmatprep.subr.mxu0 0.0
  %2964 = vmatpush1.msra.mxu0 0.0
  %2965 = vmatprep.subr.mxu0 0.0
  %2966 = vmatpush1.msra.mxu0 0.0
  %2967 = vmatprep.subr.mxu0 0.0
  %2968 = vmatpush1.msra.mxu0 0.0
  %2969 = vmatprep.subr.mxu0 0.0
  %2970 = vmatpush1.msra.mxu0 0.0
  %2971 = vmatprep.subr.mxu0 0.0
  %2972 = vmatpush1.msra.mxu0 0.0
  %2973 = vmatprep.subr.mxu0 0.0
  %2974 = vmatpush1.msra.mxu0 0.0
  %2975 = vmatprep.subr.mxu0 0.0
  %2976 = vmatpush1.msra.mxu0 0.0
  %2977 = vmatprep.subr.mxu0 0.0
  %2978 = vmatpush1.msra.mxu0 0.0
  %2979 = vmatprep.subr.mxu0 0.0
  %2980 = vmatpush1.msra.mxu0 0.0
  %2981 = vmatprep.subr.mxu0 0.0
  %2982 = vmatpush1.msra.mxu0 0.0
  %2983 = vmatprep.subr.mxu0 0.0
  %2984 = vmatpush1.msra.mxu0 0.0
  %2985 = vmatprep.subr.mxu0 0.0
  %2986 = vmatpush1.msra.mxu0 0.0
  %2987 = vmatprep.subr.mxu0 0.0
  %2988 = vmatpush1.msra.mxu0 0.0
  %2989 = vmatprep.subr.mxu0 0.0
  %2990 = vmatpush1.msra.mxu0 0.0
  %2991 = vmatprep.subr.mxu0 0.0
  %2992 = vmatpush1.msra.mxu0 0.0
  %2993 = vmatprep.subr.mxu0 0.0
  %2994 = vmatpush1.msra.mxu0 0.0
  %2995 = vmatprep.subr.mxu0 0.0
  %2996 = vmatpush1.msra.mxu0 0.0
  %2997 = vmatprep.subr.mxu0 0.0
  %2998 = vmatpush1.msra.mxu0 0.0
  %2999 = vmatprep.subr.mxu0 0.0
  %3000 = vmatpush1.msra.mxu0 0.0
  %3001 = vmatprep.subr.mxu0 0.0
  %3002 = vmatpush1.msra.mxu0 0.0
  %3003 = vmatprep.subr.mxu0 0.0
  %3004 = vmatpush1.msra.mxu0 0.0
  %3005 = vmatprep.mubr.f32.mxu0 0.0
  %3006 = vmatmul.mubr.f32.gmra.mrb[0].mxu0 %v2927
  %v3007 = vpop.f32.mrb[0].mxu0
  %v3008 = vadd.f32 0.0, %v3007
  %v3009 = vpop.f32.mrb[0].mxu0
  %v3010 = vadd.f32 0.0, %v3009
  %3011 = vdwg.mxu0
  %3012 = vmatprep.subr.mxu0 %v2939
  %3013 = vmatpush1.msra.mxu0 %v2936
  %3014 = vmatprep.subr.mxu0 0.0
  %3015 = vmatpush1.msra.mxu0 0.0
  %3016 = vmatprep.subr.mxu0 0.0
  %3017 = vmatpush1.msra.mxu0 0.0
  %3018 = vmatprep.subr.mxu0 0.0
  %3019 = vmatpush1.msra.mxu0 0.0
  %3020 = vmatprep.subr.mxu0 0.0
  %3021 = vmatpush1.msra.mxu0 0.0
  %3022 = vmatprep.subr.mxu0 0.0
  %3023 = vmatpush1.msra.mxu0 0.0
  %3024 = vmatprep.subr.mxu0 0.0
  %3025 = vmatpush1.msra.mxu0 0.0
  %3026 = vmatprep.subr.mxu0 0.0
  %3027 = vmatpush1.msra.mxu0 0.0
  %3028 = vmatprep.subr.mxu0 0.0
  %3029 = vmatpush1.msra.mxu0 0.0
  %3030 = vmatprep.subr.mxu0 0.0
  %3031 = vmatpush1.msra.mxu0 0.0
  %3032 = vmatprep.subr.mxu0 0.0
  %3033 = vmatpush1.msra.mxu0 0.0
  %3034 = vmatprep.subr.mxu0 0.0
  %3035 = vmatpush1.msra.mxu0 0.0
  %3036 = vmatprep.subr.mxu0 0.0
  %3037 = vmatpush1.msra.mxu0 0.0
  %3038 = vmatprep.subr.mxu0 0.0
  %3039 = vmatpush1.msra.mxu0 0.0
  %3040 = vmatprep.subr.mxu0 0.0
  %3041 = vmatpush1.msra.mxu0 0.0
  %3042 = vmatprep.subr.mxu0 0.0
  %3043 = vmatpush1.msra.mxu0 0.0
  %3044 = vmatprep.subr.mxu0 0.0
  %3045 = vmatpush1.msra.mxu0 0.0
  %3046 = vmatprep.subr.mxu0 0.0
  %3047 = vmatpush1.msra.mxu0 0.0
  %3048 = vmatprep.subr.mxu0 0.0
  %3049 = vmatpush1.msra.mxu0 0.0
  %3050 = vmatprep.subr.mxu0 0.0
  %3051 = vmatpush1.msra.mxu0 0.0
  %3052 = vmatprep.subr.mxu0 0.0
  %3053 = vmatpush1.msra.mxu0 0.0
  %3054 = vmatprep.subr.mxu0 0.0
  %3055 = vmatpush1.msra.mxu0 0.0
  %3056 = vmatprep.subr.mxu0 0.0
  %3057 = vmatpush1.msra.mxu0 0.0
  %3058 = vmatprep.subr.mxu0 0.0
  %3059 = vmatpush1.msra.mxu0 0.0
  %3060 = vmatprep.subr.mxu0 0.0
  %3061 = vmatpush1.msra.mxu0 0.0
  %3062 = vmatprep.subr.mxu0 0.0
  %3063 = vmatpush1.msra.mxu0 0.0
  %3064 = vmatprep.subr.mxu0 0.0
  %3065 = vmatpush1.msra.mxu0 0.0
  %3066 = vmatprep.subr.mxu0 0.0
  %3067 = vmatpush1.msra.mxu0 0.0
  %3068 = vmatprep.subr.mxu0 0.0
  %3069 = vmatpush1.msra.mxu0 0.0
  %3070 = vmatprep.subr.mxu0 0.0
  %3071 = vmatpush1.msra.mxu0 0.0
  %3072 = vmatprep.subr.mxu0 0.0
  %3073 = vmatpush1.msra.mxu0 0.0
  %3074 = vmatprep.subr.mxu0 0.0
  %3075 = vmatpush1.msra.mxu0 0.0
  %3076 = vmatprep.mubr.f32.mxu0 0.0
  %3077 = vmatmul.mubr.f32.gmra.mrb[0].mxu0 %v2927
  %v3078 = vpop.f32.mrb[0].mxu0
  %v3079 = vadd.f32 0.0, %v3078
  %v3080 = vpop.f32.mrb[0].mxu0
  %v3081 = vadd.f32 0.0, %v3080
  %3082 = vdwg.mxu0
  %v3083 = vadd.f32 %v2904, %v3008
  %v3084 = vadd.f32 %v2905, %v3010
  %v3085 = vadd.f32 %v2906, %v3079
  %v3086 = vadd.f32 %v2907, %v3081
  %3087 = vrot.lane.b32.xlu0 %v1851, 112
  %v3088 = vpop.permute.xlu0 %3087
  %3089 = vrot.lane.b32.xlu0 %v1852, 112
  %v3090 = vpop.permute.xlu0 %3089
  %3091 = vrot.lane.b32.xlu0 %v1853, 112
  %v3092 = vpop.permute.xlu0 %3091
  %3093 = vrot.lane.b32.xlu0 %v1854, 112
  %v3094 = vpop.permute.xlu0 %3093
  %v3095 = vsel %vm1443, %v3092, %v3094
  %v3096 = vsel %vm1443, %v3090, %v3092
  %v3097 = vsel %vm1443, %v3088, %v3090
  %v3098 = vsel %vm1443, %v3094, %v3088
  %v3099 = vmul.f32 %v3097, %v1454
  %v3100 = vmul.f32 %v3096, %v1458
  %v3101 = vmul.f32 %v3095, %v1462
  %v3102 = vmul.f32 %v3098, %v1466
  %s3103 = scalar_lea.vmem %s4, 28
  %v3104 = vld [vmem:[%s3103] sm:$0xf]
  %v3106 = vsel %vm115, %v3104, 0
  %v3109 = vsel %vm119, %v3099, 0
  %v3112 = vsel %vm119, %v3100, 0
  %v3115 = vsel %vm119, %v3101, 0
  %v3118 = vsel %vm119, %v3102, 0
  %3120 = vmatprep.subr.mxu0 %v3112
  %3121 = vmatpush1.msra.mxu0 %v3109
  %3122 = vmatprep.subr.mxu0 0.0
  %3123 = vmatpush1.msra.mxu0 0.0
  %3124 = vmatprep.subr.mxu0 0.0
  %3125 = vmatpush1.msra.mxu0 0.0
  %3126 = vmatprep.subr.mxu0 0.0
  %3127 = vmatpush1.msra.mxu0 0.0
  %3128 = vmatprep.subr.mxu0 0.0
  %3129 = vmatpush1.msra.mxu0 0.0
  %3130 = vmatprep.subr.mxu0 0.0
  %3131 = vmatpush1.msra.mxu0 0.0
  %3132 = vmatprep.subr.mxu0 0.0
  %3133 = vmatpush1.msra.mxu0 0.0
  %3134 = vmatprep.subr.mxu0 0.0
  %3135 = vmatpush1.msra.mxu0 0.0
  %3136 = vmatprep.subr.mxu0 0.0
  %3137 = vmatpush1.msra.mxu0 0.0
  %3138 = vmatprep.subr.mxu0 0.0
  %3139 = vmatpush1.msra.mxu0 0.0
  %3140 = vmatprep.subr.mxu0 0.0
  %3141 = vmatpush1.msra.mxu0 0.0
  %3142 = vmatprep.subr.mxu0 0.0
  %3143 = vmatpush1.msra.mxu0 0.0
  %3144 = vmatprep.subr.mxu0 0.0
  %3145 = vmatpush1.msra.mxu0 0.0
  %3146 = vmatprep.subr.mxu0 0.0
  %3147 = vmatpush1.msra.mxu0 0.0
  %3148 = vmatprep.subr.mxu0 0.0
  %3149 = vmatpush1.msra.mxu0 0.0
  %3150 = vmatprep.subr.mxu0 0.0
  %3151 = vmatpush1.msra.mxu0 0.0
  %3152 = vmatprep.subr.mxu0 0.0
  %3153 = vmatpush1.msra.mxu0 0.0
  %3154 = vmatprep.subr.mxu0 0.0
  %3155 = vmatpush1.msra.mxu0 0.0
  %3156 = vmatprep.subr.mxu0 0.0
  %3157 = vmatpush1.msra.mxu0 0.0
  %3158 = vmatprep.subr.mxu0 0.0
  %3159 = vmatpush1.msra.mxu0 0.0
  %3160 = vmatprep.subr.mxu0 0.0
  %3161 = vmatpush1.msra.mxu0 0.0
  %3162 = vmatprep.subr.mxu0 0.0
  %3163 = vmatpush1.msra.mxu0 0.0
  %3164 = vmatprep.subr.mxu0 0.0
  %3165 = vmatpush1.msra.mxu0 0.0
  %3166 = vmatprep.subr.mxu0 0.0
  %3167 = vmatpush1.msra.mxu0 0.0
  %3168 = vmatprep.subr.mxu0 0.0
  %3169 = vmatpush1.msra.mxu0 0.0
  %3170 = vmatprep.subr.mxu0 0.0
  %3171 = vmatpush1.msra.mxu0 0.0
  %3172 = vmatprep.subr.mxu0 0.0
  %3173 = vmatpush1.msra.mxu0 0.0
  %3174 = vmatprep.subr.mxu0 0.0
  %3175 = vmatpush1.msra.mxu0 0.0
  %3176 = vmatprep.subr.mxu0 0.0
  %3177 = vmatpush1.msra.mxu0 0.0
  %3178 = vmatprep.subr.mxu0 0.0
  %3179 = vmatpush1.msra.mxu0 0.0
  %3180 = vmatprep.subr.mxu0 0.0
  %3181 = vmatpush1.msra.mxu0 0.0
  %3182 = vmatprep.subr.mxu0 0.0
  %3183 = vmatpush1.msra.mxu0 0.0
  %3184 = vmatprep.mubr.f32.mxu0 0.0
  %3185 = vmatmul.mubr.f32.gmra.mrb[0].mxu0 %v3106
  %v3186 = vpop.f32.mrb[0].mxu0
  %v3187 = vadd.f32 0.0, %v3186
  %v3188 = vpop.f32.mrb[0].mxu0
  %v3189 = vadd.f32 0.0, %v3188
  %3190 = vdwg.mxu0
  %3191 = vmatprep.subr.mxu0 %v3118
  %3192 = vmatpush1.msra.mxu0 %v3115
  %3193 = vmatprep.subr.mxu0 0.0
  %3194 = vmatpush1.msra.mxu0 0.0
  %3195 = vmatprep.subr.mxu0 0.0
  %3196 = vmatpush1.msra.mxu0 0.0
  %3197 = vmatprep.subr.mxu0 0.0
  %3198 = vmatpush1.msra.mxu0 0.0
  %3199 = vmatprep.subr.mxu0 0.0
  %3200 = vmatpush1.msra.mxu0 0.0
  %3201 = vmatprep.subr.mxu0 0.0
  %3202 = vmatpush1.msra.mxu0 0.0
  %3203 = vmatprep.subr.mxu0 0.0
  %3204 = vmatpush1.msra.mxu0 0.0
  %3205 = vmatprep.subr.mxu0 0.0
  %3206 = vmatpush1.msra.mxu0 0.0
  %3207 = vmatprep.subr.mxu0 0.0
  %3208 = vmatpush1.msra.mxu0 0.0
  %3209 = vmatprep.subr.mxu0 0.0
  %3210 = vmatpush1.msra.mxu0 0.0
  %3211 = vmatprep.subr.mxu0 0.0
  %3212 = vmatpush1.msra.mxu0 0.0
  %3213 = vmatprep.subr.mxu0 0.0
  %3214 = vmatpush1.msra.mxu0 0.0
  %3215 = vmatprep.subr.mxu0 0.0
  %3216 = vmatpush1.msra.mxu0 0.0
  %3217 = vmatprep.subr.mxu0 0.0
  %3218 = vmatpush1.msra.mxu0 0.0
  %3219 = vmatprep.subr.mxu0 0.0
  %3220 = vmatpush1.msra.mxu0 0.0
  %3221 = vmatprep.subr.mxu0 0.0
  %3222 = vmatpush1.msra.mxu0 0.0
  %3223 = vmatprep.subr.mxu0 0.0
  %3224 = vmatpush1.msra.mxu0 0.0
  %3225 = vmatprep.subr.mxu0 0.0
  %3226 = vmatpush1.msra.mxu0 0.0
  %3227 = vmatprep.subr.mxu0 0.0
  %3228 = vmatpush1.msra.mxu0 0.0
  %3229 = vmatprep.subr.mxu0 0.0
  %3230 = vmatpush1.msra.mxu0 0.0
  %3231 = vmatprep.subr.mxu0 0.0
  %3232 = vmatpush1.msra.mxu0 0.0
  %3233 = vmatprep.subr.mxu0 0.0
  %3234 = vmatpush1.msra.mxu0 0.0
  %3235 = vmatprep.subr.mxu0 0.0
  %3236 = vmatpush1.msra.mxu0 0.0
  %3237 = vmatprep.subr.mxu0 0.0
  %3238 = vmatpush1.msra.mxu0 0.0
  %3239 = vmatprep.subr.mxu0 0.0
  %3240 = vmatpush1.msra.mxu0 0.0
  %3241 = vmatprep.subr.mxu0 0.0
  %3242 = vmatpush1.msra.mxu0 0.0
  %3243 = vmatprep.subr.mxu0 0.0
  %3244 = vmatpush1.msra.mxu0 0.0
  %3245 = vmatprep.subr.mxu0 0.0
  %3246 = vmatpush1.msra.mxu0 0.0
  %3247 = vmatprep.subr.mxu0 0.0
  %3248 = vmatpush1.msra.mxu0 0.0
  %3249 = vmatprep.subr.mxu0 0.0
  %3250 = vmatpush1.msra.mxu0 0.0
  %3251 = vmatprep.subr.mxu0 0.0
  %3252 = vmatpush1.msra.mxu0 0.0
  %3253 = vmatprep.subr.mxu0 0.0
  %3254 = vmatpush1.msra.mxu0 0.0
  %3255 = vmatprep.mubr.f32.mxu0 0.0
  %3256 = vmatmul.mubr.f32.gmra.mrb[0].mxu0 %v3106
  %v3257 = vpop.f32.mrb[0].mxu0
  %v3258 = vadd.f32 0.0, %v3257
  %v3259 = vpop.f32.mrb[0].mxu0
  %v3260 = vadd.f32 0.0, %v3259
  %3261 = vdwg.mxu0
  %v3262 = vadd.f32 %v3083, %v3187
  %v3263 = vadd.f32 %v3084, %v3189
  %v3264 = vadd.f32 %v3085, %v3258
  %v3265 = vadd.f32 %v3086, %v3260
  %3266 = vrot.lane.b32.xlu0 %v1851, 111
  %v3267 = vpop.permute.xlu0 %3266
  %3268 = vrot.lane.b32.xlu0 %v1852, 111
  %v3269 = vpop.permute.xlu0 %3268
  %3270 = vrot.lane.b32.xlu0 %v1853, 111
  %v3271 = vpop.permute.xlu0 %3270
  %3272 = vrot.lane.b32.xlu0 %v1854, 111
  %v3273 = vpop.permute.xlu0 %3272
  %v3274 = vsel %vm1646, %v3271, %v3273
  %v3275 = vsel %vm1646, %v3269, %v3271
  %v3276 = vsel %vm1646, %v3267, %v3269
  %v3277 = vsel %vm1646, %v3273, %v3267
  %v3278 = vmul.f32 %v3276, %v1657
  %v3279 = vmul.f32 %v3275, %v1661
  %v3280 = vmul.f32 %v3274, %v1665
  %v3281 = vmul.f32 %v3277, %v1669
  %s3282 = scalar_lea.vmem %s4, 32
  %v3283 = vld [vmem:[%s3282] sm:$0xf]
  %v3285 = vsel %vm115, %v3283, 0
  %v3288 = vsel %vm119, %v3278, 0
  %v3291 = vsel %vm119, %v3279, 0
  %v3294 = vsel %vm119, %v3280, 0
  %v3297 = vsel %vm119, %v3281, 0
  %3299 = vmatprep.subr.mxu0 %v3291
  %3300 = vmatpush1.msra.mxu0 %v3288
  %3301 = vmatprep.subr.mxu0 0.0
  %3302 = vmatpush1.msra.mxu0 0.0
  %3303 = vmatprep.subr.mxu0 0.0
  %3304 = vmatpush1.msra.mxu0 0.0
  %3305 = vmatprep.subr.mxu0 0.0
  %3306 = vmatpush1.msra.mxu0 0.0
  %3307 = vmatprep.subr.mxu0 0.0
  %3308 = vmatpush1.msra.mxu0 0.0
  %3309 = vmatprep.subr.mxu0 0.0
  %3310 = vmatpush1.msra.mxu0 0.0
  %3311 = vmatprep.subr.mxu0 0.0
  %3312 = vmatpush1.msra.mxu0 0.0
  %3313 = vmatprep.subr.mxu0 0.0
  %3314 = vmatpush1.msra.mxu0 0.0
  %3315 = vmatprep.subr.mxu0 0.0
  %3316 = vmatpush1.msra.mxu0 0.0
  %3317 = vmatprep.subr.mxu0 0.0
  %3318 = vmatpush1.msra.mxu0 0.0
  %3319 = vmatprep.subr.mxu0 0.0
  %3320 = vmatpush1.msra.mxu0 0.0
  %3321 = vmatprep.subr.mxu0 0.0
  %3322 = vmatpush1.msra.mxu0 0.0
  %3323 = vmatprep.subr.mxu0 0.0
  %3324 = vmatpush1.msra.mxu0 0.0
  %3325 = vmatprep.subr.mxu0 0.0
  %3326 = vmatpush1.msra.mxu0 0.0
  %3327 = vmatprep.subr.mxu0 0.0
  %3328 = vmatpush1.msra.mxu0 0.0
  %3329 = vmatprep.subr.mxu0 0.0
  %3330 = vmatpush1.msra.mxu0 0.0
  %3331 = vmatprep.subr.mxu0 0.0
  %3332 = vmatpush1.msra.mxu0 0.0
  %3333 = vmatprep.subr.mxu0 0.0
  %3334 = vmatpush1.msra.mxu0 0.0
  %3335 = vmatprep.subr.mxu0 0.0
  %3336 = vmatpush1.msra.mxu0 0.0
  %3337 = vmatprep.subr.mxu0 0.0
  %3338 = vmatpush1.msra.mxu0 0.0
  %3339 = vmatprep.subr.mxu0 0.0
  %3340 = vmatpush1.msra.mxu0 0.0
  %3341 = vmatprep.subr.mxu0 0.0
  %3342 = vmatpush1.msra.mxu0 0.0
  %3343 = vmatprep.subr.mxu0 0.0
  %3344 = vmatpush1.msra.mxu0 0.0
  %3345 = vmatprep.subr.mxu0 0.0
  %3346 = vmatpush1.msra.mxu0 0.0
  %3347 = vmatprep.subr.mxu0 0.0
  %3348 = vmatpush1.msra.mxu0 0.0
  %3349 = vmatprep.subr.mxu0 0.0
  %3350 = vmatpush1.msra.mxu0 0.0
  %3351 = vmatprep.subr.mxu0 0.0
  %3352 = vmatpush1.msra.mxu0 0.0
  %3353 = vmatprep.subr.mxu0 0.0
  %3354 = vmatpush1.msra.mxu0 0.0
  %3355 = vmatprep.subr.mxu0 0.0
  %3356 = vmatpush1.msra.mxu0 0.0
  %3357 = vmatprep.subr.mxu0 0.0
  %3358 = vmatpush1.msra.mxu0 0.0
  %3359 = vmatprep.subr.mxu0 0.0
  %3360 = vmatpush1.msra.mxu0 0.0
  %3361 = vmatprep.subr.mxu0 0.0
  %3362 = vmatpush1.msra.mxu0 0.0
  %3363 = vmatprep.mubr.f32.mxu0 0.0
  %3364 = vmatmul.mubr.f32.gmra.mrb[0].mxu0 %v3285
  %v3365 = vpop.f32.mrb[0].mxu0
  %v3366 = vadd.f32 0.0, %v3365
  %v3367 = vpop.f32.mrb[0].mxu0
  %v3368 = vadd.f32 0.0, %v3367
  %3369 = vdwg.mxu0
  %3370 = vmatprep.subr.mxu0 %v3297
  %3371 = vmatpush1.msra.mxu0 %v3294
  %3372 = vmatprep.subr.mxu0 0.0
  %3373 = vmatpush1.msra.mxu0 0.0
  %3374 = vmatprep.subr.mxu0 0.0
  %3375 = vmatpush1.msra.mxu0 0.0
  %3376 = vmatprep.subr.mxu0 0.0
  %3377 = vmatpush1.msra.mxu0 0.0
  %3378 = vmatprep.subr.mxu0 0.0
  %3379 = vmatpush1.msra.mxu0 0.0
  %3380 = vmatprep.subr.mxu0 0.0
  %3381 = vmatpush1.msra.mxu0 0.0
  %3382 = vmatprep.subr.mxu0 0.0
  %3383 = vmatpush1.msra.mxu0 0.0
  %3384 = vmatprep.subr.mxu0 0.0
  %3385 = vmatpush1.msra.mxu0 0.0
  %3386 = vmatprep.subr.mxu0 0.0
  %3387 = vmatpush1.msra.mxu0 0.0
  %3388 = vmatprep.subr.mxu0 0.0
  %3389 = vmatpush1.msra.mxu0 0.0
  %3390 = vmatprep.subr.mxu0 0.0
  %3391 = vmatpush1.msra.mxu0 0.0
  %3392 = vmatprep.subr.mxu0 0.0
  %3393 = vmatpush1.msra.mxu0 0.0
  %3394 = vmatprep.subr.mxu0 0.0
  %3395 = vmatpush1.msra.mxu0 0.0
  %3396 = vmatprep.subr.mxu0 0.0
  %3397 = vmatpush1.msra.mxu0 0.0
  %3398 = vmatprep.subr.mxu0 0.0
  %3399 = vmatpush1.msra.mxu0 0.0
  %3400 = vmatprep.subr.mxu0 0.0
  %3401 = vmatpush1.msra.mxu0 0.0
  %3402 = vmatprep.subr.mxu0 0.0
  %3403 = vmatpush1.msra.mxu0 0.0
  %3404 = vmatprep.subr.mxu0 0.0
  %3405 = vmatpush1.msra.mxu0 0.0
  %3406 = vmatprep.subr.mxu0 0.0
  %3407 = vmatpush1.msra.mxu0 0.0
  %3408 = vmatprep.subr.mxu0 0.0
  %3409 = vmatpush1.msra.mxu0 0.0
  %3410 = vmatprep.subr.mxu0 0.0
  %3411 = vmatpush1.msra.mxu0 0.0
  %3412 = vmatprep.subr.mxu0 0.0
  %3413 = vmatpush1.msra.mxu0 0.0
  %3414 = vmatprep.subr.mxu0 0.0
  %3415 = vmatpush1.msra.mxu0 0.0
  %3416 = vmatprep.subr.mxu0 0.0
  %3417 = vmatpush1.msra.mxu0 0.0
  %3418 = vmatprep.subr.mxu0 0.0
  %3419 = vmatpush1.msra.mxu0 0.0
  %3420 = vmatprep.subr.mxu0 0.0
  %3421 = vmatpush1.msra.mxu0 0.0
  %3422 = vmatprep.subr.mxu0 0.0
  %3423 = vmatpush1.msra.mxu0 0.0
  %3424 = vmatprep.subr.mxu0 0.0
  %3425 = vmatpush1.msra.mxu0 0.0
  %3426 = vmatprep.subr.mxu0 0.0
  %3427 = vmatpush1.msra.mxu0 0.0
  %3428 = vmatprep.subr.mxu0 0.0
  %3429 = vmatpush1.msra.mxu0 0.0
  %3430 = vmatprep.subr.mxu0 0.0
  %3431 = vmatpush1.msra.mxu0 0.0
  %3432 = vmatprep.subr.mxu0 0.0
  %3433 = vmatpush1.msra.mxu0 0.0
  %3434 = vmatprep.mubr.f32.mxu0 0.0
  %3435 = vmatmul.mubr.f32.gmra.mrb[0].mxu0 %v3285
  %v3436 = vpop.f32.mrb[0].mxu0
  %v3437 = vadd.f32 0.0, %v3436
  %v3438 = vpop.f32.mrb[0].mxu0
  %v3439 = vadd.f32 0.0, %v3438
  %3440 = vdwg.mxu0
  %v3441 = vadd.f32 %v3262, %v3366
  %v3442 = vadd.f32 %v3263, %v3368
  %v3443 = vadd.f32 %v3264, %v3437
  %v3444 = vadd.f32 %v3265, %v3439
  %v3445 = vld [vmem:[%s5] sm:$0xf]
  %3447 = vset.pattern.permute.xlu0 0
  %3448 = vperm.xlu0 %3447, %v3445
  %v3449 = vpop.permute.xlu0 %3448
  %v3451 = vadd.f32 %v3441, %v3449
  %v3452 = vadd.f32 %v3442, %v3449
  %v3453 = vadd.f32 %v3443, %v3449
  %v3454 = vadd.f32 %v3444, %v3449
  %v3459 = vcombine.low %v3451, %v3452
  %v3460 = vcombine.low %v3453, %v3454
  %v3463 = vadd.f32 %v23, %v3459
  %v3464 = vadd.f32 %v24, %v3460
  %3465 = vst [vmem:[%s6] sm:$0xff] %v3463
  %3466 = vst [vmem:[%s6 + $0x8] sm:$0xff] %v3464
  // Predicated region
  $region26: #{resblock_forward.1} parent=0 // pred_check
    _
  $region27: #{resblock_forward.1} parent=0 // pred_check_branch
    %3468 = sbr.rel (0) target = $region29
  $region28: #{resblock_forward.1} parent=0 // pred_region
    _
  $region29: #{resblock_forward.1} parent=0 // pred_fallthru
    _
  // Predicated region
  $region30: #{resblock_forward.1} parent=0 // pred_check
    _
  $region31: #{resblock_forward.1} parent=0 // pred_check_branch
    %3470 = sbr.rel (0) target = $region33
  $region32: #{resblock_forward.1} parent=0 // pred_region
    _
  $region33: #{resblock_forward.1} parent=0 // pred_fallthru
    _

</llo_original>
